<compile_context>
chip_gen: v7x
topology: tpu7x:2x2x1
jax: 0.10.0
libtpu: 0.0.40
codegen_flags: <defaults>
</compile_context>

<pallas_src>
import numpy as np
import jax
import jax.numpy as jnp
from jax import lax
from jax.experimental import pallas as pl
from jax.experimental.pallas import tpu as pltpu

# ---------------- model config (small, consistent with the module) ----------------
F = 4                   # dataset_config.num_features
D = 8                   # hyperparams.embedding_size (feature_dim)
FD = F * D              # deep-processor input width (32)
H_INT = 32              # hyperparams.deep_intermediate_size
HOFS = 16               # hyperparams.higher_order_features_size
OUT = 3                 # output_neurons
N_PAIRS = F * (F - 1) // 2
CLS_IN = HOFS + N_PAIRS + D
CLS_HID = 256           # FixedDeepProcessor hidden width

# ---------------- lane-dense padded widths ----------------
HP = 128                # padded deep-tower / higher-order width
PW = 128                # padded pairwise-product width (>= N_PAIRS * D = 48)
OUTP8 = 8               # output rows padded to one sublane tile (>= OUT)
FUSED_W = 3 * HP + CLS_HID   # width of the fused xb-LHS weight (640)

WEIGHT_DTYPE = jnp.bfloat16   # bf16 storage for MXU operands; f32 accumulation

_SELU_ALPHA = 1.6732632423543772
_SELU_SCALE = 1.0507009873554804


def _selu(v):
    # exp() only on the non-positive branch to avoid inf in the unselected lane.
    return _SELU_SCALE * jnp.where(
        v > 0.0, v, _SELU_ALPHA * (jnp.exp(jnp.minimum(v, 0.0)) - 1.0))


# ---------------- kernel ----------------
def deepfm_kernel(x_ref, wf_ref, b0_ref, w1_ref, b1_ref, w2_ref, b2_ref,
                  wcls_ref, bc1_ref, wc2t_ref, bc2t_ref, out_ref):
    xb = x_ref[...]                                       # (TB, FD) bf16

    # One wide MXU pass for everything that consumes xb as LHS:
    #   [ deep layer 0 | gather_left | gather_right | tiled first-order weight ]  (32, 640)
    fused = jnp.dot(xb, wf_ref[...], preferred_element_type=jnp.float32)   # (TB, 640) f32

    # ---- TunableDeepProcessor: 3 Linear layers, SELU between (AlphaDropout = identity)
    h = _selu(fused[:, :HP] + b0_ref[...])
    h = jnp.dot(h.astype(WEIGHT_DTYPE), w1_ref[...],
                preferred_element_type=jnp.float32) + b1_ref[...]
    h = _selu(h)
    ho = jnp.dot(h.astype(WEIGHT_DTYPE), w2_ref[...],
                 preferred_element_type=jnp.float32) + b2_ref[...]          # (TB, HP)

    # ---- second-order interactions (compute_soi): per-pair elementwise products; the
    #      reduction over D is folded into the classifier weight, so so_int is never built.
    pprod = fused[:, HP:2 * HP] * fused[:, 2 * HP:3 * HP]                   # (TB, PW) f32

    # ---- classifier Linear 1: [ho | so_int | feat_sum] @ wc1 expressed as one K=256
    #      matmul on the lane-aligned concat plus the already-computed first-order part.
    cls_in = jnp.concatenate([ho, pprod], axis=1).astype(WEIGHT_DTYPE)      # (TB, 256)
    c = jnp.dot(cls_in, wcls_ref[...], preferred_element_type=jnp.float32)
    c = c + fused[:, 3 * HP:] + bc1_ref[...]
    c = jnp.maximum(c, 0.0)              # ReLU; Dropout = identity at inference

    # ---- classifier Linear 2, emitted transposed (8, TB): lane-dense 32 B/row writeback.
    out_t = lax.dot_general(wc2t_ref[...], c.astype(WEIGHT_DTYPE),
                            dimension_numbers=(((1,), (1,)), ((), ())),
                            preferred_element_type=jnp.float32)             # (8, TB)
    out_ref[...] = out_t + bc2t_ref[...]


# ---------------- wrapper ----------------
def _pick_tb(b_total):
    # >=2 grid steps (so the "parallel" batch axis uses both v7x TCs), each step large
    # enough to amortize per-step pipeline overhead, capped so VMEM stays comfortable.
    tb = 128 * pl.cdiv(pl.cdiv(b_total, 2), 128)
    return int(min(max(tb, 128), 2048))


def deepfm_forward(x, packed, *, tb=None):
    """x: (B, F*D) features concatenated in sorted-key order."""
    b_total = x.shape[0]
    if tb is None:
        tb = _pick_tb(b_total)
    n_blocks = pl.cdiv(b_total, tb)
    b_pad = n_blocks * tb
    x = x.astype(WEIGHT_DTYPE)                     # kernel only ever consumes bf16
    if b_pad != b_total:
        x = jnp.pad(x, ((0, b_pad - b_total), (0, 0)))

    weights = (packed["wfused"], packed["b0"], packed["w1"], packed["b1"],
               packed["w2"], packed["b2"], packed["wcls"], packed["bc1"],
               packed["wc2t"], packed["bc2t"])

    def resident(w):   # constant index_map -> fetched once, stays in VMEM across steps
        return pl.BlockSpec(w.shape, lambda i: (0, 0))

    in_specs = [pl.BlockSpec((tb, FD), lambda i: (i, 0))] + [resident(w) for w in weights]

    # Explicit VMEM budget (activations ~16 KiB/row incl. pipelining + ~1 MiB weights):
    # covers v5e's 16 MiB default scoped-VMEM for large tiles, capped at 48 MiB so it
    # stays inside v7x's 64 MiB physical VMEM.
    vmem_limit = int(min(48 << 20, max(32 << 20, (1 << 20) + tb * (16 << 10))))

    out_t = pl.pallas_call(
        deepfm_kernel,
        out_shape=jax.ShapeDtypeStruct((OUTP8, b_pad), jnp.float32),
        grid=(n_blocks,),
        in_specs=in_specs,
        out_specs=pl.BlockSpec((OUTP8, tb), lambda i: (0, i)),
        compiler_params=pltpu.CompilerParams(
            dimension_semantics=("parallel",),     # shard batch across TCs on v7x
            vmem_limit_bytes=vmem_limit),
    )(x, *weights)
    return out_t[:OUT, :b_total].T


# ---------------- parameter construction ----------------
def init_params(key):
    ks = jax.random.split(key, 10)

    def lin(kw, kb, fan_in, fan_out):
        bound = 1.0 / jnp.sqrt(fan_in)
        w = jax.random.uniform(kw, (fan_in, fan_out), jnp.float32, -bound, bound)
        b = jax.random.uniform(kb, (1, fan_out), jnp.float32, -bound, bound)
        return w, b

    p = {}
    p["w0"], p["b0"] = lin(ks[0], ks[1], FD, H_INT)      # deep layer 0
    p["w1"], p["b1"] = lin(ks[2], ks[3], H_INT, H_INT)   # deep layer 1
    p["w2"], p["b2"] = lin(ks[4], ks[5], H_INT, HOFS)    # deep layer 2 (no SELU)
    p["wc1"], p["bc1"] = lin(ks[6], ks[7], CLS_IN, CLS_HID)  # classifier Linear 1
    p["wc2"], p["bc2"] = lin(ks[8], ks[9], CLS_HID, OUT)     # classifier Linear 2
    return p


def pack_params(p):
    """Pad / refactor the raw DeepFM weights into lane-dense, fused, MXU-friendly form."""
    def pad2(w, rows, cols):
        w = np.asarray(w, np.float32)
        return np.pad(w, ((0, rows - w.shape[0]), (0, cols - w.shape[1])))

    wc1 = np.asarray(p["wc1"], np.float32)
    wc1_ho = wc1[:HOFS]                       # rows fed by higher-order features
    wc1_so = wc1[HOFS:HOFS + N_PAIRS]         # rows fed by pairwise dot products
    wc1_fs = wc1[HOFS + N_PAIRS:]             # rows fed by the first-order feature sum

    # so_int @ wc1_so  ==  pair_products @ wso   (reduction over D folded into the weight)
    wso = pad2(np.repeat(wc1_so, D, axis=0), PW, CLS_HID)
    # feat_sum @ wc1_fs  ==  x @ wfs             (sum over features folded into the weight)
    wfs = np.tile(wc1_fs, (F, 1))              # (FD, CLS_HID)

    # 0/1 gather matrices selecting the left / right embedding of each (i < j) pair.
    gl = np.zeros((FD, PW), np.float32)
    gr = np.zeros((FD, PW), np.float32)
    eye = np.eye(D, dtype=np.float32)
    pidx = 0
    for i in range(F):
        for j in range(i + 1, F):
            gl[i * D:(i + 1) * D, pidx * D:(pidx + 1) * D] = eye
            gr[j * D:(j + 1) * D, pidx * D:(pidx + 1) * D] = eye
            pidx += 1

    # Everything that multiplies xb from the left, fused into one (FD, 640) weight:
    #   [ deep layer 0 | gather_left | gather_right | first-order-sum weight ]
    wfused = np.concatenate([pad2(p["w0"], FD, HP), gl, gr, wfs], axis=1)
    assert wfused.shape == (FD, FUSED_W)

    # Classifier Linear 1 for the lane-aligned concat [ho(128) | pprod(128)].
    wcls = np.concatenate([pad2(wc1_ho, HP, CLS_HID), wso], axis=0)        # (256, 256)

    packed = {
        "wfused": wfused, "b0": pad2(p["b0"], 1, HP),
        "w1": pad2(p["w1"], HP, HP), "b1": pad2(p["b1"], 1, HP),
        "w2": pad2(p["w2"], HP, HP), "b2": pad2(p["b2"], 1, HP),
        "wcls": wcls, "bc1": np.asarray(p["bc1"], np.float32),
        # Final Linear emitted transposed: (OUT padded to 8 sublanes, CLS_HID).
        "wc2t": pad2(np.asarray(p["wc2"], np.float32).T, OUTP8, CLS_HID),
        "bc2t": pad2(np.asarray(p["bc2"], np.float32).T, OUTP8, 1),
    }
    out = {}
    for k, v in packed.items():
        if k.startswith("b"):
            out[k] = jnp.asarray(v, jnp.float32)   # biases: f32, added after f32 accum
        else:
            out[k] = jnp.asarray(v, WEIGHT_DTYPE)  # MXU operands: bf16 storage
    return out


# ---------------- pure-JAX f32 reference (mirrors the PyTorch module) ----------------
def deepfm_reference(feats, p):
    b = feats.shape[0]
    x = feats.reshape(b, FD)
    h = _selu(x @ p["w0"] + p["b0"])
    h = _selu(h @ p["w1"] + p["b1"])
    ho = h @ p["w2"] + p["b2"]
    pairs = []
    for i in range(F):
        for j in range(i + 1, F):
            pairs.append(jnp.sum(feats[:, i] * feats[:, j], axis=-1, keepdims=True))
    so = jnp.concatenate(pairs, axis=1)
    fs = jnp.sum(feats, axis=1)
    cin = jnp.concatenate([ho, so, fs], axis=1)
    c = jnp.maximum(cin @ p["wc1"] + p["bc1"], 0.0)
    return c @ p["wc2"] + p["bc2"]


if __name__ == "__main__":
    # Non-multiple-of-128 batch exercises the padding path; _pick_tb gives tb=512 and a
    # 2-step "parallel" grid (both v7x TensorCores get work).
    B = 1000
    key = jax.random.PRNGKey(0)
    fkeys = jax.random.split(key, F)
    features_dict = {
        f"feature_{i}": jax.random.normal(fkeys[i], (B, D), jnp.float32)
        for i in range(F)
    }
    sorted_keys = sorted(features_dict)
    feats = jnp.stack([features_dict[k] for k in sorted_keys], axis=1)  # (B, F, D)
    x = feats.reshape(B, FD)   # == torch.cat over sorted keys (contiguous, free)

    raw = init_params(jax.random.PRNGKey(42))
    packed = pack_params(raw)

    out = jax.block_until_ready(deepfm_forward(x, packed))
    assert out.shape == (B, OUT), out.shape
    assert bool(jnp.all(jnp.isfinite(out)))

    ref = deepfm_reference(feats, raw)
    err = jnp.abs(out - ref)
    tol = 5e-2 + 5e-2 * jnp.abs(ref)   # mixed abs/rel check (bf16 weights + activations)
    assert bool(jnp.all(err <= tol)), (
        f"mismatch vs f32 reference: max_abs={float(jnp.max(err))}")

    print("KERNEL_OK")
</pallas_src>

<mosaic_0001>
module attributes {stable_mosaic.version = 11 : i64} {
  func.func @deepfm_kernel(%arg0: i32, %arg1: memref<512x32xbf16, #tpu.memory_space<vmem>>, %arg2: memref<32x640xbf16, #tpu.memory_space<vmem>>, %arg3: memref<1x128xf32, #tpu.memory_space<vmem>>, %arg4: memref<128x128xbf16, #tpu.memory_space<vmem>>, %arg5: memref<1x128xf32, #tpu.memory_space<vmem>>, %arg6: memref<128x128xbf16, #tpu.memory_space<vmem>>, %arg7: memref<1x128xf32, #tpu.memory_space<vmem>>, %arg8: memref<256x256xbf16, #tpu.memory_space<vmem>>, %arg9: memref<1x256xf32, #tpu.memory_space<vmem>>, %arg10: memref<8x256xbf16, #tpu.memory_space<vmem>>, %arg11: memref<8x1xf32, #tpu.memory_space<vmem>>, %arg12: memref<8x512xf32, #tpu.memory_space<vmem>>) attributes {dimension_semantics = [#tpu.dimension_semantics<parallel>], iteration_bounds = array<i64: 2>, scalar_prefetch = 0 : i64, scratch_operands = 0 : i64, tpu.core_type = #tpu.core_type<tc>, window_params = [{transform_indices = @transform_0, window_bounds = array<i64: 512, 32>}, {pipeline_mode = #tpu.pipeline_mode<synchronous>, transform_indices = @transform_1, window_bounds = array<i64: 32, 640>}, {pipeline_mode = #tpu.pipeline_mode<synchronous>, transform_indices = @transform_2, window_bounds = array<i64: 1, 128>}, {pipeline_mode = #tpu.pipeline_mode<synchronous>, transform_indices = @transform_3, window_bounds = array<i64: 128, 128>}, {pipeline_mode = #tpu.pipeline_mode<synchronous>, transform_indices = @transform_4, window_bounds = array<i64: 1, 128>}, {pipeline_mode = #tpu.pipeline_mode<synchronous>, transform_indices = @transform_5, window_bounds = array<i64: 128, 128>}, {pipeline_mode = #tpu.pipeline_mode<synchronous>, transform_indices = @transform_6, window_bounds = array<i64: 1, 128>}, {pipeline_mode = #tpu.pipeline_mode<synchronous>, transform_indices = @transform_7, window_bounds = array<i64: 256, 256>}, {pipeline_mode = #tpu.pipeline_mode<synchronous>, transform_indices = @transform_8, window_bounds = array<i64: 1, 256>}, {pipeline_mode = #tpu.pipeline_mode<synchronous>, transform_indices = @transform_9, window_bounds = array<i64: 8, 256>}, {pipeline_mode = #tpu.pipeline_mode<synchronous>, transform_indices = @transform_10, window_bounds = array<i64: 8, 1>}, {transform_indices = @transform_11, window_bounds = array<i64: 8, 512>}]} {
    %c0 = arith.constant 0 : index
    %c0_0 = arith.constant 0 : index
    %0 = vector.load %arg1[%c0, %c0_0] : memref<512x32xbf16, #tpu.memory_space<vmem>>, vector<512x32xbf16>
    %c0_1 = arith.constant 0 : index
    %c0_2 = arith.constant 0 : index
    %1 = vector.load %arg2[%c0_1, %c0_2] : memref<32x640xbf16, #tpu.memory_space<vmem>>, vector<32x640xbf16>
    %cst = arith.constant dense<0.000000e+00> : vector<512x640xf32>
    %2 = tpu.matmul %0, %1, %cst {dimension_numbers = #tpu.dot_dimension_numbers<[1], [0], [0], [1], [0, 0, 1, 1], [], []>} : vector<512x32xbf16>, vector<32x640xbf16>, vector<512x640xf32> -> vector<512x640xf32>
    %3 = vector.extract_strided_slice %2 {offsets = [0, 0], sizes = [512, 128], strides = [1, 1]} : vector<512x640xf32> to vector<512x128xf32>
    %c0_3 = arith.constant 0 : index
    %c0_4 = arith.constant 0 : index
    %4 = vector.load %arg3[%c0_3, %c0_4] : memref<1x128xf32, #tpu.memory_space<vmem>>, vector<1x128xf32>
    %5 = vector.broadcast %4 : vector<1x128xf32> to vector<512x128xf32>
    %6 = arith.addf %3, %5 : vector<512x128xf32>
    %cst_5 = arith.constant 0.000000e+00 : f32
    %7 = vector.broadcast %cst_5 : f32 to vector<512x128xf32>
    %8 = arith.cmpf ogt, %6, %7 : vector<512x128xf32>
    %cst_6 = arith.constant 0.000000e+00 : f32
    %9 = vector.broadcast %cst_6 : f32 to vector<512x128xf32>
    %10 = arith.minimumf %6, %9 : vector<512x128xf32>
    %11 = math.exp %10 : vector<512x128xf32>
    %cst_7 = arith.constant 1.000000e+00 : f32
    %12 = vector.broadcast %cst_7 : f32 to vector<512x128xf32>
    %13 = arith.subf %11, %12 : vector<512x128xf32>
    %cst_8 = arith.constant 1.67326319 : f32
    %14 = vector.broadcast %cst_8 : f32 to vector<512x128xf32>
    %15 = arith.mulf %14, %13 : vector<512x128xf32>
    %16 = arith.select %8, %6, %15 : vector<512x128xi1>, vector<512x128xf32>
    %cst_9 = arith.constant 1.05070102 : f32
    %17 = vector.broadcast %cst_9 : f32 to vector<512x128xf32>
    %18 = arith.mulf %17, %16 : vector<512x128xf32>
    %19 = arith.truncf %18 : vector<512x128xf32> to vector<512x128xbf16>
    %c0_10 = arith.constant 0 : index
    %c0_11 = arith.constant 0 : index
    %20 = vector.load %arg4[%c0_10, %c0_11] : memref<128x128xbf16, #tpu.memory_space<vmem>>, vector<128x128xbf16>
    %cst_12 = arith.constant dense<0.000000e+00> : vector<512x128xf32>
    %21 = tpu.matmul %19, %20, %cst_12 {dimension_numbers = #tpu.dot_dimension_numbers<[1], [0], [0], [1], [0, 0, 1, 1], [], []>} : vector<512x128xbf16>, vector<128x128xbf16>, vector<512x128xf32> -> vector<512x128xf32>
    %c0_13 = arith.constant 0 : index
    %c0_14 = arith.constant 0 : index
    %22 = vector.load %arg5[%c0_13, %c0_14] : memref<1x128xf32, #tpu.memory_space<vmem>>, vector<1x128xf32>
    %23 = vector.broadcast %22 : vector<1x128xf32> to vector<512x128xf32>
    %24 = arith.addf %21, %23 : vector<512x128xf32>
    %cst_15 = arith.constant 0.000000e+00 : f32
    %25 = vector.broadcast %cst_15 : f32 to vector<512x128xf32>
    %26 = arith.cmpf ogt, %24, %25 : vector<512x128xf32>
    %cst_16 = arith.constant 0.000000e+00 : f32
    %27 = vector.broadcast %cst_16 : f32 to vector<512x128xf32>
    %28 = arith.minimumf %24, %27 : vector<512x128xf32>
    %29 = math.exp %28 : vector<512x128xf32>
    %cst_17 = arith.constant 1.000000e+00 : f32
    %30 = vector.broadcast %cst_17 : f32 to vector<512x128xf32>
    %31 = arith.subf %29, %30 : vector<512x128xf32>
    %cst_18 = arith.constant 1.67326319 : f32
    %32 = vector.broadcast %cst_18 : f32 to vector<512x128xf32>
    %33 = arith.mulf %32, %31 : vector<512x128xf32>
    %34 = arith.select %26, %24, %33 : vector<512x128xi1>, vector<512x128xf32>
    %cst_19 = arith.constant 1.05070102 : f32
    %35 = vector.broadcast %cst_19 : f32 to vector<512x128xf32>
    %36 = arith.mulf %35, %34 : vector<512x128xf32>
    %37 = arith.truncf %36 : vector<512x128xf32> to vector<512x128xbf16>
    %c0_20 = arith.constant 0 : index
    %c0_21 = arith.constant 0 : index
    %38 = vector.load %arg6[%c0_20, %c0_21] : memref<128x128xbf16, #tpu.memory_space<vmem>>, vector<128x128xbf16>
    %cst_22 = arith.constant dense<0.000000e+00> : vector<512x128xf32>
    %39 = tpu.matmul %37, %38, %cst_22 {dimension_numbers = #tpu.dot_dimension_numbers<[1], [0], [0], [1], [0, 0, 1, 1], [], []>} : vector<512x128xbf16>, vector<128x128xbf16>, vector<512x128xf32> -> vector<512x128xf32>
    %c0_23 = arith.constant 0 : index
    %c0_24 = arith.constant 0 : index
    %40 = vector.load %arg7[%c0_23, %c0_24] : memref<1x128xf32, #tpu.memory_space<vmem>>, vector<1x128xf32>
    %41 = vector.broadcast %40 : vector<1x128xf32> to vector<512x128xf32>
    %42 = arith.addf %39, %41 : vector<512x128xf32>
    %43 = vector.extract_strided_slice %2 {offsets = [0, 128], sizes = [512, 128], strides = [1, 1]} : vector<512x640xf32> to vector<512x128xf32>
    %44 = vector.extract_strided_slice %2 {offsets = [0, 256], sizes = [512, 128], strides = [1, 1]} : vector<512x640xf32> to vector<512x128xf32>
    %45 = arith.mulf %43, %44 : vector<512x128xf32>
    %46 = tpu.concatenate %42, %45 in 1 : vector<512x128xf32>, vector<512x128xf32> -> vector<512x256xf32>
    %47 = arith.truncf %46 : vector<512x256xf32> to vector<512x256xbf16>
    %c0_25 = arith.constant 0 : index
    %c0_26 = arith.constant 0 : index
    %48 = vector.load %arg8[%c0_25, %c0_26] : memref<256x256xbf16, #tpu.memory_space<vmem>>, vector<256x256xbf16>
    %cst_27 = arith.constant dense<0.000000e+00> : vector<512x256xf32>
    %49 = tpu.matmul %47, %48, %cst_27 {dimension_numbers = #tpu.dot_dimension_numbers<[1], [0], [0], [1], [0, 0, 1, 1], [], []>} : vector<512x256xbf16>, vector<256x256xbf16>, vector<512x256xf32> -> vector<512x256xf32>
    %50 = vector.extract_strided_slice %2 {offsets = [0, 384], sizes = [512, 256], strides = [1, 1]} : vector<512x640xf32> to vector<512x256xf32>
    %51 = arith.addf %49, %50 : vector<512x256xf32>
    %c0_28 = arith.constant 0 : index
    %c0_29 = arith.constant 0 : index
    %52 = vector.load %arg9[%c0_28, %c0_29] : memref<1x256xf32, #tpu.memory_space<vmem>>, vector<1x256xf32>
    %53 = vector.broadcast %52 : vector<1x256xf32> to vector<512x256xf32>
    %54 = arith.addf %51, %53 : vector<512x256xf32>
    %cst_30 = arith.constant 0.000000e+00 : f32
    %55 = vector.broadcast %cst_30 : f32 to vector<512x256xf32>
    %56 = arith.maximumf %54, %55 : vector<512x256xf32>
    %c0_31 = arith.constant 0 : index
    %c0_32 = arith.constant 0 : index
    %57 = vector.load %arg10[%c0_31, %c0_32] : memref<8x256xbf16, #tpu.memory_space<vmem>>, vector<8x256xbf16>
    %58 = arith.truncf %56 : vector<512x256xf32> to vector<512x256xbf16>
    %cst_33 = arith.constant dense<0.000000e+00> : vector<8x512xf32>
    %59 = tpu.matmul %57, %58, %cst_33 {dimension_numbers = #tpu.dot_dimension_numbers<[1], [1], [0], [0], [0, 0, 1, 0], [], []>} : vector<8x256xbf16>, vector<512x256xbf16>, vector<8x512xf32> -> vector<8x512xf32>
    %c0_34 = arith.constant 0 : index
    %c0_35 = arith.constant 0 : index
    %60 = vector.load %arg11[%c0_34, %c0_35] : memref<8x1xf32, #tpu.memory_space<vmem>>, vector<8x1xf32>
    %61 = vector.broadcast %60 : vector<8x1xf32> to vector<8x512xf32>
    %62 = arith.addf %59, %61 : vector<8x512xf32>
    %c0_36 = arith.constant 0 : index
    %c0_37 = arith.constant 0 : index
    %63 = vector.load %arg12[%c0_36, %c0_37] : memref<8x512xf32, #tpu.memory_space<vmem>>, vector<8x512xf32>
    tpu.vector_store %arg12[%c0_36, %c0_37], %62 {strides = array<i32>} : memref<8x512xf32, #tpu.memory_space<vmem>>, vector<8x512xf32>,
    return
  }
  func.func @transform_0(%arg0: i32) -> (i32, i32) {
    %c0_i32 = arith.constant 0 : i32
    %c0_i32_0 = arith.constant 0 : i32
    return %arg0, %c0_i32 : i32, i32
  }
  func.func @transform_1(%arg0: i32) -> (i32, i32) {
    %c0_i32 = arith.constant 0 : i32
    %c0_i32_0 = arith.constant 0 : i32
    %c0_i32_1 = arith.constant 0 : i32
    return %c0_i32, %c0_i32_0 : i32, i32
  }
  func.func @transform_2(%arg0: i32) -> (i32, i32) {
    %c0_i32 = arith.constant 0 : i32
    %c0_i32_0 = arith.constant 0 : i32
    %c0_i32_1 = arith.constant 0 : i32
    return %c0_i32, %c0_i32_0 : i32, i32
  }
  func.func @transform_3(%arg0: i32) -> (i32, i32) {
    %c0_i32 = arith.constant 0 : i32
    %c0_i32_0 = arith.constant 0 : i32
    %c0_i32_1 = arith.constant 0 : i32
    return %c0_i32, %c0_i32_0 : i32, i32
  }
  func.func @transform_4(%arg0: i32) -> (i32, i32) {
    %c0_i32 = arith.constant 0 : i32
    %c0_i32_0 = arith.constant 0 : i32
    %c0_i32_1 = arith.constant 0 : i32
    return %c0_i32, %c0_i32_0 : i32, i32
  }
  func.func @transform_5(%arg0: i32) -> (i32, i32) {
    %c0_i32 = arith.constant 0 : i32
    %c0_i32_0 = arith.constant 0 : i32
    %c0_i32_1 = arith.constant 0 : i32
    return %c0_i32, %c0_i32_0 : i32, i32
  }
  func.func @transform_6(%arg0: i32) -> (i32, i32) {
    %c0_i32 = arith.constant 0 : i32
    %c0_i32_0 = arith.constant 0 : i32
    %c0_i32_1 = arith.constant 0 : i32
    return %c0_i32, %c0_i32_0 : i32, i32
  }
  func.func @transform_7(%arg0: i32) -> (i32, i32) {
    %c0_i32 = arith.constant 0 : i32
    %c0_i32_0 = arith.constant 0 : i32
    %c0_i32_1 = arith.constant 0 : i32
    return %c0_i32, %c0_i32_0 : i32, i32
  }
  func.func @transform_8(%arg0: i32) -> (i32, i32) {
    %c0_i32 = arith.constant 0 : i32
    %c0_i32_0 = arith.constant 0 : i32
    %c0_i32_1 = arith.constant 0 : i32
    return %c0_i32, %c0_i32_0 : i32, i32
  }
  func.func @transform_9(%arg0: i32) -> (i32, i32) {
    %c0_i32 = arith.constant 0 : i32
    %c0_i32_0 = arith.constant 0 : i32
    %c0_i32_1 = arith.constant 0 : i32
    return %c0_i32, %c0_i32_0 : i32, i32
  }
  func.func @transform_10(%arg0: i32) -> (i32, i32) {
    %c0_i32 = arith.constant 0 : i32
    %c0_i32_0 = arith.constant 0 : i32
    %c0_i32_1 = arith.constant 0 : i32
    return %c0_i32, %c0_i32_0 : i32, i32
  }
  func.func @transform_11(%arg0: i32) -> (i32, i32) {
    %c0_i32 = arith.constant 0 : i32
    %c0_i32_0 = arith.constant 0 : i32
    return %c0_i32, %arg0 : i32, i32
  }
}

</mosaic_0001>

<llo_original>
// kernel: tpu_custom_call.1
$region0: #{tpu_custom_call.1}
  #allocation0 [shape = 'u32[]', space=smem, size = 0x4, offset = 0x4, fixed_abs, tag = 'smem constant byte address 0x4 - core index']
  #allocation1 [shape = 'u32[144,128]{1,0:T(1,128)}', space=vmem, size = 0x12000, scoped, tag = 'internal scratch']
  %s0 = inlined_call_operand.vmem [shape: bf16[1024,32], index: 0, kind: input, shape index: {}]
  %s1 = inlined_call_operand.vmem [shape: bf16[32,640], index: 1, kind: input, shape index: {}]
  %s2 = inlined_call_operand.vmem [shape: f32[1,128], index: 2, kind: input, shape index: {}]
  %s3 = inlined_call_operand.vmem [shape: bf16[128,128], index: 3, kind: input, shape index: {}]
  %s4 = inlined_call_operand.vmem [shape: f32[1,128], index: 4, kind: input, shape index: {}]
  %s5 = inlined_call_operand.vmem [shape: bf16[128,128], index: 5, kind: input, shape index: {}]
  %s6 = inlined_call_operand.vmem [shape: f32[1,128], index: 6, kind: input, shape index: {}]
  %s7 = inlined_call_operand.vmem [shape: bf16[256,256], index: 7, kind: input, shape index: {}]
  %s8 = inlined_call_operand.vmem [shape: f32[1,256], index: 8, kind: input, shape index: {}]
  %s9 = inlined_call_operand.vmem [shape: bf16[8,256], index: 9, kind: input, shape index: {}]
  %s10 = inlined_call_operand.vmem [shape: f32[8,1], index: 10, kind: input, shape index: {}]
  %s11 = inlined_call_operand.hbm [shape: f32[8,1024], index: 11, kind: output, shape index: {}]
  %s12 = sld [smem:[#allocation0]]
  $region77: #{tpu_custom_call.1} parent=0
    _
  %s14 = ssub.s32 1, %s12
  %s15 = scalar_select 0, %s14, %s12
  $region1: #{tpu_custom_call.1} parent=0
    #allocation2 [shape = 'u8[32768]{0}', space=vmem, size = 0x8000, scoped, tag = 'output window, operand 0']
    #allocation3 [shape = 's32[2]{0}', space=sflag, size = 0x8, scoped, tag = 'scoped memory for tpu_custom_call.1']
    %16 = vsyncpa [#allocation3], 0
    %s17 = scalar_lea.sflag [#allocation3], 1
    %18 = vsyncpa %s17, 0
    loop: start=0, step=1, limit=4
    $region2: #{tpu_custom_call.1} parent=1 // loop_pre_header
      _
    $region3: #{tpu_custom_call.1} parent=1 // loop_header
      %s20 = sphi 0, %s24
      %p21 = scmp.ge.s32.totalorder %s20, 4
      %s30 = sphi 0, %s32
      %s33 = sphi 0, %s30
      %s34 = sphi 0, %s33
      %s50 = sphi 0, %s34
      %s54 = sphi 0, %s54
      %s56 = sphi 0, %s54
      %s57 = sphi 0, %s56
      %s71 = sphi 0, %s57
      %s75 = sphi 0, %s75
      %s77 = sphi 0, %s75
      %s78 = sphi 0, %s77
      %s92 = sphi 0, %s78
      %s96 = sphi 0, %s96
      %s98 = sphi 0, %s96
      %s99 = sphi 0, %s98
      %s113 = sphi 0, %s99
      %s117 = sphi 0, %s117
      %s119 = sphi 0, %s117
      %s120 = sphi 0, %s119
      %s134 = sphi 0, %s120
      %s138 = sphi 0, %s138
      %s140 = sphi 0, %s138
      %s141 = sphi 0, %s140
      %s155 = sphi 0, %s141
      %s159 = sphi 0, %s159
      %s161 = sphi 0, %s159
      %s162 = sphi 0, %s161
      %s176 = sphi 0, %s162
      %s180 = sphi 0, %s180
      %s182 = sphi 0, %s180
      %s183 = sphi 0, %s182
      %s197 = sphi 0, %s183
      %s201 = sphi 0, %s201
      %s203 = sphi 0, %s201
      %s204 = sphi 0, %s203
      %s218 = sphi 0, %s204
      %s222 = sphi 0, %s222
      %s224 = sphi 0, %s222
      %s225 = sphi 0, %s224
      %s239 = sphi 0, %s225
      %s243 = sphi 0, %s243
      %s245 = sphi 0, %s243
      %s246 = sphi 0, %s245
      %s260 = sphi 0, %s246
      %s266 = sphi 0, %s268
      %s269 = sphi 0, %s266
      %s270 = sphi 0, %s269
      %s286 = sphi 0, %s270
    $region4: #{tpu_custom_call.1} parent=1 // loop_header_branch
      %23 = sbr.rel (%p21) target = $region8
    $region5: #{tpu_custom_call.1} parent=1 // loop_body
      %s25 = ssub.s32 %s20, 1
      %s26 = ssub.s32 %s20, 2
      %s27 = sadd.s32 %s20, 1
      %s28 = ssub.s32 %s20, %s27
      %p29 = scmp.eq.s32.totalorder %s28, 0
      %s31 = sadd.s32 %s30, 1
      %s32 = scalar_select %p29, %s30, %s31
      %p35 = pneg %p29
      %p36 = scmp.eq.s32.totalorder %s20, 1
      %p37 = por %p35, %p36
      %p38 = scmp.ne.s32.totalorder %s30, %s33
      %p39 = scmp.eq.s32.totalorder %s20, 0
      %p40 = por %p38, %p39
      %p41 = scmp.ne.s32.totalorder %s30, %s33
      %p42 = scmp.eq.s32.totalorder %s25, 1
      %p43 = por %p41, %p42
      %p44 = scmp.ne.s32.totalorder %s33, %s34
      %p45 = scmp.eq.s32.totalorder %s25, 0
      %p46 = por %p44, %p45
      %p47 = scmp.ne.s32.totalorder %s33, %s34
      %p48 = scmp.eq.s32.totalorder %s26, 1
      %p49 = por %p47, %p48
      %p51 = scmp.ne.s32.totalorder %s34, %s50
      %p52 = scmp.eq.s32.totalorder %s26, 0
      %p53 = por %p51, %p52
      %s55 = sadd.s32 %s54, 1
      %p58 = scmp.eq.s32.totalorder %s20, 1
      %p59 = scmp.ne.s32.totalorder %s54, %s56
      %p60 = scmp.eq.s32.totalorder %s20, 0
      %p61 = por %p59, %p60
      %p62 = scmp.ne.s32.totalorder %s54, %s56
      %p63 = scmp.eq.s32.totalorder %s25, 1
      %p64 = por %p62, %p63
      %p65 = scmp.ne.s32.totalorder %s56, %s57
      %p66 = scmp.eq.s32.totalorder %s25, 0
      %p67 = por %p65, %p66
      %p68 = scmp.ne.s32.totalorder %s56, %s57
      %p69 = scmp.eq.s32.totalorder %s26, 1
      %p70 = por %p68, %p69
      %p72 = scmp.ne.s32.totalorder %s57, %s71
      %p73 = scmp.eq.s32.totalorder %s26, 0
      %p74 = por %p72, %p73
      %s76 = sadd.s32 %s75, 1
      %p79 = scmp.eq.s32.totalorder %s20, 1
      %p80 = scmp.ne.s32.totalorder %s75, %s77
      %p81 = scmp.eq.s32.totalorder %s20, 0
      %p82 = por %p80, %p81
      %p83 = scmp.ne.s32.totalorder %s75, %s77
      %p84 = scmp.eq.s32.totalorder %s25, 1
      %p85 = por %p83, %p84
      %p86 = scmp.ne.s32.totalorder %s77, %s78
      %p87 = scmp.eq.s32.totalorder %s25, 0
      %p88 = por %p86, %p87
      %p89 = scmp.ne.s32.totalorder %s77, %s78
      %p90 = scmp.eq.s32.totalorder %s26, 1
      %p91 = por %p89, %p90
      %p93 = scmp.ne.s32.totalorder %s78, %s92
      %p94 = scmp.eq.s32.totalorder %s26, 0
      %p95 = por %p93, %p94
      %s97 = sadd.s32 %s96, 1
      %p100 = scmp.eq.s32.totalorder %s20, 1
      %p101 = scmp.ne.s32.totalorder %s96, %s98
      %p102 = scmp.eq.s32.totalorder %s20, 0
      %p103 = por %p101, %p102
      %p104 = scmp.ne.s32.totalorder %s96, %s98
      %p105 = scmp.eq.s32.totalorder %s25, 1
      %p106 = por %p104, %p105
      %p107 = scmp.ne.s32.totalorder %s98, %s99
      %p108 = scmp.eq.s32.totalorder %s25, 0
      %p109 = por %p107, %p108
      %p110 = scmp.ne.s32.totalorder %s98, %s99
      %p111 = scmp.eq.s32.totalorder %s26, 1
      %p112 = por %p110, %p111
      %p114 = scmp.ne.s32.totalorder %s99, %s113
      %p115 = scmp.eq.s32.totalorder %s26, 0
      %p116 = por %p114, %p115
      %s118 = sadd.s32 %s117, 1
      %p121 = scmp.eq.s32.totalorder %s20, 1
      %p122 = scmp.ne.s32.totalorder %s117, %s119
      %p123 = scmp.eq.s32.totalorder %s20, 0
      %p124 = por %p122, %p123
      %p125 = scmp.ne.s32.totalorder %s117, %s119
      %p126 = scmp.eq.s32.totalorder %s25, 1
      %p127 = por %p125, %p126
      %p128 = scmp.ne.s32.totalorder %s119, %s120
      %p129 = scmp.eq.s32.totalorder %s25, 0
      %p130 = por %p128, %p129
      %p131 = scmp.ne.s32.totalorder %s119, %s120
      %p132 = scmp.eq.s32.totalorder %s26, 1
      %p133 = por %p131, %p132
      %p135 = scmp.ne.s32.totalorder %s120, %s134
      %p136 = scmp.eq.s32.totalorder %s26, 0
      %p137 = por %p135, %p136
      %s139 = sadd.s32 %s138, 1
      %p142 = scmp.eq.s32.totalorder %s20, 1
      %p143 = scmp.ne.s32.totalorder %s138, %s140
      %p144 = scmp.eq.s32.totalorder %s20, 0
      %p145 = por %p143, %p144
      %p146 = scmp.ne.s32.totalorder %s138, %s140
      %p147 = scmp.eq.s32.totalorder %s25, 1
      %p148 = por %p146, %p147
      %p149 = scmp.ne.s32.totalorder %s140, %s141
      %p150 = scmp.eq.s32.totalorder %s25, 0
      %p151 = por %p149, %p150
      %p152 = scmp.ne.s32.totalorder %s140, %s141
      %p153 = scmp.eq.s32.totalorder %s26, 1
      %p154 = por %p152, %p153
      %p156 = scmp.ne.s32.totalorder %s141, %s155
      %p157 = scmp.eq.s32.totalorder %s26, 0
      %p158 = por %p156, %p157
      %s160 = sadd.s32 %s159, 1
      %p163 = scmp.eq.s32.totalorder %s20, 1
      %p164 = scmp.ne.s32.totalorder %s159, %s161
      %p165 = scmp.eq.s32.totalorder %s20, 0
      %p166 = por %p164, %p165
      %p167 = scmp.ne.s32.totalorder %s159, %s161
      %p168 = scmp.eq.s32.totalorder %s25, 1
      %p169 = por %p167, %p168
      %p170 = scmp.ne.s32.totalorder %s161, %s162
      %p171 = scmp.eq.s32.totalorder %s25, 0
      %p172 = por %p170, %p171
      %p173 = scmp.ne.s32.totalorder %s161, %s162
      %p174 = scmp.eq.s32.totalorder %s26, 1
      %p175 = por %p173, %p174
      %p177 = scmp.ne.s32.totalorder %s162, %s176
      %p178 = scmp.eq.s32.totalorder %s26, 0
      %p179 = por %p177, %p178
      %s181 = sadd.s32 %s180, 1
      %p184 = scmp.eq.s32.totalorder %s20, 1
      %p185 = scmp.ne.s32.totalorder %s180, %s182
      %p186 = scmp.eq.s32.totalorder %s20, 0
      %p187 = por %p185, %p186
      %p188 = scmp.ne.s32.totalorder %s180, %s182
      %p189 = scmp.eq.s32.totalorder %s25, 1
      %p190 = por %p188, %p189
      %p191 = scmp.ne.s32.totalorder %s182, %s183
      %p192 = scmp.eq.s32.totalorder %s25, 0
      %p193 = por %p191, %p192
      %p194 = scmp.ne.s32.totalorder %s182, %s183
      %p195 = scmp.eq.s32.totalorder %s26, 1
      %p196 = por %p194, %p195
      %p198 = scmp.ne.s32.totalorder %s183, %s197
      %p199 = scmp.eq.s32.totalorder %s26, 0
      %p200 = por %p198, %p199
      %s202 = sadd.s32 %s201, 1
      %p205 = scmp.eq.s32.totalorder %s20, 1
      %p206 = scmp.ne.s32.totalorder %s201, %s203
      %p207 = scmp.eq.s32.totalorder %s20, 0
      %p208 = por %p206, %p207
      %p209 = scmp.ne.s32.totalorder %s201, %s203
      %p210 = scmp.eq.s32.totalorder %s25, 1
      %p211 = por %p209, %p210
      %p212 = scmp.ne.s32.totalorder %s203, %s204
      %p213 = scmp.eq.s32.totalorder %s25, 0
      %p214 = por %p212, %p213
      %p215 = scmp.ne.s32.totalorder %s203, %s204
      %p216 = scmp.eq.s32.totalorder %s26, 1
      %p217 = por %p215, %p216
      %p219 = scmp.ne.s32.totalorder %s204, %s218
      %p220 = scmp.eq.s32.totalorder %s26, 0
      %p221 = por %p219, %p220
      %s223 = sadd.s32 %s222, 1
      %p226 = scmp.eq.s32.totalorder %s20, 1
      %p227 = scmp.ne.s32.totalorder %s222, %s224
      %p228 = scmp.eq.s32.totalorder %s20, 0
      %p229 = por %p227, %p228
      %p230 = scmp.ne.s32.totalorder %s222, %s224
      %p231 = scmp.eq.s32.totalorder %s25, 1
      %p232 = por %p230, %p231
      %p233 = scmp.ne.s32.totalorder %s224, %s225
      %p234 = scmp.eq.s32.totalorder %s25, 0
      %p235 = por %p233, %p234
      %p236 = scmp.ne.s32.totalorder %s224, %s225
      %p237 = scmp.eq.s32.totalorder %s26, 1
      %p238 = por %p236, %p237
      %p240 = scmp.ne.s32.totalorder %s225, %s239
      %p241 = scmp.eq.s32.totalorder %s26, 0
      %p242 = por %p240, %p241
      %s244 = sadd.s32 %s243, 1
      %p247 = scmp.eq.s32.totalorder %s20, 1
      %p248 = scmp.ne.s32.totalorder %s243, %s245
      %p249 = scmp.eq.s32.totalorder %s20, 0
      %p250 = por %p248, %p249
      %p251 = scmp.ne.s32.totalorder %s243, %s245
      %p252 = scmp.eq.s32.totalorder %s25, 1
      %p253 = por %p251, %p252
      %p254 = scmp.ne.s32.totalorder %s245, %s246
      %p255 = scmp.eq.s32.totalorder %s25, 0
      %p256 = por %p254, %p255
      %p257 = scmp.ne.s32.totalorder %s245, %s246
      %p258 = scmp.eq.s32.totalorder %s26, 1
      %p259 = por %p257, %p258
      %p261 = scmp.ne.s32.totalorder %s246, %s260
      %p262 = scmp.eq.s32.totalorder %s26, 0
      %p263 = por %p261, %p262
      %s264 = ssub.s32 %s20, %s27
      %p265 = scmp.eq.s32.totalorder %s264, 0
      %s267 = sadd.s32 %s266, 1
      %s268 = scalar_select %p265, %s266, %s267
      %p271 = pneg %p265
      %p272 = scmp.eq.s32.totalorder %s20, 1
      %p273 = por %p271, %p272
      %p274 = scmp.ne.s32.totalorder %s266, %s269
      %p275 = scmp.eq.s32.totalorder %s20, 0
      %p276 = por %p274, %p275
      %p277 = scmp.ne.s32.totalorder %s266, %s269
      %p278 = scmp.eq.s32.totalorder %s25, 1
      %p279 = por %p277, %p278
      %p280 = scmp.ne.s32.totalorder %s269, %s270
      %p281 = scmp.eq.s32.totalorder %s25, 0
      %p282 = por %p280, %p281
      %p283 = scmp.ne.s32.totalorder %s269, %s270
      %p284 = scmp.eq.s32.totalorder %s26, 1
      %p285 = por %p283, %p284
      %p287 = scmp.ne.s32.totalorder %s270, %s286
      %p288 = scmp.eq.s32.totalorder %s26, 0
      %p289 = por %p287, %p288
      %p290 = scmp.le.s32.totalorder 1, %s20
      %p291 = scmp.lt.s32.totalorder %s20, 3
      %p292 = pnand %p290, %p291
      %p293 = pneg %p292
      // Predicated region
      $region9: #{tpu_custom_call.1} parent=5 // pred_check
        _
      $region10: #{tpu_custom_call.1} parent=5 // pred_check_branch
        %295 = sbr.rel (%p292) target = $region12
      $region11: #{tpu_custom_call.1} parent=5 // pred_region
        %s296 = ssub.s32 %s20, 1
        // Predicated region
        $region13: #{tpu_custom_call.1} parent=11 // pred_check
          %p297 = pneg %p67
        $region14: #{tpu_custom_call.1} parent=11 // pred_check_branch
          %299 = sbr.rel (%p297) target = $region16
        $region15: #{tpu_custom_call.1} parent=11 // pred_region
          _
        $region16: #{tpu_custom_call.1} parent=11 // pred_fallthru
          _
        // Predicated region
        $region17: #{tpu_custom_call.1} parent=11 // pred_check
          %p300 = pneg %p88
        $region18: #{tpu_custom_call.1} parent=11 // pred_check_branch
          %302 = sbr.rel (%p300) target = $region20
        $region19: #{tpu_custom_call.1} parent=11 // pred_region
          _
        $region20: #{tpu_custom_call.1} parent=11 // pred_fallthru
          _
        // Predicated region
        $region21: #{tpu_custom_call.1} parent=11 // pred_check
          %p303 = pneg %p109
        $region22: #{tpu_custom_call.1} parent=11 // pred_check_branch
          %305 = sbr.rel (%p303) target = $region24
        $region23: #{tpu_custom_call.1} parent=11 // pred_region
          _
        $region24: #{tpu_custom_call.1} parent=11 // pred_fallthru
          _
        // Predicated region
        $region25: #{tpu_custom_call.1} parent=11 // pred_check
          %p306 = pneg %p130
        $region26: #{tpu_custom_call.1} parent=11 // pred_check_branch
          %308 = sbr.rel (%p306) target = $region28
        $region27: #{tpu_custom_call.1} parent=11 // pred_region
          _
        $region28: #{tpu_custom_call.1} parent=11 // pred_fallthru
          _
        // Predicated region
        $region29: #{tpu_custom_call.1} parent=11 // pred_check
          %p309 = pneg %p151
        $region30: #{tpu_custom_call.1} parent=11 // pred_check_branch
          %311 = sbr.rel (%p309) target = $region32
        $region31: #{tpu_custom_call.1} parent=11 // pred_region
          _
        $region32: #{tpu_custom_call.1} parent=11 // pred_fallthru
          _
        // Predicated region
        $region33: #{tpu_custom_call.1} parent=11 // pred_check
          %p312 = pneg %p172
        $region34: #{tpu_custom_call.1} parent=11 // pred_check_branch
          %314 = sbr.rel (%p312) target = $region36
        $region35: #{tpu_custom_call.1} parent=11 // pred_region
          _
        $region36: #{tpu_custom_call.1} parent=11 // pred_fallthru
          _
        // Predicated region
        $region37: #{tpu_custom_call.1} parent=11 // pred_check
          %p315 = pneg %p193
        $region38: #{tpu_custom_call.1} parent=11 // pred_check_branch
          %317 = sbr.rel (%p315) target = $region40
        $region39: #{tpu_custom_call.1} parent=11 // pred_region
          _
        $region40: #{tpu_custom_call.1} parent=11 // pred_fallthru
          _
        // Predicated region
        $region41: #{tpu_custom_call.1} parent=11 // pred_check
          %p318 = pneg %p214
        $region42: #{tpu_custom_call.1} parent=11 // pred_check_branch
          %320 = sbr.rel (%p318) target = $region44
        $region43: #{tpu_custom_call.1} parent=11 // pred_region
          _
        $region44: #{tpu_custom_call.1} parent=11 // pred_fallthru
          _
        // Predicated region
        $region45: #{tpu_custom_call.1} parent=11 // pred_check
          %p321 = pneg %p235
        $region46: #{tpu_custom_call.1} parent=11 // pred_check_branch
          %323 = sbr.rel (%p321) target = $region48
        $region47: #{tpu_custom_call.1} parent=11 // pred_region
          _
        $region48: #{tpu_custom_call.1} parent=11 // pred_fallthru
          _
        // Predicated region
        $region49: #{tpu_custom_call.1} parent=11 // pred_check
          %p324 = pneg %p256
        $region50: #{tpu_custom_call.1} parent=11 // pred_check_branch
          %326 = sbr.rel (%p324) target = $region52
        $region51: #{tpu_custom_call.1} parent=11 // pred_region
          _
        $region52: #{tpu_custom_call.1} parent=11 // pred_fallthru
          _
      $region12: #{tpu_custom_call.1} parent=5 // pred_fallthru
        _
      %p327 = scmp.lt.s32.totalorder %s20, 2
      // Predicated region
      $region53: #{tpu_custom_call.1} parent=5 // pred_check
        %p328 = pneg %p327
      $region54: #{tpu_custom_call.1} parent=5 // pred_check_branch
        %330 = sbr.rel (%p328) target = $region56
      $region55: #{tpu_custom_call.1} parent=5 // pred_region
        // Predicated region
        $region57: #{tpu_custom_call.1} parent=55 // pred_check
          %p331 = pneg %p40
        $region58: #{tpu_custom_call.1} parent=55 // pred_check_branch
          %333 = sbr.rel (%p331) target = $region60
        $region59: #{tpu_custom_call.1} parent=55 // pred_region
          %s334 = smul.u32 64, %s20
          %p335 = scmp.lt.s32.totalorder %s334, 127
          %s336 = scalar_select %p335, %s334, 127
          %s337 = smul.addr %s336, 4
          %s338 = scalar_lea.vmem %s0, %s337
          %s339 = smul.u32 64, %s20
        $region60: #{tpu_custom_call.1} parent=55 // pred_fallthru
          _
      $region56: #{tpu_custom_call.1} parent=5 // pred_fallthru
        _
      %p340 = scmp.le.s32.totalorder 1, %s20
      %p341 = scmp.lt.s32.totalorder %s20, 3
      %p342 = pnand %p340, %p341
      %p343 = pneg %p342
      // Predicated region
      $region61: #{tpu_custom_call.1} parent=5 // pred_check
        _
      $region62: #{tpu_custom_call.1} parent=5 // pred_check_branch
        %345 = sbr.rel (%p342) target = $region64
      $region63: #{tpu_custom_call.1} parent=5 // pred_region
        %s346 = ssub.s32 %s20, 1
        %s347 = smul.u32 64, %s25
        %p348 = scmp.lt.s32.totalorder %s347, 127
        %s349 = scalar_select %p348, %s347, 127
        %s350 = smul.addr %s349, 4
        %s351 = scalar_lea.vmem %s0, %s350
        %p352 = pneg %p46
        %p353 = pneg %p43
        %p354 = pneg %p67
        %p355 = pneg %p64
        %p356 = pneg %p88
        %p357 = pneg %p85
        %p358 = pneg %p109
        %p359 = pneg %p106
        %p360 = pneg %p130
        %p361 = pneg %p127
        %p362 = pneg %p151
        %p363 = pneg %p148
        %p364 = pneg %p172
        %p365 = pneg %p169
        %p366 = pneg %p193
        %p367 = pneg %p190
        %p368 = pneg %p214
        %p369 = pneg %p211
        %p370 = pneg %p235
        %p371 = pneg %p232
        %p372 = pneg %p256
        %p373 = pneg %p253
        %p374 = pneg %p282
        %p375 = pneg %p279
        %s376 = sand.u32 %s269, 1
        %s377 = scalar_lea.sflag [#allocation3], %s376
        %s378 = sand.u32 %s269, 1
        %s379 = smul.addr %s378, 32
        %s380 = scalar_lea.vmem [#allocation2], %s379
        %s381 = smul.u32 64, %s25
        %p382 = scmp.lt.s32.totalorder %s381, 127
        %s383 = scalar_select %p382, %s381, 127
        %s384 = smul.addr %s383, 4
        %s385 = scalar_lea.vmem %s0, %s384
        %s386 = smul.u32 64, %s25
        %s387 = smul.u32 4, %s25
        %v389 = vld [vmem:[%s385] sm:$0xf]
        %v390 = vld [vmem:[%s385 + $0x4] sm:$0xf]
        %v391 = vld [vmem:[%s385 + $0x8] sm:$0xf]
        %v392 = vld [vmem:[%s385 + $0xc] sm:$0xf]
        %v393 = vld [vmem:[%s385 + $0x10] sm:$0xf]
        %v394 = vld [vmem:[%s385 + $0x14] sm:$0xf]
        %v395 = vld [vmem:[%s385 + $0x18] sm:$0xf]
        %v396 = vld [vmem:[%s385 + $0x1c] sm:$0xf]
        %v397 = vld [vmem:[%s385 + $0x20] sm:$0xf]
        %v398 = vld [vmem:[%s385 + $0x24] sm:$0xf]
        %v399 = vld [vmem:[%s385 + $0x28] sm:$0xf]
        %v400 = vld [vmem:[%s385 + $0x2c] sm:$0xf]
        %v401 = vld [vmem:[%s385 + $0x30] sm:$0xf]
        %v402 = vld [vmem:[%s385 + $0x34] sm:$0xf]
        %v403 = vld [vmem:[%s385 + $0x38] sm:$0xf]
        %v404 = vld [vmem:[%s385 + $0x3c] sm:$0xf]
        %v405 = vld [vmem:[%s385 + $0x40] sm:$0xf]
        %v406 = vld [vmem:[%s385 + $0x44] sm:$0xf]
        %v407 = vld [vmem:[%s385 + $0x48] sm:$0xf]
        %v408 = vld [vmem:[%s385 + $0x4c] sm:$0xf]
        %v409 = vld [vmem:[%s385 + $0x50] sm:$0xf]
        %v410 = vld [vmem:[%s385 + $0x54] sm:$0xf]
        %v411 = vld [vmem:[%s385 + $0x58] sm:$0xf]
        %v412 = vld [vmem:[%s385 + $0x5c] sm:$0xf]
        %v413 = vld [vmem:[%s385 + $0x60] sm:$0xf]
        %v414 = vld [vmem:[%s385 + $0x64] sm:$0xf]
        %v415 = vld [vmem:[%s385 + $0x68] sm:$0xf]
        %v416 = vld [vmem:[%s385 + $0x6c] sm:$0xf]
        %v417 = vld [vmem:[%s385 + $0x70] sm:$0xf]
        %v418 = vld [vmem:[%s385 + $0x74] sm:$0xf]
        %v419 = vld [vmem:[%s385 + $0x78] sm:$0xf]
        %v420 = vld [vmem:[%s385 + $0x7c] sm:$0xf]
        %v421 = vld [vmem:[%s385 + $0x80] sm:$0xf]
        %v422 = vld [vmem:[%s385 + $0x84] sm:$0xf]
        %v423 = vld [vmem:[%s385 + $0x88] sm:$0xf]
        %v424 = vld [vmem:[%s385 + $0x8c] sm:$0xf]
        %v425 = vld [vmem:[%s385 + $0x90] sm:$0xf]
        %v426 = vld [vmem:[%s385 + $0x94] sm:$0xf]
        %v427 = vld [vmem:[%s385 + $0x98] sm:$0xf]
        %v428 = vld [vmem:[%s385 + $0x9c] sm:$0xf]
        %v429 = vld [vmem:[%s385 + $0xa0] sm:$0xf]
        %v430 = vld [vmem:[%s385 + $0xa4] sm:$0xf]
        %v431 = vld [vmem:[%s385 + $0xa8] sm:$0xf]
        %v432 = vld [vmem:[%s385 + $0xac] sm:$0xf]
        %v433 = vld [vmem:[%s385 + $0xb0] sm:$0xf]
        %v434 = vld [vmem:[%s385 + $0xb4] sm:$0xf]
        %v435 = vld [vmem:[%s385 + $0xb8] sm:$0xf]
        %v436 = vld [vmem:[%s385 + $0xbc] sm:$0xf]
        %v437 = vld [vmem:[%s385 + $0xc0] sm:$0xf]
        %v438 = vld [vmem:[%s385 + $0xc4] sm:$0xf]
        %v439 = vld [vmem:[%s385 + $0xc8] sm:$0xf]
        %v440 = vld [vmem:[%s385 + $0xcc] sm:$0xf]
        %v441 = vld [vmem:[%s385 + $0xd0] sm:$0xf]
        %v442 = vld [vmem:[%s385 + $0xd4] sm:$0xf]
        %v443 = vld [vmem:[%s385 + $0xd8] sm:$0xf]
        %v444 = vld [vmem:[%s385 + $0xdc] sm:$0xf]
        %v445 = vld [vmem:[%s385 + $0xe0] sm:$0xf]
        %v446 = vld [vmem:[%s385 + $0xe4] sm:$0xf]
        %v447 = vld [vmem:[%s385 + $0xe8] sm:$0xf]
        %v448 = vld [vmem:[%s385 + $0xec] sm:$0xf]
        %v449 = vld [vmem:[%s385 + $0xf0] sm:$0xf]
        %v450 = vld [vmem:[%s385 + $0xf4] sm:$0xf]
        %v451 = vld [vmem:[%s385 + $0xf8] sm:$0xf]
        %v452 = vld [vmem:[%s385 + $0xfc] sm:$0xf]
        %v453 = vld [vmem:[%s1] sm:$0xff]
        %v454 = vld [vmem:[%s1 + $0x8] sm:$0xff]
        %v455 = vld [vmem:[%s1 + $0x10] sm:$0xf]
        %v456 = vld [vmem:[%s1 + $0x14] sm:$0xff]
        %v457 = vld [vmem:[%s1 + $0x1c] sm:$0xff]
        %v458 = vld [vmem:[%s1 + $0x24] sm:$0xf]
        %v459 = vld [vmem:[%s1 + $0x28] sm:$0xff]
        %v460 = vld [vmem:[%s1 + $0x30] sm:$0xff]
        %v461 = vld [vmem:[%s1 + $0x38] sm:$0xf]
        %v462 = vld [vmem:[%s1 + $0x3c] sm:$0xff]
        %v463 = vld [vmem:[%s1 + $0x44] sm:$0xff]
        %v464 = vld [vmem:[%s1 + $0x4c] sm:$0xf]
        %v529 = vunpack.c.l.b16 %v389
        %v530 = vunpack.c.l.b16 %v390
        %v531 = vunpack.c.l.b16 %v391
        %v532 = vunpack.c.l.b16 %v392
        %v533 = vunpack.c.l.b16 %v393
        %v534 = vunpack.c.l.b16 %v394
        %v535 = vunpack.c.l.b16 %v395
        %v536 = vunpack.c.l.b16 %v396
        %v537 = vunpack.c.l.b16 %v397
        %v538 = vunpack.c.l.b16 %v398
        %v539 = vunpack.c.l.b16 %v399
        %v540 = vunpack.c.l.b16 %v400
        %v541 = vunpack.c.l.b16 %v401
        %v542 = vunpack.c.l.b16 %v402
        %v543 = vunpack.c.l.b16 %v403
        %v544 = vunpack.c.l.b16 %v404
        %v545 = vunpack.c.l.b16 %v405
        %v546 = vunpack.c.l.b16 %v406
        %v547 = vunpack.c.l.b16 %v407
        %v548 = vunpack.c.l.b16 %v408
        %v549 = vunpack.c.l.b16 %v409
        %v550 = vunpack.c.l.b16 %v410
        %v551 = vunpack.c.l.b16 %v411
        %v552 = vunpack.c.l.b16 %v412
        %v553 = vunpack.c.l.b16 %v413
        %v554 = vunpack.c.l.b16 %v414
        %v555 = vunpack.c.l.b16 %v415
        %v556 = vunpack.c.l.b16 %v416
        %v557 = vunpack.c.l.b16 %v417
        %v558 = vunpack.c.l.b16 %v418
        %v559 = vunpack.c.l.b16 %v419
        %v560 = vunpack.c.l.b16 %v420
        %v561 = vunpack.c.l.b16 %v421
        %v562 = vunpack.c.l.b16 %v422
        %v563 = vunpack.c.l.b16 %v423
        %v564 = vunpack.c.l.b16 %v424
        %v565 = vunpack.c.l.b16 %v425
        %v566 = vunpack.c.l.b16 %v426
        %v567 = vunpack.c.l.b16 %v427
        %v568 = vunpack.c.l.b16 %v428
        %v569 = vunpack.c.l.b16 %v429
        %v570 = vunpack.c.l.b16 %v430
        %v571 = vunpack.c.l.b16 %v431
        %v572 = vunpack.c.l.b16 %v432
        %v573 = vunpack.c.l.b16 %v433
        %v574 = vunpack.c.l.b16 %v434
        %v575 = vunpack.c.l.b16 %v435
        %v576 = vunpack.c.l.b16 %v436
        %v577 = vunpack.c.l.b16 %v437
        %v578 = vunpack.c.l.b16 %v438
        %v579 = vunpack.c.l.b16 %v439
        %v580 = vunpack.c.l.b16 %v440
        %v581 = vunpack.c.l.b16 %v441
        %v582 = vunpack.c.l.b16 %v442
        %v583 = vunpack.c.l.b16 %v443
        %v584 = vunpack.c.l.b16 %v444
        %v585 = vunpack.c.l.b16 %v445
        %v586 = vunpack.c.l.b16 %v446
        %v587 = vunpack.c.l.b16 %v447
        %v588 = vunpack.c.l.b16 %v448
        %v589 = vunpack.c.l.b16 %v449
        %v590 = vunpack.c.l.b16 %v450
        %v591 = vunpack.c.l.b16 %v451
        %v592 = vunpack.c.l.b16 %v452
        %v593 = vpack.c.b16 %v530, %v529
        %v594 = vpack.c.b16 %v532, %v531
        %v595 = vpack.c.b16 %v534, %v533
        %v596 = vpack.c.b16 %v536, %v535
        %v597 = vpack.c.b16 %v538, %v537
        %v598 = vpack.c.b16 %v540, %v539
        %v599 = vpack.c.b16 %v542, %v541
        %v600 = vpack.c.b16 %v544, %v543
        %v601 = vpack.c.b16 %v546, %v545
        %v602 = vpack.c.b16 %v548, %v547
        %v603 = vpack.c.b16 %v550, %v549
        %v604 = vpack.c.b16 %v552, %v551
        %v605 = vpack.c.b16 %v554, %v553
        %v606 = vpack.c.b16 %v556, %v555
        %v607 = vpack.c.b16 %v558, %v557
        %v608 = vpack.c.b16 %v560, %v559
        %v609 = vpack.c.b16 %v562, %v561
        %v610 = vpack.c.b16 %v564, %v563
        %v611 = vpack.c.b16 %v566, %v565
        %v612 = vpack.c.b16 %v568, %v567
        %v613 = vpack.c.b16 %v570, %v569
        %v614 = vpack.c.b16 %v572, %v571
        %v615 = vpack.c.b16 %v574, %v573
        %v616 = vpack.c.b16 %v576, %v575
        %v617 = vpack.c.b16 %v578, %v577
        %v618 = vpack.c.b16 %v580, %v579
        %v619 = vpack.c.b16 %v582, %v581
        %v620 = vpack.c.b16 %v584, %v583
        %v621 = vpack.c.b16 %v586, %v585
        %v622 = vpack.c.b16 %v588, %v587
        %v623 = vpack.c.b16 %v590, %v589
        %v624 = vpack.c.b16 %v592, %v591
        %v637 = vunpack.c.l.b16 %v453
        %v638 = vunpack.c.h.b16 %v453
        %v639 = vunpack.c.l.b16 %v454
        %v640 = vunpack.c.h.b16 %v454
        %v641 = vunpack.c.l.b16 %v455
        %v642 = vunpack.c.l.b16 %v456
        %v643 = vunpack.c.h.b16 %v456
        %v644 = vunpack.c.l.b16 %v457
        %v645 = vunpack.c.h.b16 %v457
        %v646 = vunpack.c.l.b16 %v458
        %v647 = vunpack.c.l.b16 %v459
        %v648 = vunpack.c.h.b16 %v459
        %v649 = vunpack.c.l.b16 %v460
        %v650 = vunpack.c.h.b16 %v460
        %v651 = vunpack.c.l.b16 %v461
        %v652 = vunpack.c.l.b16 %v462
        %v653 = vunpack.c.h.b16 %v462
        %v654 = vunpack.c.l.b16 %v463
        %v655 = vunpack.c.h.b16 %v463
        %v656 = vunpack.c.l.b16 %v464
        %v657 = vpack.c.b16 %v642, %v637
        %v658 = vpack.c.b16 %v643, %v638
        %v659 = vpack.c.b16 %v644, %v639
        %v660 = vpack.c.b16 %v645, %v640
        %v661 = vpack.c.b16 %v646, %v641
        %v662 = vpack.c.b16 %v652, %v647
        %v663 = vpack.c.b16 %v653, %v648
        %v664 = vpack.c.b16 %v654, %v649
        %v665 = vpack.c.b16 %v655, %v650
        %v666 = vpack.c.b16 %v656, %v651
        %vm677 = vcmask 261120
        %v679 = vsel %vm677, %v593, 0
        %v682 = vsel %vm677, %v594, 0
        %v685 = vsel %vm677, %v595, 0
        %v688 = vsel %vm677, %v596, 0
        %v691 = vsel %vm677, %v597, 0
        %v694 = vsel %vm677, %v598, 0
        %v697 = vsel %vm677, %v599, 0
        %v700 = vsel %vm677, %v600, 0
        %v703 = vsel %vm677, %v601, 0
        %v706 = vsel %vm677, %v602, 0
        %v709 = vsel %vm677, %v603, 0
        %v712 = vsel %vm677, %v604, 0
        %v715 = vsel %vm677, %v605, 0
        %v718 = vsel %vm677, %v606, 0
        %v721 = vsel %vm677, %v607, 0
        %v724 = vsel %vm677, %v608, 0
        %v727 = vsel %vm677, %v609, 0
        %v730 = vsel %vm677, %v610, 0
        %v733 = vsel %vm677, %v611, 0
        %v736 = vsel %vm677, %v612, 0
        %v739 = vsel %vm677, %v613, 0
        %v742 = vsel %vm677, %v614, 0
        %v745 = vsel %vm677, %v615, 0
        %v748 = vsel %vm677, %v616, 0
        %v751 = vsel %vm677, %v617, 0
        %v754 = vsel %vm677, %v618, 0
        %v757 = vsel %vm677, %v619, 0
        %v760 = vsel %vm677, %v620, 0
        %v763 = vsel %vm677, %v621, 0
        %v766 = vsel %vm677, %v622, 0
        %v769 = vsel %vm677, %v623, 0
        %v772 = vsel %vm677, %v624, 0
        %774 = vmatprep.subr.bf16.mxu0 %v658
        %775 = vmatpush1.bf16.msra.mxu0 %v657
        %776 = vmatprep.subr.bf16.mxu0 %v663
        %777 = vmatpush1.bf16.msra.mxu0 %v662
        %778 = vmatprep.subr.bf16.mxu0 0
        %779 = vmatpush1.bf16.msra.mxu0 0
        %780 = vmatprep.subr.bf16.mxu0 0
        %781 = vmatpush1.bf16.msra.mxu0 0
        %782 = vmatprep.subr.bf16.mxu0 0
        %783 = vmatpush1.bf16.msra.mxu0 0
        %784 = vmatprep.subr.bf16.mxu0 0
        %785 = vmatpush1.bf16.msra.mxu0 0
        %786 = vmatprep.subr.bf16.mxu0 0
        %787 = vmatpush1.bf16.msra.mxu0 0
        %788 = vmatprep.subr.bf16.mxu0 0
        %789 = vmatpush1.bf16.msra.mxu0 0
        %790 = vmatprep.subr.bf16.mxu0 0
        %791 = vmatpush1.bf16.msra.mxu0 0
        %792 = vmatprep.subr.bf16.mxu0 0
        %793 = vmatpush1.bf16.msra.mxu0 0
        %794 = vmatprep.subr.bf16.mxu0 0
        %795 = vmatpush1.bf16.msra.mxu0 0
        %796 = vmatprep.subr.bf16.mxu0 0
        %797 = vmatpush1.bf16.msra.mxu0 0
        %798 = vmatprep.subr.bf16.mxu0 0
        %799 = vmatpush1.bf16.msra.mxu0 0
        %800 = vmatprep.subr.bf16.mxu0 0
        %801 = vmatpush1.bf16.msra.mxu0 0
        %802 = vmatprep.subr.bf16.mxu0 0
        %803 = vmatpush1.bf16.msra.mxu0 0
        %804 = vmatprep.subr.bf16.mxu0 0
        %805 = vmatpush1.bf16.msra.mxu0 0
        %806 = vmatprep.mubr.bf16.mxu0 0
        %807 = vmatmul.mubr.bf16.gmra.mrb[0].mxu0 %v679
        %v808 = vpop.f32.mrb[0].mxu0
        %v809 = vadd.f32 0.0, %v808
        %v810 = vpop.f32.mrb[0].mxu0
        %v811 = vadd.f32 0.0, %v810
        %v812 = vpop.f32.mrb[0].mxu0
        %v813 = vadd.f32 0.0, %v812
        %v814 = vpop.f32.mrb[0].mxu0
        %v815 = vadd.f32 0.0, %v814
        %816 = vmatprep.mubr.bf16.mxu0 0
        %817 = vmatmul.mubr.bf16.gmra.mrb[0].mxu0 %v682
        %v818 = vpop.f32.mrb[0].mxu0
        %v819 = vadd.f32 0.0, %v818
        %v820 = vpop.f32.mrb[0].mxu0
        %v821 = vadd.f32 0.0, %v820
        %v822 = vpop.f32.mrb[0].mxu0
        %v823 = vadd.f32 0.0, %v822
        %v824 = vpop.f32.mrb[0].mxu0
        %v825 = vadd.f32 0.0, %v824
        %826 = vmatprep.mubr.bf16.mxu0 0
        %827 = vmatmul.mubr.bf16.gmra.mrb[0].mxu0 %v685
        %v828 = vpop.f32.mrb[0].mxu0
        %v829 = vadd.f32 0.0, %v828
        %v830 = vpop.f32.mrb[0].mxu0
        %v831 = vadd.f32 0.0, %v830
        %v832 = vpop.f32.mrb[0].mxu0
        %v833 = vadd.f32 0.0, %v832
        %v834 = vpop.f32.mrb[0].mxu0
        %v835 = vadd.f32 0.0, %v834
        %836 = vmatprep.mubr.bf16.mxu0 0
        %837 = vmatmul.mubr.bf16.gmra.mrb[0].mxu0 %v688
        %v838 = vpop.f32.mrb[0].mxu0
        %v839 = vadd.f32 0.0, %v838
        %v840 = vpop.f32.mrb[0].mxu0
        %v841 = vadd.f32 0.0, %v840
        %v842 = vpop.f32.mrb[0].mxu0
        %v843 = vadd.f32 0.0, %v842
        %v844 = vpop.f32.mrb[0].mxu0
        %v845 = vadd.f32 0.0, %v844
        %846 = vmatprep.mubr.bf16.mxu0 0
        %847 = vmatmul.mubr.bf16.gmra.mrb[0].mxu0 %v691
        %v848 = vpop.f32.mrb[0].mxu0
        %v849 = vadd.f32 0.0, %v848
        %v850 = vpop.f32.mrb[0].mxu0
        %v851 = vadd.f32 0.0, %v850
        %v852 = vpop.f32.mrb[0].mxu0
        %v853 = vadd.f32 0.0, %v852
        %v854 = vpop.f32.mrb[0].mxu0
        %v855 = vadd.f32 0.0, %v854
        %856 = vmatprep.mubr.bf16.mxu0 0
        %857 = vmatmul.mubr.bf16.gmra.mrb[0].mxu0 %v694
        %v858 = vpop.f32.mrb[0].mxu0
        %v859 = vadd.f32 0.0, %v858
        %v860 = vpop.f32.mrb[0].mxu0
        %v861 = vadd.f32 0.0, %v860
        %v862 = vpop.f32.mrb[0].mxu0
        %v863 = vadd.f32 0.0, %v862
        %v864 = vpop.f32.mrb[0].mxu0
        %v865 = vadd.f32 0.0, %v864
        %866 = vmatprep.mubr.bf16.mxu0 0
        %867 = vmatmul.mubr.bf16.gmra.mrb[0].mxu0 %v697
        %v868 = vpop.f32.mrb[0].mxu0
        %v869 = vadd.f32 0.0, %v868
        %v870 = vpop.f32.mrb[0].mxu0
        %v871 = vadd.f32 0.0, %v870
        %v872 = vpop.f32.mrb[0].mxu0
        %v873 = vadd.f32 0.0, %v872
        %v874 = vpop.f32.mrb[0].mxu0
        %v875 = vadd.f32 0.0, %v874
        %876 = vmatprep.mubr.bf16.mxu0 0
        %877 = vmatmul.mubr.bf16.gmra.mrb[0].mxu0 %v700
        %v878 = vpop.f32.mrb[0].mxu0
        %v879 = vadd.f32 0.0, %v878
        %v880 = vpop.f32.mrb[0].mxu0
        %v881 = vadd.f32 0.0, %v880
        %v882 = vpop.f32.mrb[0].mxu0
        %v883 = vadd.f32 0.0, %v882
        %v884 = vpop.f32.mrb[0].mxu0
        %v885 = vadd.f32 0.0, %v884
        %886 = vmatprep.mubr.bf16.mxu0 0
        %887 = vmatmul.mubr.bf16.gmra.mrb[0].mxu0 %v703
        %v888 = vpop.f32.mrb[0].mxu0
        %v889 = vadd.f32 0.0, %v888
        %v890 = vpop.f32.mrb[0].mxu0
        %v891 = vadd.f32 0.0, %v890
        %v892 = vpop.f32.mrb[0].mxu0
        %v893 = vadd.f32 0.0, %v892
        %v894 = vpop.f32.mrb[0].mxu0
        %v895 = vadd.f32 0.0, %v894
        %896 = vmatprep.mubr.bf16.mxu0 0
        %897 = vmatmul.mubr.bf16.gmra.mrb[0].mxu0 %v706
        %v898 = vpop.f32.mrb[0].mxu0
        %v899 = vadd.f32 0.0, %v898
        %v900 = vpop.f32.mrb[0].mxu0
        %v901 = vadd.f32 0.0, %v900
        %v902 = vpop.f32.mrb[0].mxu0
        %v903 = vadd.f32 0.0, %v902
        %v904 = vpop.f32.mrb[0].mxu0
        %v905 = vadd.f32 0.0, %v904
        %906 = vmatprep.mubr.bf16.mxu0 0
        %907 = vmatmul.mubr.bf16.gmra.mrb[0].mxu0 %v709
        %v908 = vpop.f32.mrb[0].mxu0
        %v909 = vadd.f32 0.0, %v908
        %v910 = vpop.f32.mrb[0].mxu0
        %v911 = vadd.f32 0.0, %v910
        %v912 = vpop.f32.mrb[0].mxu0
        %v913 = vadd.f32 0.0, %v912
        %v914 = vpop.f32.mrb[0].mxu0
        %v915 = vadd.f32 0.0, %v914
        %916 = vmatprep.mubr.bf16.mxu0 0
        %917 = vmatmul.mubr.bf16.gmra.mrb[0].mxu0 %v712
        %v918 = vpop.f32.mrb[0].mxu0
        %v919 = vadd.f32 0.0, %v918
        %v920 = vpop.f32.mrb[0].mxu0
        %v921 = vadd.f32 0.0, %v920
        %v922 = vpop.f32.mrb[0].mxu0
        %v923 = vadd.f32 0.0, %v922
        %v924 = vpop.f32.mrb[0].mxu0
        %v925 = vadd.f32 0.0, %v924
        %926 = vmatprep.mubr.bf16.mxu0 0
        %927 = vmatmul.mubr.bf16.gmra.mrb[0].mxu0 %v715
        %v928 = vpop.f32.mrb[0].mxu0
        %v929 = vadd.f32 0.0, %v928
        %v930 = vpop.f32.mrb[0].mxu0
        %v931 = vadd.f32 0.0, %v930
        %v932 = vpop.f32.mrb[0].mxu0
        %v933 = vadd.f32 0.0, %v932
        %v934 = vpop.f32.mrb[0].mxu0
        %v935 = vadd.f32 0.0, %v934
        %936 = vmatprep.mubr.bf16.mxu0 0
        %937 = vmatmul.mubr.bf16.gmra.mrb[0].mxu0 %v718
        %v938 = vpop.f32.mrb[0].mxu0
        %v939 = vadd.f32 0.0, %v938
        %v940 = vpop.f32.mrb[0].mxu0
        %v941 = vadd.f32 0.0, %v940
        %v942 = vpop.f32.mrb[0].mxu0
        %v943 = vadd.f32 0.0, %v942
        %v944 = vpop.f32.mrb[0].mxu0
        %v945 = vadd.f32 0.0, %v944
        %946 = vmatprep.mubr.bf16.mxu0 0
        %947 = vmatmul.mubr.bf16.gmra.mrb[0].mxu0 %v721
        %v948 = vpop.f32.mrb[0].mxu0
        %v949 = vadd.f32 0.0, %v948
        %v950 = vpop.f32.mrb[0].mxu0
        %v951 = vadd.f32 0.0, %v950
        %v952 = vpop.f32.mrb[0].mxu0
        %v953 = vadd.f32 0.0, %v952
        %v954 = vpop.f32.mrb[0].mxu0
        %v955 = vadd.f32 0.0, %v954
        %956 = vmatprep.mubr.bf16.mxu0 0
        %957 = vmatmul.mubr.bf16.gmra.mrb[0].mxu0 %v724
        %v958 = vpop.f32.mrb[0].mxu0
        %v959 = vadd.f32 0.0, %v958
        %v960 = vpop.f32.mrb[0].mxu0
        %v961 = vadd.f32 0.0, %v960
        %v962 = vpop.f32.mrb[0].mxu0
        %v963 = vadd.f32 0.0, %v962
        %v964 = vpop.f32.mrb[0].mxu0
        %v965 = vadd.f32 0.0, %v964
        %966 = vmatprep.mubr.bf16.mxu0 0
        %967 = vmatmul.mubr.bf16.gmra.mrb[0].mxu0 %v727
        %v968 = vpop.f32.mrb[0].mxu0
        %v969 = vadd.f32 0.0, %v968
        %v970 = vpop.f32.mrb[0].mxu0
        %v971 = vadd.f32 0.0, %v970
        %v972 = vpop.f32.mrb[0].mxu0
        %v973 = vadd.f32 0.0, %v972
        %v974 = vpop.f32.mrb[0].mxu0
        %v975 = vadd.f32 0.0, %v974
        %976 = vmatprep.mubr.bf16.mxu0 0
        %977 = vmatmul.mubr.bf16.gmra.mrb[0].mxu0 %v730
        %v978 = vpop.f32.mrb[0].mxu0
        %v979 = vadd.f32 0.0, %v978
        %v980 = vpop.f32.mrb[0].mxu0
        %v981 = vadd.f32 0.0, %v980
        %v982 = vpop.f32.mrb[0].mxu0
        %v983 = vadd.f32 0.0, %v982
        %v984 = vpop.f32.mrb[0].mxu0
        %v985 = vadd.f32 0.0, %v984
        %986 = vmatprep.mubr.bf16.mxu0 0
        %987 = vmatmul.mubr.bf16.gmra.mrb[0].mxu0 %v733
        %v988 = vpop.f32.mrb[0].mxu0
        %v989 = vadd.f32 0.0, %v988
        %v990 = vpop.f32.mrb[0].mxu0
        %v991 = vadd.f32 0.0, %v990
        %v992 = vpop.f32.mrb[0].mxu0
        %v993 = vadd.f32 0.0, %v992
        %v994 = vpop.f32.mrb[0].mxu0
        %v995 = vadd.f32 0.0, %v994
        %996 = vmatprep.mubr.bf16.mxu0 0
        %997 = vmatmul.mubr.bf16.gmra.mrb[0].mxu0 %v736
        %v998 = vpop.f32.mrb[0].mxu0
        %v999 = vadd.f32 0.0, %v998
        %v1000 = vpop.f32.mrb[0].mxu0
        %v1001 = vadd.f32 0.0, %v1000
        %v1002 = vpop.f32.mrb[0].mxu0
        %v1003 = vadd.f32 0.0, %v1002
        %v1004 = vpop.f32.mrb[0].mxu0
        %v1005 = vadd.f32 0.0, %v1004
        %1006 = vmatprep.mubr.bf16.mxu0 0
        %1007 = vmatmul.mubr.bf16.gmra.mrb[0].mxu0 %v739
        %v1008 = vpop.f32.mrb[0].mxu0
        %v1009 = vadd.f32 0.0, %v1008
        %v1010 = vpop.f32.mrb[0].mxu0
        %v1011 = vadd.f32 0.0, %v1010
        %v1012 = vpop.f32.mrb[0].mxu0
        %v1013 = vadd.f32 0.0, %v1012
        %v1014 = vpop.f32.mrb[0].mxu0
        %v1015 = vadd.f32 0.0, %v1014
        %1016 = vmatprep.mubr.bf16.mxu0 0
        %1017 = vmatmul.mubr.bf16.gmra.mrb[0].mxu0 %v742
        %v1018 = vpop.f32.mrb[0].mxu0
        %v1019 = vadd.f32 0.0, %v1018
        %v1020 = vpop.f32.mrb[0].mxu0
        %v1021 = vadd.f32 0.0, %v1020
        %v1022 = vpop.f32.mrb[0].mxu0
        %v1023 = vadd.f32 0.0, %v1022
        %v1024 = vpop.f32.mrb[0].mxu0
        %v1025 = vadd.f32 0.0, %v1024
        %1026 = vmatprep.mubr.bf16.mxu0 0
        %1027 = vmatmul.mubr.bf16.gmra.mrb[0].mxu0 %v745
        %v1028 = vpop.f32.mrb[0].mxu0
        %v1029 = vadd.f32 0.0, %v1028
        %v1030 = vpop.f32.mrb[0].mxu0
        %v1031 = vadd.f32 0.0, %v1030
        %v1032 = vpop.f32.mrb[0].mxu0
        %v1033 = vadd.f32 0.0, %v1032
        %v1034 = vpop.f32.mrb[0].mxu0
        %v1035 = vadd.f32 0.0, %v1034
        %1036 = vmatprep.mubr.bf16.mxu0 0
        %1037 = vmatmul.mubr.bf16.gmra.mrb[0].mxu0 %v748
        %v1038 = vpop.f32.mrb[0].mxu0
        %v1039 = vadd.f32 0.0, %v1038
        %v1040 = vpop.f32.mrb[0].mxu0
        %v1041 = vadd.f32 0.0, %v1040
        %v1042 = vpop.f32.mrb[0].mxu0
        %v1043 = vadd.f32 0.0, %v1042
        %v1044 = vpop.f32.mrb[0].mxu0
        %v1045 = vadd.f32 0.0, %v1044
        %1046 = vmatprep.mubr.bf16.mxu0 0
        %1047 = vmatmul.mubr.bf16.gmra.mrb[0].mxu0 %v751
        %v1048 = vpop.f32.mrb[0].mxu0
        %v1049 = vadd.f32 0.0, %v1048
        %v1050 = vpop.f32.mrb[0].mxu0
        %v1051 = vadd.f32 0.0, %v1050
        %v1052 = vpop.f32.mrb[0].mxu0
        %v1053 = vadd.f32 0.0, %v1052
        %v1054 = vpop.f32.mrb[0].mxu0
        %v1055 = vadd.f32 0.0, %v1054
        %1056 = vmatprep.mubr.bf16.mxu0 0
        %1057 = vmatmul.mubr.bf16.gmra.mrb[0].mxu0 %v754
        %v1058 = vpop.f32.mrb[0].mxu0
        %v1059 = vadd.f32 0.0, %v1058
        %v1060 = vpop.f32.mrb[0].mxu0
        %v1061 = vadd.f32 0.0, %v1060
        %v1062 = vpop.f32.mrb[0].mxu0
        %v1063 = vadd.f32 0.0, %v1062
        %v1064 = vpop.f32.mrb[0].mxu0
        %v1065 = vadd.f32 0.0, %v1064
        %1066 = vmatprep.mubr.bf16.mxu0 0
        %1067 = vmatmul.mubr.bf16.gmra.mrb[0].mxu0 %v757
        %v1068 = vpop.f32.mrb[0].mxu0
        %v1069 = vadd.f32 0.0, %v1068
        %v1070 = vpop.f32.mrb[0].mxu0
        %v1071 = vadd.f32 0.0, %v1070
        %v1072 = vpop.f32.mrb[0].mxu0
        %v1073 = vadd.f32 0.0, %v1072
        %v1074 = vpop.f32.mrb[0].mxu0
        %v1075 = vadd.f32 0.0, %v1074
        %1076 = vmatprep.mubr.bf16.mxu0 0
        %1077 = vmatmul.mubr.bf16.gmra.mrb[0].mxu0 %v760
        %v1078 = vpop.f32.mrb[0].mxu0
        %v1079 = vadd.f32 0.0, %v1078
        %v1080 = vpop.f32.mrb[0].mxu0
        %v1081 = vadd.f32 0.0, %v1080
        %v1082 = vpop.f32.mrb[0].mxu0
        %v1083 = vadd.f32 0.0, %v1082
        %v1084 = vpop.f32.mrb[0].mxu0
        %v1085 = vadd.f32 0.0, %v1084
        %1086 = vmatprep.mubr.bf16.mxu0 0
        %1087 = vmatmul.mubr.bf16.gmra.mrb[0].mxu0 %v763
        %v1088 = vpop.f32.mrb[0].mxu0
        %v1089 = vadd.f32 0.0, %v1088
        %v1090 = vpop.f32.mrb[0].mxu0
        %v1091 = vadd.f32 0.0, %v1090
        %v1092 = vpop.f32.mrb[0].mxu0
        %v1093 = vadd.f32 0.0, %v1092
        %v1094 = vpop.f32.mrb[0].mxu0
        %v1095 = vadd.f32 0.0, %v1094
        %1096 = vmatprep.mubr.bf16.mxu0 0
        %1097 = vmatmul.mubr.bf16.gmra.mrb[0].mxu0 %v766
        %v1098 = vpop.f32.mrb[0].mxu0
        %v1099 = vadd.f32 0.0, %v1098
        %v1100 = vpop.f32.mrb[0].mxu0
        %v1101 = vadd.f32 0.0, %v1100
        %v1102 = vpop.f32.mrb[0].mxu0
        %v1103 = vadd.f32 0.0, %v1102
        %v1104 = vpop.f32.mrb[0].mxu0
        %v1105 = vadd.f32 0.0, %v1104
        %1106 = vmatprep.mubr.bf16.mxu0 0
        %1107 = vmatmul.mubr.bf16.gmra.mrb[0].mxu0 %v769
        %v1108 = vpop.f32.mrb[0].mxu0
        %v1109 = vadd.f32 0.0, %v1108
        %v1110 = vpop.f32.mrb[0].mxu0
        %v1111 = vadd.f32 0.0, %v1110
        %v1112 = vpop.f32.mrb[0].mxu0
        %v1113 = vadd.f32 0.0, %v1112
        %v1114 = vpop.f32.mrb[0].mxu0
        %v1115 = vadd.f32 0.0, %v1114
        %1116 = vmatprep.mubr.bf16.mxu0 0
        %1117 = vmatmul.mubr.bf16.gmra.mrb[0].mxu0 %v772
        %v1118 = vpop.f32.mrb[0].mxu0
        %v1119 = vadd.f32 0.0, %v1118
        %v1120 = vpop.f32.mrb[0].mxu0
        %v1121 = vadd.f32 0.0, %v1120
        %v1122 = vpop.f32.mrb[0].mxu0
        %v1123 = vadd.f32 0.0, %v1122
        %v1124 = vpop.f32.mrb[0].mxu0
        %v1125 = vadd.f32 0.0, %v1124
        %1126 = vdwg.mxu0
        %1127 = vmatprep.subr.bf16.mxu0 %v660
        %1128 = vmatpush1.bf16.msra.mxu0 %v659
        %1129 = vmatprep.subr.bf16.mxu0 %v665
        %1130 = vmatpush1.bf16.msra.mxu0 %v664
        %1131 = vmatprep.subr.bf16.mxu0 0
        %1132 = vmatpush1.bf16.msra.mxu0 0
        %1133 = vmatprep.subr.bf16.mxu0 0
        %1134 = vmatpush1.bf16.msra.mxu0 0
        %1135 = vmatprep.subr.bf16.mxu0 0
        %1136 = vmatpush1.bf16.msra.mxu0 0
        %1137 = vmatprep.subr.bf16.mxu0 0
        %1138 = vmatpush1.bf16.msra.mxu0 0
        %1139 = vmatprep.subr.bf16.mxu0 0
        %1140 = vmatpush1.bf16.msra.mxu0 0
        %1141 = vmatprep.subr.bf16.mxu0 0
        %1142 = vmatpush1.bf16.msra.mxu0 0
        %1143 = vmatprep.subr.bf16.mxu0 0
        %1144 = vmatpush1.bf16.msra.mxu0 0
        %1145 = vmatprep.subr.bf16.mxu0 0
        %1146 = vmatpush1.bf16.msra.mxu0 0
        %1147 = vmatprep.subr.bf16.mxu0 0
        %1148 = vmatpush1.bf16.msra.mxu0 0
        %1149 = vmatprep.subr.bf16.mxu0 0
        %1150 = vmatpush1.bf16.msra.mxu0 0
        %1151 = vmatprep.subr.bf16.mxu0 0
        %1152 = vmatpush1.bf16.msra.mxu0 0
        %1153 = vmatprep.subr.bf16.mxu0 0
        %1154 = vmatpush1.bf16.msra.mxu0 0
        %1155 = vmatprep.subr.bf16.mxu0 0
        %1156 = vmatpush1.bf16.msra.mxu0 0
        %1157 = vmatprep.subr.bf16.mxu0 0
        %1158 = vmatpush1.bf16.msra.mxu0 0
        %1159 = vmatprep.mubr.bf16.mxu0 0
        %1160 = vmatmul.mubr.bf16.gmra.mrb[0].mxu0 %v679
        %v1161 = vpop.f32.mrb[0].mxu0
        %v1162 = vadd.f32 0.0, %v1161
        %v1163 = vpop.f32.mrb[0].mxu0
        %v1164 = vadd.f32 0.0, %v1163
        %v1165 = vpop.f32.mrb[0].mxu0
        %v1166 = vadd.f32 0.0, %v1165
        %v1167 = vpop.f32.mrb[0].mxu0
        %v1168 = vadd.f32 0.0, %v1167
        %1169 = vmatprep.mubr.bf16.mxu0 0
        %1170 = vmatmul.mubr.bf16.gmra.mrb[0].mxu0 %v682
        %v1171 = vpop.f32.mrb[0].mxu0
        %v1172 = vadd.f32 0.0, %v1171
        %v1173 = vpop.f32.mrb[0].mxu0
        %v1174 = vadd.f32 0.0, %v1173
        %v1175 = vpop.f32.mrb[0].mxu0
        %v1176 = vadd.f32 0.0, %v1175
        %v1177 = vpop.f32.mrb[0].mxu0
        %v1178 = vadd.f32 0.0, %v1177
        %1179 = vmatprep.mubr.bf16.mxu0 0
        %1180 = vmatmul.mubr.bf16.gmra.mrb[0].mxu0 %v685
        %v1181 = vpop.f32.mrb[0].mxu0
        %v1182 = vadd.f32 0.0, %v1181
        %v1183 = vpop.f32.mrb[0].mxu0
        %v1184 = vadd.f32 0.0, %v1183
        %v1185 = vpop.f32.mrb[0].mxu0
        %v1186 = vadd.f32 0.0, %v1185
        %v1187 = vpop.f32.mrb[0].mxu0
        %v1188 = vadd.f32 0.0, %v1187
        %1189 = vmatprep.mubr.bf16.mxu0 0
        %1190 = vmatmul.mubr.bf16.gmra.mrb[0].mxu0 %v688
        %v1191 = vpop.f32.mrb[0].mxu0
        %v1192 = vadd.f32 0.0, %v1191
        %v1193 = vpop.f32.mrb[0].mxu0
        %v1194 = vadd.f32 0.0, %v1193
        %v1195 = vpop.f32.mrb[0].mxu0
        %v1196 = vadd.f32 0.0, %v1195
        %v1197 = vpop.f32.mrb[0].mxu0
        %v1198 = vadd.f32 0.0, %v1197
        %1199 = vmatprep.mubr.bf16.mxu0 0
        %1200 = vmatmul.mubr.bf16.gmra.mrb[0].mxu0 %v691
        %v1201 = vpop.f32.mrb[0].mxu0
        %v1202 = vadd.f32 0.0, %v1201
        %v1203 = vpop.f32.mrb[0].mxu0
        %v1204 = vadd.f32 0.0, %v1203
        %v1205 = vpop.f32.mrb[0].mxu0
        %v1206 = vadd.f32 0.0, %v1205
        %v1207 = vpop.f32.mrb[0].mxu0
        %v1208 = vadd.f32 0.0, %v1207
        %1209 = vmatprep.mubr.bf16.mxu0 0
        %1210 = vmatmul.mubr.bf16.gmra.mrb[0].mxu0 %v694
        %v1211 = vpop.f32.mrb[0].mxu0
        %v1212 = vadd.f32 0.0, %v1211
        %v1213 = vpop.f32.mrb[0].mxu0
        %v1214 = vadd.f32 0.0, %v1213
        %v1215 = vpop.f32.mrb[0].mxu0
        %v1216 = vadd.f32 0.0, %v1215
        %v1217 = vpop.f32.mrb[0].mxu0
        %v1218 = vadd.f32 0.0, %v1217
        %1219 = vmatprep.mubr.bf16.mxu0 0
        %1220 = vmatmul.mubr.bf16.gmra.mrb[0].mxu0 %v697
        %v1221 = vpop.f32.mrb[0].mxu0
        %v1222 = vadd.f32 0.0, %v1221
        %v1223 = vpop.f32.mrb[0].mxu0
        %v1224 = vadd.f32 0.0, %v1223
        %v1225 = vpop.f32.mrb[0].mxu0
        %v1226 = vadd.f32 0.0, %v1225
        %v1227 = vpop.f32.mrb[0].mxu0
        %v1228 = vadd.f32 0.0, %v1227
        %1229 = vmatprep.mubr.bf16.mxu0 0
        %1230 = vmatmul.mubr.bf16.gmra.mrb[0].mxu0 %v700
        %v1231 = vpop.f32.mrb[0].mxu0
        %v1232 = vadd.f32 0.0, %v1231
        %v1233 = vpop.f32.mrb[0].mxu0
        %v1234 = vadd.f32 0.0, %v1233
        %v1235 = vpop.f32.mrb[0].mxu0
        %v1236 = vadd.f32 0.0, %v1235
        %v1237 = vpop.f32.mrb[0].mxu0
        %v1238 = vadd.f32 0.0, %v1237
        %1239 = vmatprep.mubr.bf16.mxu0 0
        %1240 = vmatmul.mubr.bf16.gmra.mrb[0].mxu0 %v703
        %v1241 = vpop.f32.mrb[0].mxu0
        %v1242 = vadd.f32 0.0, %v1241
        %v1243 = vpop.f32.mrb[0].mxu0
        %v1244 = vadd.f32 0.0, %v1243
        %v1245 = vpop.f32.mrb[0].mxu0
        %v1246 = vadd.f32 0.0, %v1245
        %v1247 = vpop.f32.mrb[0].mxu0
        %v1248 = vadd.f32 0.0, %v1247
        %1249 = vmatprep.mubr.bf16.mxu0 0
        %1250 = vmatmul.mubr.bf16.gmra.mrb[0].mxu0 %v706
        %v1251 = vpop.f32.mrb[0].mxu0
        %v1252 = vadd.f32 0.0, %v1251
        %v1253 = vpop.f32.mrb[0].mxu0
        %v1254 = vadd.f32 0.0, %v1253
        %v1255 = vpop.f32.mrb[0].mxu0
        %v1256 = vadd.f32 0.0, %v1255
        %v1257 = vpop.f32.mrb[0].mxu0
        %v1258 = vadd.f32 0.0, %v1257
        %1259 = vmatprep.mubr.bf16.mxu0 0
        %1260 = vmatmul.mubr.bf16.gmra.mrb[0].mxu0 %v709
        %v1261 = vpop.f32.mrb[0].mxu0
        %v1262 = vadd.f32 0.0, %v1261
        %v1263 = vpop.f32.mrb[0].mxu0
        %v1264 = vadd.f32 0.0, %v1263
        %v1265 = vpop.f32.mrb[0].mxu0
        %v1266 = vadd.f32 0.0, %v1265
        %v1267 = vpop.f32.mrb[0].mxu0
        %v1268 = vadd.f32 0.0, %v1267
        %1269 = vmatprep.mubr.bf16.mxu0 0
        %1270 = vmatmul.mubr.bf16.gmra.mrb[0].mxu0 %v712
        %v1271 = vpop.f32.mrb[0].mxu0
        %v1272 = vadd.f32 0.0, %v1271
        %v1273 = vpop.f32.mrb[0].mxu0
        %v1274 = vadd.f32 0.0, %v1273
        %v1275 = vpop.f32.mrb[0].mxu0
        %v1276 = vadd.f32 0.0, %v1275
        %v1277 = vpop.f32.mrb[0].mxu0
        %v1278 = vadd.f32 0.0, %v1277
        %1279 = vmatprep.mubr.bf16.mxu0 0
        %1280 = vmatmul.mubr.bf16.gmra.mrb[0].mxu0 %v715
        %v1281 = vpop.f32.mrb[0].mxu0
        %v1282 = vadd.f32 0.0, %v1281
        %v1283 = vpop.f32.mrb[0].mxu0
        %v1284 = vadd.f32 0.0, %v1283
        %v1285 = vpop.f32.mrb[0].mxu0
        %v1286 = vadd.f32 0.0, %v1285
        %v1287 = vpop.f32.mrb[0].mxu0
        %v1288 = vadd.f32 0.0, %v1287
        %1289 = vmatprep.mubr.bf16.mxu0 0
        %1290 = vmatmul.mubr.bf16.gmra.mrb[0].mxu0 %v718
        %v1291 = vpop.f32.mrb[0].mxu0
        %v1292 = vadd.f32 0.0, %v1291
        %v1293 = vpop.f32.mrb[0].mxu0
        %v1294 = vadd.f32 0.0, %v1293
        %v1295 = vpop.f32.mrb[0].mxu0
        %v1296 = vadd.f32 0.0, %v1295
        %v1297 = vpop.f32.mrb[0].mxu0
        %v1298 = vadd.f32 0.0, %v1297
        %1299 = vmatprep.mubr.bf16.mxu0 0
        %1300 = vmatmul.mubr.bf16.gmra.mrb[0].mxu0 %v721
        %v1301 = vpop.f32.mrb[0].mxu0
        %v1302 = vadd.f32 0.0, %v1301
        %v1303 = vpop.f32.mrb[0].mxu0
        %v1304 = vadd.f32 0.0, %v1303
        %v1305 = vpop.f32.mrb[0].mxu0
        %v1306 = vadd.f32 0.0, %v1305
        %v1307 = vpop.f32.mrb[0].mxu0
        %v1308 = vadd.f32 0.0, %v1307
        %1309 = vmatprep.mubr.bf16.mxu0 0
        %1310 = vmatmul.mubr.bf16.gmra.mrb[0].mxu0 %v724
        %v1311 = vpop.f32.mrb[0].mxu0
        %v1312 = vadd.f32 0.0, %v1311
        %v1313 = vpop.f32.mrb[0].mxu0
        %v1314 = vadd.f32 0.0, %v1313
        %v1315 = vpop.f32.mrb[0].mxu0
        %v1316 = vadd.f32 0.0, %v1315
        %v1317 = vpop.f32.mrb[0].mxu0
        %v1318 = vadd.f32 0.0, %v1317
        %1319 = vmatprep.mubr.bf16.mxu0 0
        %1320 = vmatmul.mubr.bf16.gmra.mrb[0].mxu0 %v727
        %v1321 = vpop.f32.mrb[0].mxu0
        %v1322 = vadd.f32 0.0, %v1321
        %v1323 = vpop.f32.mrb[0].mxu0
        %v1324 = vadd.f32 0.0, %v1323
        %v1325 = vpop.f32.mrb[0].mxu0
        %v1326 = vadd.f32 0.0, %v1325
        %v1327 = vpop.f32.mrb[0].mxu0
        %v1328 = vadd.f32 0.0, %v1327
        %1329 = vmatprep.mubr.bf16.mxu0 0
        %1330 = vmatmul.mubr.bf16.gmra.mrb[0].mxu0 %v730
        %v1331 = vpop.f32.mrb[0].mxu0
        %v1332 = vadd.f32 0.0, %v1331
        %v1333 = vpop.f32.mrb[0].mxu0
        %v1334 = vadd.f32 0.0, %v1333
        %v1335 = vpop.f32.mrb[0].mxu0
        %v1336 = vadd.f32 0.0, %v1335
        %v1337 = vpop.f32.mrb[0].mxu0
        %v1338 = vadd.f32 0.0, %v1337
        %1339 = vmatprep.mubr.bf16.mxu0 0
        %1340 = vmatmul.mubr.bf16.gmra.mrb[0].mxu0 %v733
        %v1341 = vpop.f32.mrb[0].mxu0
        %v1342 = vadd.f32 0.0, %v1341
        %v1343 = vpop.f32.mrb[0].mxu0
        %v1344 = vadd.f32 0.0, %v1343
        %v1345 = vpop.f32.mrb[0].mxu0
        %v1346 = vadd.f32 0.0, %v1345
        %v1347 = vpop.f32.mrb[0].mxu0
        %v1348 = vadd.f32 0.0, %v1347
        %1349 = vmatprep.mubr.bf16.mxu0 0
        %1350 = vmatmul.mubr.bf16.gmra.mrb[0].mxu0 %v736
        %v1351 = vpop.f32.mrb[0].mxu0
        %v1352 = vadd.f32 0.0, %v1351
        %v1353 = vpop.f32.mrb[0].mxu0
        %v1354 = vadd.f32 0.0, %v1353
        %v1355 = vpop.f32.mrb[0].mxu0
        %v1356 = vadd.f32 0.0, %v1355
        %v1357 = vpop.f32.mrb[0].mxu0
        %v1358 = vadd.f32 0.0, %v1357
        %1359 = vmatprep.mubr.bf16.mxu0 0
        %1360 = vmatmul.mubr.bf16.gmra.mrb[0].mxu0 %v739
        %v1361 = vpop.f32.mrb[0].mxu0
        %v1362 = vadd.f32 0.0, %v1361
        %v1363 = vpop.f32.mrb[0].mxu0
        %v1364 = vadd.f32 0.0, %v1363
        %v1365 = vpop.f32.mrb[0].mxu0
        %v1366 = vadd.f32 0.0, %v1365
        %v1367 = vpop.f32.mrb[0].mxu0
        %v1368 = vadd.f32 0.0, %v1367
        %1369 = vmatprep.mubr.bf16.mxu0 0
        %1370 = vmatmul.mubr.bf16.gmra.mrb[0].mxu0 %v742
        %v1371 = vpop.f32.mrb[0].mxu0
        %v1372 = vadd.f32 0.0, %v1371
        %v1373 = vpop.f32.mrb[0].mxu0
        %v1374 = vadd.f32 0.0, %v1373
        %v1375 = vpop.f32.mrb[0].mxu0
        %v1376 = vadd.f32 0.0, %v1375
        %v1377 = vpop.f32.mrb[0].mxu0
        %v1378 = vadd.f32 0.0, %v1377
        %1379 = vmatprep.mubr.bf16.mxu0 0
        %1380 = vmatmul.mubr.bf16.gmra.mrb[0].mxu0 %v745
        %v1381 = vpop.f32.mrb[0].mxu0
        %v1382 = vadd.f32 0.0, %v1381
        %v1383 = vpop.f32.mrb[0].mxu0
        %v1384 = vadd.f32 0.0, %v1383
        %v1385 = vpop.f32.mrb[0].mxu0
        %v1386 = vadd.f32 0.0, %v1385
        %v1387 = vpop.f32.mrb[0].mxu0
        %v1388 = vadd.f32 0.0, %v1387
        %1389 = vmatprep.mubr.bf16.mxu0 0
        %1390 = vmatmul.mubr.bf16.gmra.mrb[0].mxu0 %v748
        %v1391 = vpop.f32.mrb[0].mxu0
        %v1392 = vadd.f32 0.0, %v1391
        %v1393 = vpop.f32.mrb[0].mxu0
        %v1394 = vadd.f32 0.0, %v1393
        %v1395 = vpop.f32.mrb[0].mxu0
        %v1396 = vadd.f32 0.0, %v1395
        %v1397 = vpop.f32.mrb[0].mxu0
        %v1398 = vadd.f32 0.0, %v1397
        %1399 = vmatprep.mubr.bf16.mxu0 0
        %1400 = vmatmul.mubr.bf16.gmra.mrb[0].mxu0 %v751
        %v1401 = vpop.f32.mrb[0].mxu0
        %v1402 = vadd.f32 0.0, %v1401
        %v1403 = vpop.f32.mrb[0].mxu0
        %v1404 = vadd.f32 0.0, %v1403
        %v1405 = vpop.f32.mrb[0].mxu0
        %v1406 = vadd.f32 0.0, %v1405
        %v1407 = vpop.f32.mrb[0].mxu0
        %v1408 = vadd.f32 0.0, %v1407
        %1409 = vmatprep.mubr.bf16.mxu0 0
        %1410 = vmatmul.mubr.bf16.gmra.mrb[0].mxu0 %v754
        %v1411 = vpop.f32.mrb[0].mxu0
        %v1412 = vadd.f32 0.0, %v1411
        %v1413 = vpop.f32.mrb[0].mxu0
        %v1414 = vadd.f32 0.0, %v1413
        %v1415 = vpop.f32.mrb[0].mxu0
        %v1416 = vadd.f32 0.0, %v1415
        %v1417 = vpop.f32.mrb[0].mxu0
        %v1418 = vadd.f32 0.0, %v1417
        %1419 = vmatprep.mubr.bf16.mxu0 0
        %1420 = vmatmul.mubr.bf16.gmra.mrb[0].mxu0 %v757
        %v1421 = vpop.f32.mrb[0].mxu0
        %v1422 = vadd.f32 0.0, %v1421
        %v1423 = vpop.f32.mrb[0].mxu0
        %v1424 = vadd.f32 0.0, %v1423
        %v1425 = vpop.f32.mrb[0].mxu0
        %v1426 = vadd.f32 0.0, %v1425
        %v1427 = vpop.f32.mrb[0].mxu0
        %v1428 = vadd.f32 0.0, %v1427
        %1429 = vmatprep.mubr.bf16.mxu0 0
        %1430 = vmatmul.mubr.bf16.gmra.mrb[0].mxu0 %v760
        %v1431 = vpop.f32.mrb[0].mxu0
        %v1432 = vadd.f32 0.0, %v1431
        %v1433 = vpop.f32.mrb[0].mxu0
        %v1434 = vadd.f32 0.0, %v1433
        %v1435 = vpop.f32.mrb[0].mxu0
        %v1436 = vadd.f32 0.0, %v1435
        %v1437 = vpop.f32.mrb[0].mxu0
        %v1438 = vadd.f32 0.0, %v1437
        %1439 = vmatprep.mubr.bf16.mxu0 0
        %1440 = vmatmul.mubr.bf16.gmra.mrb[0].mxu0 %v763
        %v1441 = vpop.f32.mrb[0].mxu0
        %v1442 = vadd.f32 0.0, %v1441
        %v1443 = vpop.f32.mrb[0].mxu0
        %v1444 = vadd.f32 0.0, %v1443
        %v1445 = vpop.f32.mrb[0].mxu0
        %v1446 = vadd.f32 0.0, %v1445
        %v1447 = vpop.f32.mrb[0].mxu0
        %v1448 = vadd.f32 0.0, %v1447
        %1449 = vmatprep.mubr.bf16.mxu0 0
        %1450 = vmatmul.mubr.bf16.gmra.mrb[0].mxu0 %v766
        %v1451 = vpop.f32.mrb[0].mxu0
        %v1452 = vadd.f32 0.0, %v1451
        %v1453 = vpop.f32.mrb[0].mxu0
        %v1454 = vadd.f32 0.0, %v1453
        %v1455 = vpop.f32.mrb[0].mxu0
        %v1456 = vadd.f32 0.0, %v1455
        %v1457 = vpop.f32.mrb[0].mxu0
        %v1458 = vadd.f32 0.0, %v1457
        %1459 = vmatprep.mubr.bf16.mxu0 0
        %1460 = vmatmul.mubr.bf16.gmra.mrb[0].mxu0 %v769
        %v1461 = vpop.f32.mrb[0].mxu0
        %v1462 = vadd.f32 0.0, %v1461
        %v1463 = vpop.f32.mrb[0].mxu0
        %v1464 = vadd.f32 0.0, %v1463
        %v1465 = vpop.f32.mrb[0].mxu0
        %v1466 = vadd.f32 0.0, %v1465
        %v1467 = vpop.f32.mrb[0].mxu0
        %v1468 = vadd.f32 0.0, %v1467
        %1469 = vmatprep.mubr.bf16.mxu0 0
        %1470 = vmatmul.mubr.bf16.gmra.mrb[0].mxu0 %v772
        %v1471 = vpop.f32.mrb[0].mxu0
        %v1472 = vadd.f32 0.0, %v1471
        %v1473 = vpop.f32.mrb[0].mxu0
        %v1474 = vadd.f32 0.0, %v1473
        %v1475 = vpop.f32.mrb[0].mxu0
        %v1476 = vadd.f32 0.0, %v1475
        %v1477 = vpop.f32.mrb[0].mxu0
        %v1478 = vadd.f32 0.0, %v1477
        %1479 = vdwg.mxu0
        %1480 = vmatprep.subr.bf16.mxu0 0
        %1481 = vmatpush1.bf16.msra.mxu0 %v661
        %1482 = vmatprep.subr.bf16.mxu0 0
        %1483 = vmatpush1.bf16.msra.mxu0 %v666
        %1484 = vmatprep.subr.bf16.mxu0 0
        %1485 = vmatpush1.bf16.msra.mxu0 0
        %1486 = vmatprep.subr.bf16.mxu0 0
        %1487 = vmatpush1.bf16.msra.mxu0 0
        %1488 = vmatprep.subr.bf16.mxu0 0
        %1489 = vmatpush1.bf16.msra.mxu0 0
        %1490 = vmatprep.subr.bf16.mxu0 0
        %1491 = vmatpush1.bf16.msra.mxu0 0
        %1492 = vmatprep.subr.bf16.mxu0 0
        %1493 = vmatpush1.bf16.msra.mxu0 0
        %1494 = vmatprep.subr.bf16.mxu0 0
        %1495 = vmatpush1.bf16.msra.mxu0 0
        %1496 = vmatprep.subr.bf16.mxu0 0
        %1497 = vmatpush1.bf16.msra.mxu0 0
        %1498 = vmatprep.subr.bf16.mxu0 0
        %1499 = vmatpush1.bf16.msra.mxu0 0
        %1500 = vmatprep.subr.bf16.mxu0 0
        %1501 = vmatpush1.bf16.msra.mxu0 0
        %1502 = vmatprep.subr.bf16.mxu0 0
        %1503 = vmatpush1.bf16.msra.mxu0 0
        %1504 = vmatprep.subr.bf16.mxu0 0
        %1505 = vmatpush1.bf16.msra.mxu0 0
        %1506 = vmatprep.subr.bf16.mxu0 0
        %1507 = vmatpush1.bf16.msra.mxu0 0
        %1508 = vmatprep.subr.bf16.mxu0 0
        %1509 = vmatpush1.bf16.msra.mxu0 0
        %1510 = vmatprep.subr.bf16.mxu0 0
        %1511 = vmatpush1.bf16.msra.mxu0 0
        %1512 = vmatprep.mubr.bf16.mxu0 0
        %1513 = vmatmul.mubr.bf16.gmra.mrb[0].mxu0 %v679
        %v1514 = vpop.f32.mrb[0].mxu0
        %v1515 = vadd.f32 0.0, %v1514
        %v1516 = vpop.f32.mrb[0].mxu0
        %v1517 = vpop.f32.mrb[0].mxu0
        %v1518 = vadd.f32 0.0, %v1517
        %v1519 = vpop.f32.mrb[0].mxu0
        %1520 = vmatprep.mubr.bf16.mxu0 0
        %1521 = vmatmul.mubr.bf16.gmra.mrb[0].mxu0 %v682
        %v1522 = vpop.f32.mrb[0].mxu0
        %v1523 = vadd.f32 0.0, %v1522
        %v1524 = vpop.f32.mrb[0].mxu0
        %v1525 = vpop.f32.mrb[0].mxu0
        %v1526 = vadd.f32 0.0, %v1525
        %v1527 = vpop.f32.mrb[0].mxu0
        %1528 = vmatprep.mubr.bf16.mxu0 0
        %1529 = vmatmul.mubr.bf16.gmra.mrb[0].mxu0 %v685
        %v1530 = vpop.f32.mrb[0].mxu0
        %v1531 = vadd.f32 0.0, %v1530
        %v1532 = vpop.f32.mrb[0].mxu0
        %v1533 = vpop.f32.mrb[0].mxu0
        %v1534 = vadd.f32 0.0, %v1533
        %v1535 = vpop.f32.mrb[0].mxu0
        %1536 = vmatprep.mubr.bf16.mxu0 0
        %1537 = vmatmul.mubr.bf16.gmra.mrb[0].mxu0 %v688
        %v1538 = vpop.f32.mrb[0].mxu0
        %v1539 = vadd.f32 0.0, %v1538
        %v1540 = vpop.f32.mrb[0].mxu0
        %v1541 = vpop.f32.mrb[0].mxu0
        %v1542 = vadd.f32 0.0, %v1541
        %v1543 = vpop.f32.mrb[0].mxu0
        %1544 = vmatprep.mubr.bf16.mxu0 0
        %1545 = vmatmul.mubr.bf16.gmra.mrb[0].mxu0 %v691
        %v1546 = vpop.f32.mrb[0].mxu0
        %v1547 = vadd.f32 0.0, %v1546
        %v1548 = vpop.f32.mrb[0].mxu0
        %v1549 = vpop.f32.mrb[0].mxu0
        %v1550 = vadd.f32 0.0, %v1549
        %v1551 = vpop.f32.mrb[0].mxu0
        %1552 = vmatprep.mubr.bf16.mxu0 0
        %1553 = vmatmul.mubr.bf16.gmra.mrb[0].mxu0 %v694
        %v1554 = vpop.f32.mrb[0].mxu0
        %v1555 = vadd.f32 0.0, %v1554
        %v1556 = vpop.f32.mrb[0].mxu0
        %v1557 = vpop.f32.mrb[0].mxu0
        %v1558 = vadd.f32 0.0, %v1557
        %v1559 = vpop.f32.mrb[0].mxu0
        %1560 = vmatprep.mubr.bf16.mxu0 0
        %1561 = vmatmul.mubr.bf16.gmra.mrb[0].mxu0 %v697
        %v1562 = vpop.f32.mrb[0].mxu0
        %v1563 = vadd.f32 0.0, %v1562
        %v1564 = vpop.f32.mrb[0].mxu0
        %v1565 = vpop.f32.mrb[0].mxu0
        %v1566 = vadd.f32 0.0, %v1565
        %v1567 = vpop.f32.mrb[0].mxu0
        %1568 = vmatprep.mubr.bf16.mxu0 0
        %1569 = vmatmul.mubr.bf16.gmra.mrb[0].mxu0 %v700
        %v1570 = vpop.f32.mrb[0].mxu0
        %v1571 = vadd.f32 0.0, %v1570
        %v1572 = vpop.f32.mrb[0].mxu0
        %v1573 = vpop.f32.mrb[0].mxu0
        %v1574 = vadd.f32 0.0, %v1573
        %v1575 = vpop.f32.mrb[0].mxu0
        %1576 = vmatprep.mubr.bf16.mxu0 0
        %1577 = vmatmul.mubr.bf16.gmra.mrb[0].mxu0 %v703
        %v1578 = vpop.f32.mrb[0].mxu0
        %v1579 = vadd.f32 0.0, %v1578
        %v1580 = vpop.f32.mrb[0].mxu0
        %v1581 = vpop.f32.mrb[0].mxu0
        %v1582 = vadd.f32 0.0, %v1581
        %v1583 = vpop.f32.mrb[0].mxu0
        %1584 = vmatprep.mubr.bf16.mxu0 0
        %1585 = vmatmul.mubr.bf16.gmra.mrb[0].mxu0 %v706
        %v1586 = vpop.f32.mrb[0].mxu0
        %v1587 = vadd.f32 0.0, %v1586
        %v1588 = vpop.f32.mrb[0].mxu0
        %v1589 = vpop.f32.mrb[0].mxu0
        %v1590 = vadd.f32 0.0, %v1589
        %v1591 = vpop.f32.mrb[0].mxu0
        %1592 = vmatprep.mubr.bf16.mxu0 0
        %1593 = vmatmul.mubr.bf16.gmra.mrb[0].mxu0 %v709
        %v1594 = vpop.f32.mrb[0].mxu0
        %v1595 = vadd.f32 0.0, %v1594
        %v1596 = vpop.f32.mrb[0].mxu0
        %v1597 = vpop.f32.mrb[0].mxu0
        %v1598 = vadd.f32 0.0, %v1597
        %v1599 = vpop.f32.mrb[0].mxu0
        %1600 = vmatprep.mubr.bf16.mxu0 0
        %1601 = vmatmul.mubr.bf16.gmra.mrb[0].mxu0 %v712
        %v1602 = vpop.f32.mrb[0].mxu0
        %v1603 = vadd.f32 0.0, %v1602
        %v1604 = vpop.f32.mrb[0].mxu0
        %v1605 = vpop.f32.mrb[0].mxu0
        %v1606 = vadd.f32 0.0, %v1605
        %v1607 = vpop.f32.mrb[0].mxu0
        %1608 = vmatprep.mubr.bf16.mxu0 0
        %1609 = vmatmul.mubr.bf16.gmra.mrb[0].mxu0 %v715
        %v1610 = vpop.f32.mrb[0].mxu0
        %v1611 = vadd.f32 0.0, %v1610
        %v1612 = vpop.f32.mrb[0].mxu0
        %v1613 = vpop.f32.mrb[0].mxu0
        %v1614 = vadd.f32 0.0, %v1613
        %v1615 = vpop.f32.mrb[0].mxu0
        %1616 = vmatprep.mubr.bf16.mxu0 0
        %1617 = vmatmul.mubr.bf16.gmra.mrb[0].mxu0 %v718
        %v1618 = vpop.f32.mrb[0].mxu0
        %v1619 = vadd.f32 0.0, %v1618
        %v1620 = vpop.f32.mrb[0].mxu0
        %v1621 = vpop.f32.mrb[0].mxu0
        %v1622 = vadd.f32 0.0, %v1621
        %v1623 = vpop.f32.mrb[0].mxu0
        %1624 = vmatprep.mubr.bf16.mxu0 0
        %1625 = vmatmul.mubr.bf16.gmra.mrb[0].mxu0 %v721
        %v1626 = vpop.f32.mrb[0].mxu0
        %v1627 = vadd.f32 0.0, %v1626
        %v1628 = vpop.f32.mrb[0].mxu0
        %v1629 = vpop.f32.mrb[0].mxu0
        %v1630 = vadd.f32 0.0, %v1629
        %v1631 = vpop.f32.mrb[0].mxu0
        %1632 = vmatprep.mubr.bf16.mxu0 0
        %1633 = vmatmul.mubr.bf16.gmra.mrb[0].mxu0 %v724
        %v1634 = vpop.f32.mrb[0].mxu0
        %v1635 = vadd.f32 0.0, %v1634
        %v1636 = vpop.f32.mrb[0].mxu0
        %v1637 = vpop.f32.mrb[0].mxu0
        %v1638 = vadd.f32 0.0, %v1637
        %v1639 = vpop.f32.mrb[0].mxu0
        %1640 = vmatprep.mubr.bf16.mxu0 0
        %1641 = vmatmul.mubr.bf16.gmra.mrb[0].mxu0 %v727
        %v1642 = vpop.f32.mrb[0].mxu0
        %v1643 = vadd.f32 0.0, %v1642
        %v1644 = vpop.f32.mrb[0].mxu0
        %v1645 = vpop.f32.mrb[0].mxu0
        %v1646 = vadd.f32 0.0, %v1645
        %v1647 = vpop.f32.mrb[0].mxu0
        %1648 = vmatprep.mubr.bf16.mxu0 0
        %1649 = vmatmul.mubr.bf16.gmra.mrb[0].mxu0 %v730
        %v1650 = vpop.f32.mrb[0].mxu0
        %v1651 = vadd.f32 0.0, %v1650
        %v1652 = vpop.f32.mrb[0].mxu0
        %v1653 = vpop.f32.mrb[0].mxu0
        %v1654 = vadd.f32 0.0, %v1653
        %v1655 = vpop.f32.mrb[0].mxu0
        %1656 = vmatprep.mubr.bf16.mxu0 0
        %1657 = vmatmul.mubr.bf16.gmra.mrb[0].mxu0 %v733
        %v1658 = vpop.f32.mrb[0].mxu0
        %v1659 = vadd.f32 0.0, %v1658
        %v1660 = vpop.f32.mrb[0].mxu0
        %v1661 = vpop.f32.mrb[0].mxu0
        %v1662 = vadd.f32 0.0, %v1661
        %v1663 = vpop.f32.mrb[0].mxu0
        %1664 = vmatprep.mubr.bf16.mxu0 0
        %1665 = vmatmul.mubr.bf16.gmra.mrb[0].mxu0 %v736
        %v1666 = vpop.f32.mrb[0].mxu0
        %v1667 = vadd.f32 0.0, %v1666
        %v1668 = vpop.f32.mrb[0].mxu0
        %v1669 = vpop.f32.mrb[0].mxu0
        %v1670 = vadd.f32 0.0, %v1669
        %v1671 = vpop.f32.mrb[0].mxu0
        %1672 = vmatprep.mubr.bf16.mxu0 0
        %1673 = vmatmul.mubr.bf16.gmra.mrb[0].mxu0 %v739
        %v1674 = vpop.f32.mrb[0].mxu0
        %v1675 = vadd.f32 0.0, %v1674
        %v1676 = vpop.f32.mrb[0].mxu0
        %v1677 = vpop.f32.mrb[0].mxu0
        %v1678 = vadd.f32 0.0, %v1677
        %v1679 = vpop.f32.mrb[0].mxu0
        %1680 = vmatprep.mubr.bf16.mxu0 0
        %1681 = vmatmul.mubr.bf16.gmra.mrb[0].mxu0 %v742
        %v1682 = vpop.f32.mrb[0].mxu0
        %v1683 = vadd.f32 0.0, %v1682
        %v1684 = vpop.f32.mrb[0].mxu0
        %v1685 = vpop.f32.mrb[0].mxu0
        %v1686 = vadd.f32 0.0, %v1685
        %v1687 = vpop.f32.mrb[0].mxu0
        %1688 = vmatprep.mubr.bf16.mxu0 0
        %1689 = vmatmul.mubr.bf16.gmra.mrb[0].mxu0 %v745
        %v1690 = vpop.f32.mrb[0].mxu0
        %v1691 = vadd.f32 0.0, %v1690
        %v1692 = vpop.f32.mrb[0].mxu0
        %v1693 = vpop.f32.mrb[0].mxu0
        %v1694 = vadd.f32 0.0, %v1693
        %v1695 = vpop.f32.mrb[0].mxu0
        %1696 = vmatprep.mubr.bf16.mxu0 0
        %1697 = vmatmul.mubr.bf16.gmra.mrb[0].mxu0 %v748
        %v1698 = vpop.f32.mrb[0].mxu0
        %v1699 = vadd.f32 0.0, %v1698
        %v1700 = vpop.f32.mrb[0].mxu0
        %v1701 = vpop.f32.mrb[0].mxu0
        %v1702 = vadd.f32 0.0, %v1701
        %v1703 = vpop.f32.mrb[0].mxu0
        %1704 = vmatprep.mubr.bf16.mxu0 0
        %1705 = vmatmul.mubr.bf16.gmra.mrb[0].mxu0 %v751
        %v1706 = vpop.f32.mrb[0].mxu0
        %v1707 = vadd.f32 0.0, %v1706
        %v1708 = vpop.f32.mrb[0].mxu0
        %v1709 = vpop.f32.mrb[0].mxu0
        %v1710 = vadd.f32 0.0, %v1709
        %v1711 = vpop.f32.mrb[0].mxu0
        %1712 = vmatprep.mubr.bf16.mxu0 0
        %1713 = vmatmul.mubr.bf16.gmra.mrb[0].mxu0 %v754
        %v1714 = vpop.f32.mrb[0].mxu0
        %v1715 = vadd.f32 0.0, %v1714
        %v1716 = vpop.f32.mrb[0].mxu0
        %v1717 = vpop.f32.mrb[0].mxu0
        %v1718 = vadd.f32 0.0, %v1717
        %v1719 = vpop.f32.mrb[0].mxu0
        %1720 = vmatprep.mubr.bf16.mxu0 0
        %1721 = vmatmul.mubr.bf16.gmra.mrb[0].mxu0 %v757
        %v1722 = vpop.f32.mrb[0].mxu0
        %v1723 = vadd.f32 0.0, %v1722
        %v1724 = vpop.f32.mrb[0].mxu0
        %v1725 = vpop.f32.mrb[0].mxu0
        %v1726 = vadd.f32 0.0, %v1725
        %v1727 = vpop.f32.mrb[0].mxu0
        %1728 = vmatprep.mubr.bf16.mxu0 0
        %1729 = vmatmul.mubr.bf16.gmra.mrb[0].mxu0 %v760
        %v1730 = vpop.f32.mrb[0].mxu0
        %v1731 = vadd.f32 0.0, %v1730
        %v1732 = vpop.f32.mrb[0].mxu0
        %v1733 = vpop.f32.mrb[0].mxu0
        %v1734 = vadd.f32 0.0, %v1733
        %v1735 = vpop.f32.mrb[0].mxu0
        %1736 = vmatprep.mubr.bf16.mxu0 0
        %1737 = vmatmul.mubr.bf16.gmra.mrb[0].mxu0 %v763
        %v1738 = vpop.f32.mrb[0].mxu0
        %v1739 = vadd.f32 0.0, %v1738
        %v1740 = vpop.f32.mrb[0].mxu0
        %v1741 = vpop.f32.mrb[0].mxu0
        %v1742 = vadd.f32 0.0, %v1741
        %v1743 = vpop.f32.mrb[0].mxu0
        %1744 = vmatprep.mubr.bf16.mxu0 0
        %1745 = vmatmul.mubr.bf16.gmra.mrb[0].mxu0 %v766
        %v1746 = vpop.f32.mrb[0].mxu0
        %v1747 = vadd.f32 0.0, %v1746
        %v1748 = vpop.f32.mrb[0].mxu0
        %v1749 = vpop.f32.mrb[0].mxu0
        %v1750 = vadd.f32 0.0, %v1749
        %v1751 = vpop.f32.mrb[0].mxu0
        %1752 = vmatprep.mubr.bf16.mxu0 0
        %1753 = vmatmul.mubr.bf16.gmra.mrb[0].mxu0 %v769
        %v1754 = vpop.f32.mrb[0].mxu0
        %v1755 = vadd.f32 0.0, %v1754
        %v1756 = vpop.f32.mrb[0].mxu0
        %v1757 = vpop.f32.mrb[0].mxu0
        %v1758 = vadd.f32 0.0, %v1757
        %v1759 = vpop.f32.mrb[0].mxu0
        %1760 = vmatprep.mubr.bf16.mxu0 0
        %1761 = vmatmul.mubr.bf16.gmra.mrb[0].mxu0 %v772
        %v1762 = vpop.f32.mrb[0].mxu0
        %v1763 = vadd.f32 0.0, %v1762
        %v1764 = vpop.f32.mrb[0].mxu0
        %v1765 = vpop.f32.mrb[0].mxu0
        %v1766 = vadd.f32 0.0, %v1765
        %v1767 = vpop.f32.mrb[0].mxu0
        %1768 = vdwg.mxu0
        %v1769 = vld [vmem:[%s2] sm:$0x1]
        %v1771 = vlaneseq
        %v1772 = vshrl.u32 %v1771, 7
        %v1773 = vsub.s32 0, %v1772
        %v1774 = vrot.slane %v1769, %v1773
        %v1776 = vadd.f32 %v809, %v1774
        %v1777 = vadd.f32 %v813, %v1774
        %v1778 = vadd.f32 %v819, %v1774
        %v1779 = vadd.f32 %v823, %v1774
        %v1780 = vadd.f32 %v829, %v1774
        %v1781 = vadd.f32 %v833, %v1774
        %v1782 = vadd.f32 %v839, %v1774
        %v1783 = vadd.f32 %v843, %v1774
        %v1784 = vadd.f32 %v849, %v1774
        %v1785 = vadd.f32 %v853, %v1774
        %v1786 = vadd.f32 %v859, %v1774
        %v1787 = vadd.f32 %v863, %v1774
        %v1788 = vadd.f32 %v869, %v1774
        %v1789 = vadd.f32 %v873, %v1774
        %v1790 = vadd.f32 %v879, %v1774
        %v1791 = vadd.f32 %v883, %v1774
        %v1792 = vadd.f32 %v889, %v1774
        %v1793 = vadd.f32 %v893, %v1774
        %v1794 = vadd.f32 %v899, %v1774
        %v1795 = vadd.f32 %v903, %v1774
        %v1796 = vadd.f32 %v909, %v1774
        %v1797 = vadd.f32 %v913, %v1774
        %v1798 = vadd.f32 %v919, %v1774
        %v1799 = vadd.f32 %v923, %v1774
        %v1800 = vadd.f32 %v929, %v1774
        %v1801 = vadd.f32 %v933, %v1774
        %v1802 = vadd.f32 %v939, %v1774
        %v1803 = vadd.f32 %v943, %v1774
        %v1804 = vadd.f32 %v949, %v1774
        %v1805 = vadd.f32 %v953, %v1774
        %v1806 = vadd.f32 %v959, %v1774
        %v1807 = vadd.f32 %v963, %v1774
        %v1808 = vadd.f32 %v969, %v1774
        %v1809 = vadd.f32 %v973, %v1774
        %v1810 = vadd.f32 %v979, %v1774
        %v1811 = vadd.f32 %v983, %v1774
        %v1812 = vadd.f32 %v989, %v1774
        %v1813 = vadd.f32 %v993, %v1774
        %v1814 = vadd.f32 %v999, %v1774
        %v1815 = vadd.f32 %v1003, %v1774
        %v1816 = vadd.f32 %v1009, %v1774
        %v1817 = vadd.f32 %v1013, %v1774
        %v1818 = vadd.f32 %v1019, %v1774
        %v1819 = vadd.f32 %v1023, %v1774
        %v1820 = vadd.f32 %v1029, %v1774
        %v1821 = vadd.f32 %v1033, %v1774
        %v1822 = vadd.f32 %v1039, %v1774
        %v1823 = vadd.f32 %v1043, %v1774
        %v1824 = vadd.f32 %v1049, %v1774
        %v1825 = vadd.f32 %v1053, %v1774
        %v1826 = vadd.f32 %v1059, %v1774
        %v1827 = vadd.f32 %v1063, %v1774
        %v1828 = vadd.f32 %v1069, %v1774
        %v1829 = vadd.f32 %v1073, %v1774
        %v1830 = vadd.f32 %v1079, %v1774
        %v1831 = vadd.f32 %v1083, %v1774
        %v1832 = vadd.f32 %v1089, %v1774
        %v1833 = vadd.f32 %v1093, %v1774
        %v1834 = vadd.f32 %v1099, %v1774
        %v1835 = vadd.f32 %v1103, %v1774
        %v1836 = vadd.f32 %v1109, %v1774
        %v1837 = vadd.f32 %v1113, %v1774
        %v1838 = vadd.f32 %v1119, %v1774
        %v1839 = vadd.f32 %v1123, %v1774
        %vm1840 = vcmp.gt.f32.partialorder %v1776, 0.0
        %vm1841 = vcmp.gt.f32.partialorder %v1777, 0.0
        %vm1842 = vcmp.gt.f32.partialorder %v1778, 0.0
        %vm1843 = vcmp.gt.f32.partialorder %v1779, 0.0
        %vm1844 = vcmp.gt.f32.partialorder %v1780, 0.0
        %vm1845 = vcmp.gt.f32.partialorder %v1781, 0.0
        %vm1846 = vcmp.gt.f32.partialorder %v1782, 0.0
        %vm1847 = vcmp.gt.f32.partialorder %v1783, 0.0
        %vm1848 = vcmp.gt.f32.partialorder %v1784, 0.0
        %vm1849 = vcmp.gt.f32.partialorder %v1785, 0.0
        %vm1850 = vcmp.gt.f32.partialorder %v1786, 0.0
        %vm1851 = vcmp.gt.f32.partialorder %v1787, 0.0
        %vm1852 = vcmp.gt.f32.partialorder %v1788, 0.0
        %vm1853 = vcmp.gt.f32.partialorder %v1789, 0.0
        %vm1854 = vcmp.gt.f32.partialorder %v1790, 0.0
        %vm1855 = vcmp.gt.f32.partialorder %v1791, 0.0
        %vm1856 = vcmp.gt.f32.partialorder %v1792, 0.0
        %vm1857 = vcmp.gt.f32.partialorder %v1793, 0.0
        %vm1858 = vcmp.gt.f32.partialorder %v1794, 0.0
        %vm1859 = vcmp.gt.f32.partialorder %v1795, 0.0
        %vm1860 = vcmp.gt.f32.partialorder %v1796, 0.0
        %vm1861 = vcmp.gt.f32.partialorder %v1797, 0.0
        %vm1862 = vcmp.gt.f32.partialorder %v1798, 0.0
        %vm1863 = vcmp.gt.f32.partialorder %v1799, 0.0
        %vm1864 = vcmp.gt.f32.partialorder %v1800, 0.0
        %vm1865 = vcmp.gt.f32.partialorder %v1801, 0.0
        %vm1866 = vcmp.gt.f32.partialorder %v1802, 0.0
        %vm1867 = vcmp.gt.f32.partialorder %v1803, 0.0
        %vm1868 = vcmp.gt.f32.partialorder %v1804, 0.0
        %vm1869 = vcmp.gt.f32.partialorder %v1805, 0.0
        %vm1870 = vcmp.gt.f32.partialorder %v1806, 0.0
        %vm1871 = vcmp.gt.f32.partialorder %v1807, 0.0
        %vm1872 = vcmp.gt.f32.partialorder %v1808, 0.0
        %vm1873 = vcmp.gt.f32.partialorder %v1809, 0.0
        %vm1874 = vcmp.gt.f32.partialorder %v1810, 0.0
        %vm1875 = vcmp.gt.f32.partialorder %v1811, 0.0
        %vm1876 = vcmp.gt.f32.partialorder %v1812, 0.0
        %vm1877 = vcmp.gt.f32.partialorder %v1813, 0.0
        %vm1878 = vcmp.gt.f32.partialorder %v1814, 0.0
        %vm1879 = vcmp.gt.f32.partialorder %v1815, 0.0
        %vm1880 = vcmp.gt.f32.partialorder %v1816, 0.0
        %vm1881 = vcmp.gt.f32.partialorder %v1817, 0.0
        %vm1882 = vcmp.gt.f32.partialorder %v1818, 0.0
        %vm1883 = vcmp.gt.f32.partialorder %v1819, 0.0
        %vm1884 = vcmp.gt.f32.partialorder %v1820, 0.0
        %vm1885 = vcmp.gt.f32.partialorder %v1821, 0.0
        %vm1886 = vcmp.gt.f32.partialorder %v1822, 0.0
        %vm1887 = vcmp.gt.f32.partialorder %v1823, 0.0
        %vm1888 = vcmp.gt.f32.partialorder %v1824, 0.0
        %vm1889 = vcmp.gt.f32.partialorder %v1825, 0.0
        %vm1890 = vcmp.gt.f32.partialorder %v1826, 0.0
        %vm1891 = vcmp.gt.f32.partialorder %v1827, 0.0
        %vm1892 = vcmp.gt.f32.partialorder %v1828, 0.0
        %vm1893 = vcmp.gt.f32.partialorder %v1829, 0.0
        %vm1894 = vcmp.gt.f32.partialorder %v1830, 0.0
        %vm1895 = vcmp.gt.f32.partialorder %v1831, 0.0
        %vm1896 = vcmp.gt.f32.partialorder %v1832, 0.0
        %vm1897 = vcmp.gt.f32.partialorder %v1833, 0.0
        %vm1898 = vcmp.gt.f32.partialorder %v1834, 0.0
        %vm1899 = vcmp.gt.f32.partialorder %v1835, 0.0
        %vm1900 = vcmp.gt.f32.partialorder %v1836, 0.0
        %vm1901 = vcmp.gt.f32.partialorder %v1837, 0.0
        %vm1902 = vcmp.gt.f32.partialorder %v1838, 0.0
        %vm1903 = vcmp.gt.f32.partialorder %v1839, 0.0
        %v1904 = vmin.f32 %v1776, 0.0
        %v1905 = vmin.f32 %v1777, 0.0
        %v1906 = vmin.f32 %v1778, 0.0
        %v1907 = vmin.f32 %v1779, 0.0
        %v1908 = vmin.f32 %v1780, 0.0
        %v1909 = vmin.f32 %v1781, 0.0
        %v1910 = vmin.f32 %v1782, 0.0
        %v1911 = vmin.f32 %v1783, 0.0
        %v1912 = vmin.f32 %v1784, 0.0
        %v1913 = vmin.f32 %v1785, 0.0
        %v1914 = vmin.f32 %v1786, 0.0
        %v1915 = vmin.f32 %v1787, 0.0
        %v1916 = vmin.f32 %v1788, 0.0
        %v1917 = vmin.f32 %v1789, 0.0
        %v1918 = vmin.f32 %v1790, 0.0
        %v1919 = vmin.f32 %v1791, 0.0
        %v1920 = vmin.f32 %v1792, 0.0
        %v1921 = vmin.f32 %v1793, 0.0
        %v1922 = vmin.f32 %v1794, 0.0
        %v1923 = vmin.f32 %v1795, 0.0
        %v1924 = vmin.f32 %v1796, 0.0
        %v1925 = vmin.f32 %v1797, 0.0
        %v1926 = vmin.f32 %v1798, 0.0
        %v1927 = vmin.f32 %v1799, 0.0
        %v1928 = vmin.f32 %v1800, 0.0
        %v1929 = vmin.f32 %v1801, 0.0
        %v1930 = vmin.f32 %v1802, 0.0
        %v1931 = vmin.f32 %v1803, 0.0
        %v1932 = vmin.f32 %v1804, 0.0
        %v1933 = vmin.f32 %v1805, 0.0
        %v1934 = vmin.f32 %v1806, 0.0
        %v1935 = vmin.f32 %v1807, 0.0
        %v1936 = vmin.f32 %v1808, 0.0
        %v1937 = vmin.f32 %v1809, 0.0
        %v1938 = vmin.f32 %v1810, 0.0
        %v1939 = vmin.f32 %v1811, 0.0
        %v1940 = vmin.f32 %v1812, 0.0
        %v1941 = vmin.f32 %v1813, 0.0
        %v1942 = vmin.f32 %v1814, 0.0
        %v1943 = vmin.f32 %v1815, 0.0
        %v1944 = vmin.f32 %v1816, 0.0
        %v1945 = vmin.f32 %v1817, 0.0
        %v1946 = vmin.f32 %v1818, 0.0
        %v1947 = vmin.f32 %v1819, 0.0
        %v1948 = vmin.f32 %v1820, 0.0
        %v1949 = vmin.f32 %v1821, 0.0
        %v1950 = vmin.f32 %v1822, 0.0
        %v1951 = vmin.f32 %v1823, 0.0
        %v1952 = vmin.f32 %v1824, 0.0
        %v1953 = vmin.f32 %v1825, 0.0
        %v1954 = vmin.f32 %v1826, 0.0
        %v1955 = vmin.f32 %v1827, 0.0
        %v1956 = vmin.f32 %v1828, 0.0
        %v1957 = vmin.f32 %v1829, 0.0
        %v1958 = vmin.f32 %v1830, 0.0
        %v1959 = vmin.f32 %v1831, 0.0
        %v1960 = vmin.f32 %v1832, 0.0
        %v1961 = vmin.f32 %v1833, 0.0
        %v1962 = vmin.f32 %v1834, 0.0
        %v1963 = vmin.f32 %v1835, 0.0
        %v1964 = vmin.f32 %v1836, 0.0
        %v1965 = vmin.f32 %v1837, 0.0
        %v1966 = vmin.f32 %v1838, 0.0
        %v1967 = vmin.f32 %v1839, 0.0
        %v1968 = vmul.f32 %v1904, 1.442695
        %v1969 = vpow.pop %v1968
        %v1970 = vmul.f32 %v1905, 1.442695
        %v1971 = vpow.pop %v1970
        %v1972 = vmul.f32 %v1906, 1.442695
        %v1973 = vpow.pop %v1972
        %v1974 = vmul.f32 %v1907, 1.442695
        %v1975 = vpow.pop %v1974
        %v1976 = vmul.f32 %v1908, 1.442695
        %v1977 = vpow.pop %v1976
        %v1978 = vmul.f32 %v1909, 1.442695
        %v1979 = vpow.pop %v1978
        %v1980 = vmul.f32 %v1910, 1.442695
        %v1981 = vpow.pop %v1980
        %v1982 = vmul.f32 %v1911, 1.442695
        %v1983 = vpow.pop %v1982
        %v1984 = vmul.f32 %v1912, 1.442695
        %v1985 = vpow.pop %v1984
        %v1986 = vmul.f32 %v1913, 1.442695
        %v1987 = vpow.pop %v1986
        %v1988 = vmul.f32 %v1914, 1.442695
        %v1989 = vpow.pop %v1988
        %v1990 = vmul.f32 %v1915, 1.442695
        %v1991 = vpow.pop %v1990
        %v1992 = vmul.f32 %v1916, 1.442695
        %v1993 = vpow.pop %v1992
        %v1994 = vmul.f32 %v1917, 1.442695
        %v1995 = vpow.pop %v1994
        %v1996 = vmul.f32 %v1918, 1.442695
        %v1997 = vpow.pop %v1996
        %v1998 = vmul.f32 %v1919, 1.442695
        %v1999 = vpow.pop %v1998
        %v2000 = vmul.f32 %v1920, 1.442695
        %v2001 = vpow.pop %v2000
        %v2002 = vmul.f32 %v1921, 1.442695
        %v2003 = vpow.pop %v2002
        %v2004 = vmul.f32 %v1922, 1.442695
        %v2005 = vpow.pop %v2004
        %v2006 = vmul.f32 %v1923, 1.442695
        %v2007 = vpow.pop %v2006
        %v2008 = vmul.f32 %v1924, 1.442695
        %v2009 = vpow.pop %v2008
        %v2010 = vmul.f32 %v1925, 1.442695
        %v2011 = vpow.pop %v2010
        %v2012 = vmul.f32 %v1926, 1.442695
        %v2013 = vpow.pop %v2012
        %v2014 = vmul.f32 %v1927, 1.442695
        %v2015 = vpow.pop %v2014
        %v2016 = vmul.f32 %v1928, 1.442695
        %v2017 = vpow.pop %v2016
        %v2018 = vmul.f32 %v1929, 1.442695
        %v2019 = vpow.pop %v2018
        %v2020 = vmul.f32 %v1930, 1.442695
        %v2021 = vpow.pop %v2020
        %v2022 = vmul.f32 %v1931, 1.442695
        %v2023 = vpow.pop %v2022
        %v2024 = vmul.f32 %v1932, 1.442695
        %v2025 = vpow.pop %v2024
        %v2026 = vmul.f32 %v1933, 1.442695
        %v2027 = vpow.pop %v2026
        %v2028 = vmul.f32 %v1934, 1.442695
        %v2029 = vpow.pop %v2028
        %v2030 = vmul.f32 %v1935, 1.442695
        %v2031 = vpow.pop %v2030
        %v2032 = vmul.f32 %v1936, 1.442695
        %v2033 = vpow.pop %v2032
        %v2034 = vmul.f32 %v1937, 1.442695
        %v2035 = vpow.pop %v2034
        %v2036 = vmul.f32 %v1938, 1.442695
        %v2037 = vpow.pop %v2036
        %v2038 = vmul.f32 %v1939, 1.442695
        %v2039 = vpow.pop %v2038
        %v2040 = vmul.f32 %v1940, 1.442695
        %v2041 = vpow.pop %v2040
        %v2042 = vmul.f32 %v1941, 1.442695
        %v2043 = vpow.pop %v2042
        %v2044 = vmul.f32 %v1942, 1.442695
        %v2045 = vpow.pop %v2044
        %v2046 = vmul.f32 %v1943, 1.442695
        %v2047 = vpow.pop %v2046
        %v2048 = vmul.f32 %v1944, 1.442695
        %v2049 = vpow.pop %v2048
        %v2050 = vmul.f32 %v1945, 1.442695
        %v2051 = vpow.pop %v2050
        %v2052 = vmul.f32 %v1946, 1.442695
        %v2053 = vpow.pop %v2052
        %v2054 = vmul.f32 %v1947, 1.442695
        %v2055 = vpow.pop %v2054
        %v2056 = vmul.f32 %v1948, 1.442695
        %v2057 = vpow.pop %v2056
        %v2058 = vmul.f32 %v1949, 1.442695
        %v2059 = vpow.pop %v2058
        %v2060 = vmul.f32 %v1950, 1.442695
        %v2061 = vpow.pop %v2060
        %v2062 = vmul.f32 %v1951, 1.442695
        %v2063 = vpow.pop %v2062
        %v2064 = vmul.f32 %v1952, 1.442695
        %v2065 = vpow.pop %v2064
        %v2066 = vmul.f32 %v1953, 1.442695
        %v2067 = vpow.pop %v2066
        %v2068 = vmul.f32 %v1954, 1.442695
        %v2069 = vpow.pop %v2068
        %v2070 = vmul.f32 %v1955, 1.442695
        %v2071 = vpow.pop %v2070
        %v2072 = vmul.f32 %v1956, 1.442695
        %v2073 = vpow.pop %v2072
        %v2074 = vmul.f32 %v1957, 1.442695
        %v2075 = vpow.pop %v2074
        %v2076 = vmul.f32 %v1958, 1.442695
        %v2077 = vpow.pop %v2076
        %v2078 = vmul.f32 %v1959, 1.442695
        %v2079 = vpow.pop %v2078
        %v2080 = vmul.f32 %v1960, 1.442695
        %v2081 = vpow.pop %v2080
        %v2082 = vmul.f32 %v1961, 1.442695
        %v2083 = vpow.pop %v2082
        %v2084 = vmul.f32 %v1962, 1.442695
        %v2085 = vpow.pop %v2084
        %v2086 = vmul.f32 %v1963, 1.442695
        %v2087 = vpow.pop %v2086
        %v2088 = vmul.f32 %v1964, 1.442695
        %v2089 = vpow.pop %v2088
        %v2090 = vmul.f32 %v1965, 1.442695
        %v2091 = vpow.pop %v2090
        %v2092 = vmul.f32 %v1966, 1.442695
        %v2093 = vpow.pop %v2092
        %v2094 = vmul.f32 %v1967, 1.442695
        %v2095 = vpow.pop %v2094
        %v2096 = vsub.f32 %v1969, 1.0
        %v2097 = vsub.f32 %v1971, 1.0
        %v2098 = vsub.f32 %v1973, 1.0
        %v2099 = vsub.f32 %v1975, 1.0
        %v2100 = vsub.f32 %v1977, 1.0
        %v2101 = vsub.f32 %v1979, 1.0
        %v2102 = vsub.f32 %v1981, 1.0
        %v2103 = vsub.f32 %v1983, 1.0
        %v2104 = vsub.f32 %v1985, 1.0
        %v2105 = vsub.f32 %v1987, 1.0
        %v2106 = vsub.f32 %v1989, 1.0
        %v2107 = vsub.f32 %v1991, 1.0
        %v2108 = vsub.f32 %v1993, 1.0
        %v2109 = vsub.f32 %v1995, 1.0
        %v2110 = vsub.f32 %v1997, 1.0
        %v2111 = vsub.f32 %v1999, 1.0
        %v2112 = vsub.f32 %v2001, 1.0
        %v2113 = vsub.f32 %v2003, 1.0
        %v2114 = vsub.f32 %v2005, 1.0
        %v2115 = vsub.f32 %v2007, 1.0
        %v2116 = vsub.f32 %v2009, 1.0
        %v2117 = vsub.f32 %v2011, 1.0
        %v2118 = vsub.f32 %v2013, 1.0
        %v2119 = vsub.f32 %v2015, 1.0
        %v2120 = vsub.f32 %v2017, 1.0
        %v2121 = vsub.f32 %v2019, 1.0
        %v2122 = vsub.f32 %v2021, 1.0
        %v2123 = vsub.f32 %v2023, 1.0
        %v2124 = vsub.f32 %v2025, 1.0
        %v2125 = vsub.f32 %v2027, 1.0
        %v2126 = vsub.f32 %v2029, 1.0
        %v2127 = vsub.f32 %v2031, 1.0
        %v2128 = vsub.f32 %v2033, 1.0
        %v2129 = vsub.f32 %v2035, 1.0
        %v2130 = vsub.f32 %v2037, 1.0
        %v2131 = vsub.f32 %v2039, 1.0
        %v2132 = vsub.f32 %v2041, 1.0
        %v2133 = vsub.f32 %v2043, 1.0
        %v2134 = vsub.f32 %v2045, 1.0
        %v2135 = vsub.f32 %v2047, 1.0
        %v2136 = vsub.f32 %v2049, 1.0
        %v2137 = vsub.f32 %v2051, 1.0
        %v2138 = vsub.f32 %v2053, 1.0
        %v2139 = vsub.f32 %v2055, 1.0
        %v2140 = vsub.f32 %v2057, 1.0
        %v2141 = vsub.f32 %v2059, 1.0
        %v2142 = vsub.f32 %v2061, 1.0
        %v2143 = vsub.f32 %v2063, 1.0
        %v2144 = vsub.f32 %v2065, 1.0
        %v2145 = vsub.f32 %v2067, 1.0
        %v2146 = vsub.f32 %v2069, 1.0
        %v2147 = vsub.f32 %v2071, 1.0
        %v2148 = vsub.f32 %v2073, 1.0
        %v2149 = vsub.f32 %v2075, 1.0
        %v2150 = vsub.f32 %v2077, 1.0
        %v2151 = vsub.f32 %v2079, 1.0
        %v2152 = vsub.f32 %v2081, 1.0
        %v2153 = vsub.f32 %v2083, 1.0
        %v2154 = vsub.f32 %v2085, 1.0
        %v2155 = vsub.f32 %v2087, 1.0
        %v2156 = vsub.f32 %v2089, 1.0
        %v2157 = vsub.f32 %v2091, 1.0
        %v2158 = vsub.f32 %v2093, 1.0
        %v2159 = vsub.f32 %v2095, 1.0
        %v2160 = vmul.f32 %v2096, 1.6732632
        %v2161 = vmul.f32 %v2097, 1.6732632
        %v2162 = vmul.f32 %v2098, 1.6732632
        %v2163 = vmul.f32 %v2099, 1.6732632
        %v2164 = vmul.f32 %v2100, 1.6732632
        %v2165 = vmul.f32 %v2101, 1.6732632
        %v2166 = vmul.f32 %v2102, 1.6732632
        %v2167 = vmul.f32 %v2103, 1.6732632
        %v2168 = vmul.f32 %v2104, 1.6732632
        %v2169 = vmul.f32 %v2105, 1.6732632
        %v2170 = vmul.f32 %v2106, 1.6732632
        %v2171 = vmul.f32 %v2107, 1.6732632
        %v2172 = vmul.f32 %v2108, 1.6732632
        %v2173 = vmul.f32 %v2109, 1.6732632
        %v2174 = vmul.f32 %v2110, 1.6732632
        %v2175 = vmul.f32 %v2111, 1.6732632
        %v2176 = vmul.f32 %v2112, 1.6732632
        %v2177 = vmul.f32 %v2113, 1.6732632
        %v2178 = vmul.f32 %v2114, 1.6732632
        %v2179 = vmul.f32 %v2115, 1.6732632
        %v2180 = vmul.f32 %v2116, 1.6732632
        %v2181 = vmul.f32 %v2117, 1.6732632
        %v2182 = vmul.f32 %v2118, 1.6732632
        %v2183 = vmul.f32 %v2119, 1.6732632
        %v2184 = vmul.f32 %v2120, 1.6732632
        %v2185 = vmul.f32 %v2121, 1.6732632
        %v2186 = vmul.f32 %v2122, 1.6732632
        %v2187 = vmul.f32 %v2123, 1.6732632
        %v2188 = vmul.f32 %v2124, 1.6732632
        %v2189 = vmul.f32 %v2125, 1.6732632
        %v2190 = vmul.f32 %v2126, 1.6732632
        %v2191 = vmul.f32 %v2127, 1.6732632
        %v2192 = vmul.f32 %v2128, 1.6732632
        %v2193 = vmul.f32 %v2129, 1.6732632
        %v2194 = vmul.f32 %v2130, 1.6732632
        %v2195 = vmul.f32 %v2131, 1.6732632
        %v2196 = vmul.f32 %v2132, 1.6732632
        %v2197 = vmul.f32 %v2133, 1.6732632
        %v2198 = vmul.f32 %v2134, 1.6732632
        %v2199 = vmul.f32 %v2135, 1.6732632
        %v2200 = vmul.f32 %v2136, 1.6732632
        %v2201 = vmul.f32 %v2137, 1.6732632
        %v2202 = vmul.f32 %v2138, 1.6732632
        %v2203 = vmul.f32 %v2139, 1.6732632
        %v2204 = vmul.f32 %v2140, 1.6732632
        %v2205 = vmul.f32 %v2141, 1.6732632
        %v2206 = vmul.f32 %v2142, 1.6732632
        %v2207 = vmul.f32 %v2143, 1.6732632
        %v2208 = vmul.f32 %v2144, 1.6732632
        %v2209 = vmul.f32 %v2145, 1.6732632
        %v2210 = vmul.f32 %v2146, 1.6732632
        %v2211 = vmul.f32 %v2147, 1.6732632
        %v2212 = vmul.f32 %v2148, 1.6732632
        %v2213 = vmul.f32 %v2149, 1.6732632
        %v2214 = vmul.f32 %v2150, 1.6732632
        %v2215 = vmul.f32 %v2151, 1.6732632
        %v2216 = vmul.f32 %v2152, 1.6732632
        %v2217 = vmul.f32 %v2153, 1.6732632
        %v2218 = vmul.f32 %v2154, 1.6732632
        %v2219 = vmul.f32 %v2155, 1.6732632
        %v2220 = vmul.f32 %v2156, 1.6732632
        %v2221 = vmul.f32 %v2157, 1.6732632
        %v2222 = vmul.f32 %v2158, 1.6732632
        %v2223 = vmul.f32 %v2159, 1.6732632
        %v2224 = vsel %vm1840, %v1776, %v2160
        %v2225 = vsel %vm1841, %v1777, %v2161
        %v2226 = vsel %vm1842, %v1778, %v2162
        %v2227 = vsel %vm1843, %v1779, %v2163
        %v2228 = vsel %vm1844, %v1780, %v2164
        %v2229 = vsel %vm1845, %v1781, %v2165
        %v2230 = vsel %vm1846, %v1782, %v2166
        %v2231 = vsel %vm1847, %v1783, %v2167
        %v2232 = vsel %vm1848, %v1784, %v2168
        %v2233 = vsel %vm1849, %v1785, %v2169
        %v2234 = vsel %vm1850, %v1786, %v2170
        %v2235 = vsel %vm1851, %v1787, %v2171
        %v2236 = vsel %vm1852, %v1788, %v2172
        %v2237 = vsel %vm1853, %v1789, %v2173
        %v2238 = vsel %vm1854, %v1790, %v2174
        %v2239 = vsel %vm1855, %v1791, %v2175
        %v2240 = vsel %vm1856, %v1792, %v2176
        %v2241 = vsel %vm1857, %v1793, %v2177
        %v2242 = vsel %vm1858, %v1794, %v2178
        %v2243 = vsel %vm1859, %v1795, %v2179
        %v2244 = vsel %vm1860, %v1796, %v2180
        %v2245 = vsel %vm1861, %v1797, %v2181
        %v2246 = vsel %vm1862, %v1798, %v2182
        %v2247 = vsel %vm1863, %v1799, %v2183
        %v2248 = vsel %vm1864, %v1800, %v2184
        %v2249 = vsel %vm1865, %v1801, %v2185
        %v2250 = vsel %vm1866, %v1802, %v2186
        %v2251 = vsel %vm1867, %v1803, %v2187
        %v2252 = vsel %vm1868, %v1804, %v2188
        %v2253 = vsel %vm1869, %v1805, %v2189
        %v2254 = vsel %vm1870, %v1806, %v2190
        %v2255 = vsel %vm1871, %v1807, %v2191
        %v2256 = vsel %vm1872, %v1808, %v2192
        %v2257 = vsel %vm1873, %v1809, %v2193
        %v2258 = vsel %vm1874, %v1810, %v2194
        %v2259 = vsel %vm1875, %v1811, %v2195
        %v2260 = vsel %vm1876, %v1812, %v2196
        %v2261 = vsel %vm1877, %v1813, %v2197
        %v2262 = vsel %vm1878, %v1814, %v2198
        %v2263 = vsel %vm1879, %v1815, %v2199
        %v2264 = vsel %vm1880, %v1816, %v2200
        %v2265 = vsel %vm1881, %v1817, %v2201
        %v2266 = vsel %vm1882, %v1818, %v2202
        %v2267 = vsel %vm1883, %v1819, %v2203
        %v2268 = vsel %vm1884, %v1820, %v2204
        %v2269 = vsel %vm1885, %v1821, %v2205
        %v2270 = vsel %vm1886, %v1822, %v2206
        %v2271 = vsel %vm1887, %v1823, %v2207
        %v2272 = vsel %vm1888, %v1824, %v2208
        %v2273 = vsel %vm1889, %v1825, %v2209
        %v2274 = vsel %vm1890, %v1826, %v2210
        %v2275 = vsel %vm1891, %v1827, %v2211
        %v2276 = vsel %vm1892, %v1828, %v2212
        %v2277 = vsel %vm1893, %v1829, %v2213
        %v2278 = vsel %vm1894, %v1830, %v2214
        %v2279 = vsel %vm1895, %v1831, %v2215
        %v2280 = vsel %vm1896, %v1832, %v2216
        %v2281 = vsel %vm1897, %v1833, %v2217
        %v2282 = vsel %vm1898, %v1834, %v2218
        %v2283 = vsel %vm1899, %v1835, %v2219
        %v2284 = vsel %vm1900, %v1836, %v2220
        %v2285 = vsel %vm1901, %v1837, %v2221
        %v2286 = vsel %vm1902, %v1838, %v2222
        %v2287 = vsel %vm1903, %v1839, %v2223
        %v2288 = vmul.f32 %v2224, 1.050701
        %v2289 = vmul.f32 %v2225, 1.050701
        %v2290 = vmul.f32 %v2226, 1.050701
        %v2291 = vmul.f32 %v2227, 1.050701
        %v2292 = vmul.f32 %v2228, 1.050701
        %v2293 = vmul.f32 %v2229, 1.050701
        %v2294 = vmul.f32 %v2230, 1.050701
        %v2295 = vmul.f32 %v2231, 1.050701
        %v2296 = vmul.f32 %v2232, 1.050701
        %v2297 = vmul.f32 %v2233, 1.050701
        %v2298 = vmul.f32 %v2234, 1.050701
        %v2299 = vmul.f32 %v2235, 1.050701
        %v2300 = vmul.f32 %v2236, 1.050701
        %v2301 = vmul.f32 %v2237, 1.050701
        %v2302 = vmul.f32 %v2238, 1.050701
        %v2303 = vmul.f32 %v2239, 1.050701
        %v2304 = vmul.f32 %v2240, 1.050701
        %v2305 = vmul.f32 %v2241, 1.050701
        %v2306 = vmul.f32 %v2242, 1.050701
        %v2307 = vmul.f32 %v2243, 1.050701
        %v2308 = vmul.f32 %v2244, 1.050701
        %v2309 = vmul.f32 %v2245, 1.050701
        %v2310 = vmul.f32 %v2246, 1.050701
        %v2311 = vmul.f32 %v2247, 1.050701
        %v2312 = vmul.f32 %v2248, 1.050701
        %v2313 = vmul.f32 %v2249, 1.050701
        %v2314 = vmul.f32 %v2250, 1.050701
        %v2315 = vmul.f32 %v2251, 1.050701
        %v2316 = vmul.f32 %v2252, 1.050701
        %v2317 = vmul.f32 %v2253, 1.050701
        %v2318 = vmul.f32 %v2254, 1.050701
        %v2319 = vmul.f32 %v2255, 1.050701
        %v2320 = vmul.f32 %v2256, 1.050701
        %v2321 = vmul.f32 %v2257, 1.050701
        %v2322 = vmul.f32 %v2258, 1.050701
        %v2323 = vmul.f32 %v2259, 1.050701
        %v2324 = vmul.f32 %v2260, 1.050701
        %v2325 = vmul.f32 %v2261, 1.050701
        %v2326 = vmul.f32 %v2262, 1.050701
        %v2327 = vmul.f32 %v2263, 1.050701
        %v2328 = vmul.f32 %v2264, 1.050701
        %v2329 = vmul.f32 %v2265, 1.050701
        %v2330 = vmul.f32 %v2266, 1.050701
        %v2331 = vmul.f32 %v2267, 1.050701
        %v2332 = vmul.f32 %v2268, 1.050701
        %v2333 = vmul.f32 %v2269, 1.050701
        %v2334 = vmul.f32 %v2270, 1.050701
        %v2335 = vmul.f32 %v2271, 1.050701
        %v2336 = vmul.f32 %v2272, 1.050701
        %v2337 = vmul.f32 %v2273, 1.050701
        %v2338 = vmul.f32 %v2274, 1.050701
        %v2339 = vmul.f32 %v2275, 1.050701
        %v2340 = vmul.f32 %v2276, 1.050701
        %v2341 = vmul.f32 %v2277, 1.050701
        %v2342 = vmul.f32 %v2278, 1.050701
        %v2343 = vmul.f32 %v2279, 1.050701
        %v2344 = vmul.f32 %v2280, 1.050701
        %v2345 = vmul.f32 %v2281, 1.050701
        %v2346 = vmul.f32 %v2282, 1.050701
        %v2347 = vmul.f32 %v2283, 1.050701
        %v2348 = vmul.f32 %v2284, 1.050701
        %v2349 = vmul.f32 %v2285, 1.050701
        %v2350 = vmul.f32 %v2286, 1.050701
        %v2351 = vmul.f32 %v2287, 1.050701
        %v2352 = vpack.c.bf16 %v2289, %v2288
        %v2353 = vpack.c.bf16 %v2291, %v2290
        %v2354 = vpack.c.bf16 %v2293, %v2292
        %v2355 = vpack.c.bf16 %v2295, %v2294
        %v2356 = vpack.c.bf16 %v2297, %v2296
        %v2357 = vpack.c.bf16 %v2299, %v2298
        %v2358 = vpack.c.bf16 %v2301, %v2300
        %v2359 = vpack.c.bf16 %v2303, %v2302
        %v2360 = vpack.c.bf16 %v2305, %v2304
        %v2361 = vpack.c.bf16 %v2307, %v2306
        %v2362 = vpack.c.bf16 %v2309, %v2308
        %v2363 = vpack.c.bf16 %v2311, %v2310
        %v2364 = vpack.c.bf16 %v2313, %v2312
        %v2365 = vpack.c.bf16 %v2315, %v2314
        %v2366 = vpack.c.bf16 %v2317, %v2316
        %v2367 = vpack.c.bf16 %v2319, %v2318
        %v2368 = vpack.c.bf16 %v2321, %v2320
        %v2369 = vpack.c.bf16 %v2323, %v2322
        %v2370 = vpack.c.bf16 %v2325, %v2324
        %v2371 = vpack.c.bf16 %v2327, %v2326
        %v2372 = vpack.c.bf16 %v2329, %v2328
        %v2373 = vpack.c.bf16 %v2331, %v2330
        %v2374 = vpack.c.bf16 %v2333, %v2332
        %v2375 = vpack.c.bf16 %v2335, %v2334
        %v2376 = vpack.c.bf16 %v2337, %v2336
        %v2377 = vpack.c.bf16 %v2339, %v2338
        %v2378 = vpack.c.bf16 %v2341, %v2340
        %v2379 = vpack.c.bf16 %v2343, %v2342
        %v2380 = vpack.c.bf16 %v2345, %v2344
        %v2381 = vpack.c.bf16 %v2347, %v2346
        %v2382 = vpack.c.bf16 %v2349, %v2348
        %v2383 = vpack.c.bf16 %v2351, %v2350
        %v2384 = vld [vmem:[%s3] sm:$0xf]
        %v2385 = vld [vmem:[%s3 + $0x4] sm:$0xf]
        %v2386 = vld [vmem:[%s3 + $0x8] sm:$0xf]
        %v2387 = vld [vmem:[%s3 + $0xc] sm:$0xf]
        %v2388 = vld [vmem:[%s3 + $0x10] sm:$0xf]
        %v2389 = vld [vmem:[%s3 + $0x14] sm:$0xf]
        %v2390 = vld [vmem:[%s3 + $0x18] sm:$0xf]
        %v2391 = vld [vmem:[%s3 + $0x1c] sm:$0xf]
        %v2392 = vld [vmem:[%s3 + $0x20] sm:$0xf]
        %v2393 = vld [vmem:[%s3 + $0x24] sm:$0xf]
        %v2394 = vld [vmem:[%s3 + $0x28] sm:$0xf]
        %v2395 = vld [vmem:[%s3 + $0x2c] sm:$0xf]
        %v2396 = vld [vmem:[%s3 + $0x30] sm:$0xf]
        %v2397 = vld [vmem:[%s3 + $0x34] sm:$0xf]
        %v2398 = vld [vmem:[%s3 + $0x38] sm:$0xf]
        %v2399 = vld [vmem:[%s3 + $0x3c] sm:$0xf]
        %v2400 = vld [vmem:[%s4] sm:$0x1]
        %v2402 = vlaneseq
        %v2403 = vshrl.u32 %v2402, 7
        %v2404 = vsub.s32 0, %v2403
        %v2405 = vrot.slane %v2400, %v2404
        %v2423 = vunpack.c.l.b16 %v2384
        %v2424 = vunpack.c.l.b16 %v2385
        %v2425 = vunpack.c.l.b16 %v2386
        %v2426 = vunpack.c.l.b16 %v2387
        %v2427 = vunpack.c.l.b16 %v2388
        %v2428 = vunpack.c.l.b16 %v2389
        %v2429 = vunpack.c.l.b16 %v2390
        %v2430 = vunpack.c.l.b16 %v2391
        %v2431 = vunpack.c.l.b16 %v2392
        %v2432 = vunpack.c.l.b16 %v2393
        %v2433 = vunpack.c.l.b16 %v2394
        %v2434 = vunpack.c.l.b16 %v2395
        %v2435 = vunpack.c.l.b16 %v2396
        %v2436 = vunpack.c.l.b16 %v2397
        %v2437 = vunpack.c.l.b16 %v2398
        %v2438 = vunpack.c.l.b16 %v2399
        %v2439 = vpack.c.b16 %v2424, %v2423
        %v2440 = vpack.c.b16 %v2426, %v2425
        %v2441 = vpack.c.b16 %v2428, %v2427
        %v2442 = vpack.c.b16 %v2430, %v2429
        %v2443 = vpack.c.b16 %v2432, %v2431
        %v2444 = vpack.c.b16 %v2434, %v2433
        %v2445 = vpack.c.b16 %v2436, %v2435
        %v2446 = vpack.c.b16 %v2438, %v2437
        %2455 = vmatprep.subr.bf16.mxu0 0
        %2456 = vmatpush1.bf16.msra.mxu0 %v2439
        %2457 = vmatprep.subr.bf16.mxu0 0
        %2458 = vmatpush1.bf16.msra.mxu0 %v2440
        %2459 = vmatprep.subr.bf16.mxu0 0
        %2460 = vmatpush1.bf16.msra.mxu0 %v2441
        %2461 = vmatprep.subr.bf16.mxu0 0
        %2462 = vmatpush1.bf16.msra.mxu0 %v2442
        %2463 = vmatprep.subr.bf16.mxu0 0
        %2464 = vmatpush1.bf16.msra.mxu0 %v2443
        %2465 = vmatprep.subr.bf16.mxu0 0
        %2466 = vmatpush1.bf16.msra.mxu0 %v2444
        %2467 = vmatprep.subr.bf16.mxu0 0
        %2468 = vmatpush1.bf16.msra.mxu0 %v2445
        %2469 = vmatprep.subr.bf16.mxu0 0
        %2470 = vmatpush1.bf16.msra.mxu0 %v2446
        %2471 = vmatprep.subr.bf16.mxu0 0
        %2472 = vmatpush1.bf16.msra.mxu0 0
        %2473 = vmatprep.subr.bf16.mxu0 0
        %2474 = vmatpush1.bf16.msra.mxu0 0
        %2475 = vmatprep.subr.bf16.mxu0 0
        %2476 = vmatpush1.bf16.msra.mxu0 0
        %2477 = vmatprep.subr.bf16.mxu0 0
        %2478 = vmatpush1.bf16.msra.mxu0 0
        %2479 = vmatprep.subr.bf16.mxu0 0
        %2480 = vmatpush1.bf16.msra.mxu0 0
        %2481 = vmatprep.subr.bf16.mxu0 0
        %2482 = vmatpush1.bf16.msra.mxu0 0
        %2483 = vmatprep.subr.bf16.mxu0 0
        %2484 = vmatpush1.bf16.msra.mxu0 0
        %2485 = vmatprep.subr.bf16.mxu0 0
        %2486 = vmatpush1.bf16.msra.mxu0 0
        %2487 = vmatprep.mubr.bf16.mxu0 0
        %2488 = vmatmul.mubr.bf16.gmra.mrb[0].mxu0 %v2352
        %v2489 = vpop.f32.mrb[0].mxu0
        %v2490 = vadd.f32 %v2405, %v2489
        %v2491 = vpop.f32.mrb[0].mxu0
        %v2492 = vpop.f32.mrb[0].mxu0
        %v2493 = vadd.f32 %v2405, %v2492
        %v2494 = vpop.f32.mrb[0].mxu0
        %2495 = vmatprep.mubr.bf16.mxu0 0
        %2496 = vmatmul.mubr.bf16.gmra.mrb[0].mxu0 %v2353
        %v2497 = vpop.f32.mrb[0].mxu0
        %v2498 = vadd.f32 %v2405, %v2497
        %v2499 = vpop.f32.mrb[0].mxu0
        %v2500 = vpop.f32.mrb[0].mxu0
        %v2501 = vadd.f32 %v2405, %v2500
        %v2502 = vpop.f32.mrb[0].mxu0
        %2503 = vmatprep.mubr.bf16.mxu0 0
        %2504 = vmatmul.mubr.bf16.gmra.mrb[0].mxu0 %v2354
        %v2505 = vpop.f32.mrb[0].mxu0
        %v2506 = vadd.f32 %v2405, %v2505
        %v2507 = vpop.f32.mrb[0].mxu0
        %v2508 = vpop.f32.mrb[0].mxu0
        %v2509 = vadd.f32 %v2405, %v2508
        %v2510 = vpop.f32.mrb[0].mxu0
        %2511 = vmatprep.mubr.bf16.mxu0 0
        %2512 = vmatmul.mubr.bf16.gmra.mrb[0].mxu0 %v2355
        %v2513 = vpop.f32.mrb[0].mxu0
        %v2514 = vadd.f32 %v2405, %v2513
        %v2515 = vpop.f32.mrb[0].mxu0
        %v2516 = vpop.f32.mrb[0].mxu0
        %v2517 = vadd.f32 %v2405, %v2516
        %v2518 = vpop.f32.mrb[0].mxu0
        %2519 = vmatprep.mubr.bf16.mxu0 0
        %2520 = vmatmul.mubr.bf16.gmra.mrb[0].mxu0 %v2356
        %v2521 = vpop.f32.mrb[0].mxu0
        %v2522 = vadd.f32 %v2405, %v2521
        %v2523 = vpop.f32.mrb[0].mxu0
        %v2524 = vpop.f32.mrb[0].mxu0
        %v2525 = vadd.f32 %v2405, %v2524
        %v2526 = vpop.f32.mrb[0].mxu0
        %2527 = vmatprep.mubr.bf16.mxu0 0
        %2528 = vmatmul.mubr.bf16.gmra.mrb[0].mxu0 %v2357
        %v2529 = vpop.f32.mrb[0].mxu0
        %v2530 = vadd.f32 %v2405, %v2529
        %v2531 = vpop.f32.mrb[0].mxu0
        %v2532 = vpop.f32.mrb[0].mxu0
        %v2533 = vadd.f32 %v2405, %v2532
        %v2534 = vpop.f32.mrb[0].mxu0
        %2535 = vmatprep.mubr.bf16.mxu0 0
        %2536 = vmatmul.mubr.bf16.gmra.mrb[0].mxu0 %v2358
        %v2537 = vpop.f32.mrb[0].mxu0
        %v2538 = vadd.f32 %v2405, %v2537
        %v2539 = vpop.f32.mrb[0].mxu0
        %v2540 = vpop.f32.mrb[0].mxu0
        %v2541 = vadd.f32 %v2405, %v2540
        %v2542 = vpop.f32.mrb[0].mxu0
        %2543 = vmatprep.mubr.bf16.mxu0 0
        %2544 = vmatmul.mubr.bf16.gmra.mrb[0].mxu0 %v2359
        %v2545 = vpop.f32.mrb[0].mxu0
        %v2546 = vadd.f32 %v2405, %v2545
        %v2547 = vpop.f32.mrb[0].mxu0
        %v2548 = vpop.f32.mrb[0].mxu0
        %v2549 = vadd.f32 %v2405, %v2548
        %v2550 = vpop.f32.mrb[0].mxu0
        %2551 = vmatprep.mubr.bf16.mxu0 0
        %2552 = vmatmul.mubr.bf16.gmra.mrb[0].mxu0 %v2360
        %v2553 = vpop.f32.mrb[0].mxu0
        %v2554 = vadd.f32 %v2405, %v2553
        %v2555 = vpop.f32.mrb[0].mxu0
        %v2556 = vpop.f32.mrb[0].mxu0
        %v2557 = vadd.f32 %v2405, %v2556
        %v2558 = vpop.f32.mrb[0].mxu0
        %2559 = vmatprep.mubr.bf16.mxu0 0
        %2560 = vmatmul.mubr.bf16.gmra.mrb[0].mxu0 %v2361
        %v2561 = vpop.f32.mrb[0].mxu0
        %v2562 = vadd.f32 %v2405, %v2561
        %v2563 = vpop.f32.mrb[0].mxu0
        %v2564 = vpop.f32.mrb[0].mxu0
        %v2565 = vadd.f32 %v2405, %v2564
        %v2566 = vpop.f32.mrb[0].mxu0
        %2567 = vmatprep.mubr.bf16.mxu0 0
        %2568 = vmatmul.mubr.bf16.gmra.mrb[0].mxu0 %v2362
        %v2569 = vpop.f32.mrb[0].mxu0
        %v2570 = vadd.f32 %v2405, %v2569
        %v2571 = vpop.f32.mrb[0].mxu0
        %v2572 = vpop.f32.mrb[0].mxu0
        %v2573 = vadd.f32 %v2405, %v2572
        %v2574 = vpop.f32.mrb[0].mxu0
        %2575 = vmatprep.mubr.bf16.mxu0 0
        %2576 = vmatmul.mubr.bf16.gmra.mrb[0].mxu0 %v2363
        %v2577 = vpop.f32.mrb[0].mxu0
        %v2578 = vadd.f32 %v2405, %v2577
        %v2579 = vpop.f32.mrb[0].mxu0
        %v2580 = vpop.f32.mrb[0].mxu0
        %v2581 = vadd.f32 %v2405, %v2580
        %v2582 = vpop.f32.mrb[0].mxu0
        %2583 = vmatprep.mubr.bf16.mxu0 0
        %2584 = vmatmul.mubr.bf16.gmra.mrb[0].mxu0 %v2364
        %v2585 = vpop.f32.mrb[0].mxu0
        %v2586 = vadd.f32 %v2405, %v2585
        %v2587 = vpop.f32.mrb[0].mxu0
        %v2588 = vpop.f32.mrb[0].mxu0
        %v2589 = vadd.f32 %v2405, %v2588
        %v2590 = vpop.f32.mrb[0].mxu0
        %2591 = vmatprep.mubr.bf16.mxu0 0
        %2592 = vmatmul.mubr.bf16.gmra.mrb[0].mxu0 %v2365
        %v2593 = vpop.f32.mrb[0].mxu0
        %v2594 = vadd.f32 %v2405, %v2593
        %v2595 = vpop.f32.mrb[0].mxu0
        %v2596 = vpop.f32.mrb[0].mxu0
        %v2597 = vadd.f32 %v2405, %v2596
        %v2598 = vpop.f32.mrb[0].mxu0
        %2599 = vmatprep.mubr.bf16.mxu0 0
        %2600 = vmatmul.mubr.bf16.gmra.mrb[0].mxu0 %v2366
        %v2601 = vpop.f32.mrb[0].mxu0
        %v2602 = vadd.f32 %v2405, %v2601
        %v2603 = vpop.f32.mrb[0].mxu0
        %v2604 = vpop.f32.mrb[0].mxu0
        %v2605 = vadd.f32 %v2405, %v2604
        %v2606 = vpop.f32.mrb[0].mxu0
        %2607 = vmatprep.mubr.bf16.mxu0 0
        %2608 = vmatmul.mubr.bf16.gmra.mrb[0].mxu0 %v2367
        %v2609 = vpop.f32.mrb[0].mxu0
        %v2610 = vadd.f32 %v2405, %v2609
        %v2611 = vpop.f32.mrb[0].mxu0
        %v2612 = vpop.f32.mrb[0].mxu0
        %v2613 = vadd.f32 %v2405, %v2612
        %v2614 = vpop.f32.mrb[0].mxu0
        %2615 = vmatprep.mubr.bf16.mxu0 0
        %2616 = vmatmul.mubr.bf16.gmra.mrb[0].mxu0 %v2368
        %v2617 = vpop.f32.mrb[0].mxu0
        %v2618 = vadd.f32 %v2405, %v2617
        %v2619 = vpop.f32.mrb[0].mxu0
        %v2620 = vpop.f32.mrb[0].mxu0
        %v2621 = vadd.f32 %v2405, %v2620
        %v2622 = vpop.f32.mrb[0].mxu0
        %2623 = vmatprep.mubr.bf16.mxu0 0
        %2624 = vmatmul.mubr.bf16.gmra.mrb[0].mxu0 %v2369
        %v2625 = vpop.f32.mrb[0].mxu0
        %v2626 = vadd.f32 %v2405, %v2625
        %v2627 = vpop.f32.mrb[0].mxu0
        %v2628 = vpop.f32.mrb[0].mxu0
        %v2629 = vadd.f32 %v2405, %v2628
        %v2630 = vpop.f32.mrb[0].mxu0
        %2631 = vmatprep.mubr.bf16.mxu0 0
        %2632 = vmatmul.mubr.bf16.gmra.mrb[0].mxu0 %v2370
        %v2633 = vpop.f32.mrb[0].mxu0
        %v2634 = vadd.f32 %v2405, %v2633
        %v2635 = vpop.f32.mrb[0].mxu0
        %v2636 = vpop.f32.mrb[0].mxu0
        %v2637 = vadd.f32 %v2405, %v2636
        %v2638 = vpop.f32.mrb[0].mxu0
        %2639 = vmatprep.mubr.bf16.mxu0 0
        %2640 = vmatmul.mubr.bf16.gmra.mrb[0].mxu0 %v2371
        %v2641 = vpop.f32.mrb[0].mxu0
        %v2642 = vadd.f32 %v2405, %v2641
        %v2643 = vpop.f32.mrb[0].mxu0
        %v2644 = vpop.f32.mrb[0].mxu0
        %v2645 = vadd.f32 %v2405, %v2644
        %v2646 = vpop.f32.mrb[0].mxu0
        %2647 = vmatprep.mubr.bf16.mxu0 0
        %2648 = vmatmul.mubr.bf16.gmra.mrb[0].mxu0 %v2372
        %v2649 = vpop.f32.mrb[0].mxu0
        %v2650 = vadd.f32 %v2405, %v2649
        %v2651 = vpop.f32.mrb[0].mxu0
        %v2652 = vpop.f32.mrb[0].mxu0
        %v2653 = vadd.f32 %v2405, %v2652
        %v2654 = vpop.f32.mrb[0].mxu0
        %2655 = vmatprep.mubr.bf16.mxu0 0
        %2656 = vmatmul.mubr.bf16.gmra.mrb[0].mxu0 %v2373
        %v2657 = vpop.f32.mrb[0].mxu0
        %v2658 = vadd.f32 %v2405, %v2657
        %v2659 = vpop.f32.mrb[0].mxu0
        %v2660 = vpop.f32.mrb[0].mxu0
        %v2661 = vadd.f32 %v2405, %v2660
        %v2662 = vpop.f32.mrb[0].mxu0
        %2663 = vmatprep.mubr.bf16.mxu0 0
        %2664 = vmatmul.mubr.bf16.gmra.mrb[0].mxu0 %v2374
        %v2665 = vpop.f32.mrb[0].mxu0
        %v2666 = vadd.f32 %v2405, %v2665
        %v2667 = vpop.f32.mrb[0].mxu0
        %v2668 = vpop.f32.mrb[0].mxu0
        %v2669 = vadd.f32 %v2405, %v2668
        %v2670 = vpop.f32.mrb[0].mxu0
        %2671 = vmatprep.mubr.bf16.mxu0 0
        %2672 = vmatmul.mubr.bf16.gmra.mrb[0].mxu0 %v2375
        %v2673 = vpop.f32.mrb[0].mxu0
        %v2674 = vadd.f32 %v2405, %v2673
        %v2675 = vpop.f32.mrb[0].mxu0
        %v2676 = vpop.f32.mrb[0].mxu0
        %v2677 = vadd.f32 %v2405, %v2676
        %v2678 = vpop.f32.mrb[0].mxu0
        %2679 = vmatprep.mubr.bf16.mxu0 0
        %2680 = vmatmul.mubr.bf16.gmra.mrb[0].mxu0 %v2376
        %v2681 = vpop.f32.mrb[0].mxu0
        %v2682 = vadd.f32 %v2405, %v2681
        %v2683 = vpop.f32.mrb[0].mxu0
        %v2684 = vpop.f32.mrb[0].mxu0
        %v2685 = vadd.f32 %v2405, %v2684
        %v2686 = vpop.f32.mrb[0].mxu0
        %2687 = vmatprep.mubr.bf16.mxu0 0
        %2688 = vmatmul.mubr.bf16.gmra.mrb[0].mxu0 %v2377
        %v2689 = vpop.f32.mrb[0].mxu0
        %v2690 = vadd.f32 %v2405, %v2689
        %v2691 = vpop.f32.mrb[0].mxu0
        %v2692 = vpop.f32.mrb[0].mxu0
        %v2693 = vadd.f32 %v2405, %v2692
        %v2694 = vpop.f32.mrb[0].mxu0
        %2695 = vmatprep.mubr.bf16.mxu0 0
        %2696 = vmatmul.mubr.bf16.gmra.mrb[0].mxu0 %v2378
        %v2697 = vpop.f32.mrb[0].mxu0
        %v2698 = vadd.f32 %v2405, %v2697
        %v2699 = vpop.f32.mrb[0].mxu0
        %v2700 = vpop.f32.mrb[0].mxu0
        %v2701 = vadd.f32 %v2405, %v2700
        %v2702 = vpop.f32.mrb[0].mxu0
        %2703 = vmatprep.mubr.bf16.mxu0 0
        %2704 = vmatmul.mubr.bf16.gmra.mrb[0].mxu0 %v2379
        %v2705 = vpop.f32.mrb[0].mxu0
        %v2706 = vadd.f32 %v2405, %v2705
        %v2707 = vpop.f32.mrb[0].mxu0
        %v2708 = vpop.f32.mrb[0].mxu0
        %v2709 = vadd.f32 %v2405, %v2708
        %v2710 = vpop.f32.mrb[0].mxu0
        %2711 = vmatprep.mubr.bf16.mxu0 0
        %2712 = vmatmul.mubr.bf16.gmra.mrb[0].mxu0 %v2380
        %v2713 = vpop.f32.mrb[0].mxu0
        %v2714 = vadd.f32 %v2405, %v2713
        %v2715 = vpop.f32.mrb[0].mxu0
        %v2716 = vpop.f32.mrb[0].mxu0
        %v2717 = vadd.f32 %v2405, %v2716
        %v2718 = vpop.f32.mrb[0].mxu0
        %2719 = vmatprep.mubr.bf16.mxu0 0
        %2720 = vmatmul.mubr.bf16.gmra.mrb[0].mxu0 %v2381
        %v2721 = vpop.f32.mrb[0].mxu0
        %v2722 = vadd.f32 %v2405, %v2721
        %v2723 = vpop.f32.mrb[0].mxu0
        %v2724 = vpop.f32.mrb[0].mxu0
        %v2725 = vadd.f32 %v2405, %v2724
        %v2726 = vpop.f32.mrb[0].mxu0
        %2727 = vmatprep.mubr.bf16.mxu0 0
        %2728 = vmatmul.mubr.bf16.gmra.mrb[0].mxu0 %v2382
        %v2729 = vpop.f32.mrb[0].mxu0
        %v2730 = vadd.f32 %v2405, %v2729
        %v2731 = vpop.f32.mrb[0].mxu0
        %v2732 = vpop.f32.mrb[0].mxu0
        %v2733 = vadd.f32 %v2405, %v2732
        %v2734 = vpop.f32.mrb[0].mxu0
        %2735 = vmatprep.mubr.bf16.mxu0 0
        %2736 = vmatmul.mubr.bf16.gmra.mrb[0].mxu0 %v2383
        %v2737 = vpop.f32.mrb[0].mxu0
        %v2738 = vadd.f32 %v2405, %v2737
        %v2739 = vpop.f32.mrb[0].mxu0
        %v2740 = vpop.f32.mrb[0].mxu0
        %v2741 = vadd.f32 %v2405, %v2740
        %v2742 = vpop.f32.mrb[0].mxu0
        %2743 = vdwg.mxu0
        %vm2744 = vcmp.gt.f32.partialorder %v2490, 0.0
        %vm2745 = vcmp.gt.f32.partialorder %v2493, 0.0
        %vm2746 = vcmp.gt.f32.partialorder %v2498, 0.0
        %vm2747 = vcmp.gt.f32.partialorder %v2501, 0.0
        %vm2748 = vcmp.gt.f32.partialorder %v2506, 0.0
        %vm2749 = vcmp.gt.f32.partialorder %v2509, 0.0
        %vm2750 = vcmp.gt.f32.partialorder %v2514, 0.0
        %vm2751 = vcmp.gt.f32.partialorder %v2517, 0.0
        %vm2752 = vcmp.gt.f32.partialorder %v2522, 0.0
        %vm2753 = vcmp.gt.f32.partialorder %v2525, 0.0
        %vm2754 = vcmp.gt.f32.partialorder %v2530, 0.0
        %vm2755 = vcmp.gt.f32.partialorder %v2533, 0.0
        %vm2756 = vcmp.gt.f32.partialorder %v2538, 0.0
        %vm2757 = vcmp.gt.f32.partialorder %v2541, 0.0
        %vm2758 = vcmp.gt.f32.partialorder %v2546, 0.0
        %vm2759 = vcmp.gt.f32.partialorder %v2549, 0.0
        %vm2760 = vcmp.gt.f32.partialorder %v2554, 0.0
        %vm2761 = vcmp.gt.f32.partialorder %v2557, 0.0
        %vm2762 = vcmp.gt.f32.partialorder %v2562, 0.0
        %vm2763 = vcmp.gt.f32.partialorder %v2565, 0.0
        %vm2764 = vcmp.gt.f32.partialorder %v2570, 0.0
        %vm2765 = vcmp.gt.f32.partialorder %v2573, 0.0
        %vm2766 = vcmp.gt.f32.partialorder %v2578, 0.0
        %vm2767 = vcmp.gt.f32.partialorder %v2581, 0.0
        %vm2768 = vcmp.gt.f32.partialorder %v2586, 0.0
        %vm2769 = vcmp.gt.f32.partialorder %v2589, 0.0
        %vm2770 = vcmp.gt.f32.partialorder %v2594, 0.0
        %vm2771 = vcmp.gt.f32.partialorder %v2597, 0.0
        %vm2772 = vcmp.gt.f32.partialorder %v2602, 0.0
        %vm2773 = vcmp.gt.f32.partialorder %v2605, 0.0
        %vm2774 = vcmp.gt.f32.partialorder %v2610, 0.0
        %vm2775 = vcmp.gt.f32.partialorder %v2613, 0.0
        %vm2776 = vcmp.gt.f32.partialorder %v2618, 0.0
        %vm2777 = vcmp.gt.f32.partialorder %v2621, 0.0
        %vm2778 = vcmp.gt.f32.partialorder %v2626, 0.0
        %vm2779 = vcmp.gt.f32.partialorder %v2629, 0.0
        %vm2780 = vcmp.gt.f32.partialorder %v2634, 0.0
        %vm2781 = vcmp.gt.f32.partialorder %v2637, 0.0
        %vm2782 = vcmp.gt.f32.partialorder %v2642, 0.0
        %vm2783 = vcmp.gt.f32.partialorder %v2645, 0.0
        %vm2784 = vcmp.gt.f32.partialorder %v2650, 0.0
        %vm2785 = vcmp.gt.f32.partialorder %v2653, 0.0
        %vm2786 = vcmp.gt.f32.partialorder %v2658, 0.0
        %vm2787 = vcmp.gt.f32.partialorder %v2661, 0.0
        %vm2788 = vcmp.gt.f32.partialorder %v2666, 0.0
        %vm2789 = vcmp.gt.f32.partialorder %v2669, 0.0
        %vm2790 = vcmp.gt.f32.partialorder %v2674, 0.0
        %vm2791 = vcmp.gt.f32.partialorder %v2677, 0.0
        %vm2792 = vcmp.gt.f32.partialorder %v2682, 0.0
        %vm2793 = vcmp.gt.f32.partialorder %v2685, 0.0
        %vm2794 = vcmp.gt.f32.partialorder %v2690, 0.0
        %vm2795 = vcmp.gt.f32.partialorder %v2693, 0.0
        %vm2796 = vcmp.gt.f32.partialorder %v2698, 0.0
        %vm2797 = vcmp.gt.f32.partialorder %v2701, 0.0
        %vm2798 = vcmp.gt.f32.partialorder %v2706, 0.0
        %vm2799 = vcmp.gt.f32.partialorder %v2709, 0.0
        %vm2800 = vcmp.gt.f32.partialorder %v2714, 0.0
        %vm2801 = vcmp.gt.f32.partialorder %v2717, 0.0
        %vm2802 = vcmp.gt.f32.partialorder %v2722, 0.0
        %vm2803 = vcmp.gt.f32.partialorder %v2725, 0.0
        %vm2804 = vcmp.gt.f32.partialorder %v2730, 0.0
        %vm2805 = vcmp.gt.f32.partialorder %v2733, 0.0
        %vm2806 = vcmp.gt.f32.partialorder %v2738, 0.0
        %vm2807 = vcmp.gt.f32.partialorder %v2741, 0.0
        %v2808 = vmin.f32 %v2490, 0.0
        %v2809 = vmin.f32 %v2493, 0.0
        %v2810 = vmin.f32 %v2498, 0.0
        %v2811 = vmin.f32 %v2501, 0.0
        %v2812 = vmin.f32 %v2506, 0.0
        %v2813 = vmin.f32 %v2509, 0.0
        %v2814 = vmin.f32 %v2514, 0.0
        %v2815 = vmin.f32 %v2517, 0.0
        %v2816 = vmin.f32 %v2522, 0.0
        %v2817 = vmin.f32 %v2525, 0.0
        %v2818 = vmin.f32 %v2530, 0.0
        %v2819 = vmin.f32 %v2533, 0.0
        %v2820 = vmin.f32 %v2538, 0.0
        %v2821 = vmin.f32 %v2541, 0.0
        %v2822 = vmin.f32 %v2546, 0.0
        %v2823 = vmin.f32 %v2549, 0.0
        %v2824 = vmin.f32 %v2554, 0.0
        %v2825 = vmin.f32 %v2557, 0.0
        %v2826 = vmin.f32 %v2562, 0.0
        %v2827 = vmin.f32 %v2565, 0.0
        %v2828 = vmin.f32 %v2570, 0.0
        %v2829 = vmin.f32 %v2573, 0.0
        %v2830 = vmin.f32 %v2578, 0.0
        %v2831 = vmin.f32 %v2581, 0.0
        %v2832 = vmin.f32 %v2586, 0.0
        %v2833 = vmin.f32 %v2589, 0.0
        %v2834 = vmin.f32 %v2594, 0.0
        %v2835 = vmin.f32 %v2597, 0.0
        %v2836 = vmin.f32 %v2602, 0.0
        %v2837 = vmin.f32 %v2605, 0.0
        %v2838 = vmin.f32 %v2610, 0.0
        %v2839 = vmin.f32 %v2613, 0.0
        %v2840 = vmin.f32 %v2618, 0.0
        %v2841 = vmin.f32 %v2621, 0.0
        %v2842 = vmin.f32 %v2626, 0.0
        %v2843 = vmin.f32 %v2629, 0.0
        %v2844 = vmin.f32 %v2634, 0.0
        %v2845 = vmin.f32 %v2637, 0.0
        %v2846 = vmin.f32 %v2642, 0.0
        %v2847 = vmin.f32 %v2645, 0.0
        %v2848 = vmin.f32 %v2650, 0.0
        %v2849 = vmin.f32 %v2653, 0.0
        %v2850 = vmin.f32 %v2658, 0.0
        %v2851 = vmin.f32 %v2661, 0.0
        %v2852 = vmin.f32 %v2666, 0.0
        %v2853 = vmin.f32 %v2669, 0.0
        %v2854 = vmin.f32 %v2674, 0.0
        %v2855 = vmin.f32 %v2677, 0.0
        %v2856 = vmin.f32 %v2682, 0.0
        %v2857 = vmin.f32 %v2685, 0.0
        %v2858 = vmin.f32 %v2690, 0.0
        %v2859 = vmin.f32 %v2693, 0.0
        %v2860 = vmin.f32 %v2698, 0.0
        %v2861 = vmin.f32 %v2701, 0.0
        %v2862 = vmin.f32 %v2706, 0.0
        %v2863 = vmin.f32 %v2709, 0.0
        %v2864 = vmin.f32 %v2714, 0.0
        %v2865 = vmin.f32 %v2717, 0.0
        %v2866 = vmin.f32 %v2722, 0.0
        %v2867 = vmin.f32 %v2725, 0.0
        %v2868 = vmin.f32 %v2730, 0.0
        %v2869 = vmin.f32 %v2733, 0.0
        %v2870 = vmin.f32 %v2738, 0.0
        %v2871 = vmin.f32 %v2741, 0.0
        %v2872 = vmul.f32 %v2808, 1.442695
        %v2873 = vpow.pop %v2872
        %v2874 = vmul.f32 %v2809, 1.442695
        %v2875 = vpow.pop %v2874
        %v2876 = vmul.f32 %v2810, 1.442695
        %v2877 = vpow.pop %v2876
        %v2878 = vmul.f32 %v2811, 1.442695
        %v2879 = vpow.pop %v2878
        %v2880 = vmul.f32 %v2812, 1.442695
        %v2881 = vpow.pop %v2880
        %v2882 = vmul.f32 %v2813, 1.442695
        %v2883 = vpow.pop %v2882
        %v2884 = vmul.f32 %v2814, 1.442695
        %v2885 = vpow.pop %v2884
        %v2886 = vmul.f32 %v2815, 1.442695
        %v2887 = vpow.pop %v2886
        %v2888 = vmul.f32 %v2816, 1.442695
        %v2889 = vpow.pop %v2888
        %v2890 = vmul.f32 %v2817, 1.442695
        %v2891 = vpow.pop %v2890
        %v2892 = vmul.f32 %v2818, 1.442695
        %v2893 = vpow.pop %v2892
        %v2894 = vmul.f32 %v2819, 1.442695
        %v2895 = vpow.pop %v2894
        %v2896 = vmul.f32 %v2820, 1.442695
        %v2897 = vpow.pop %v2896
        %v2898 = vmul.f32 %v2821, 1.442695
        %v2899 = vpow.pop %v2898
        %v2900 = vmul.f32 %v2822, 1.442695
        %v2901 = vpow.pop %v2900
        %v2902 = vmul.f32 %v2823, 1.442695
        %v2903 = vpow.pop %v2902
        %v2904 = vmul.f32 %v2824, 1.442695
        %v2905 = vpow.pop %v2904
        %v2906 = vmul.f32 %v2825, 1.442695
        %v2907 = vpow.pop %v2906
        %v2908 = vmul.f32 %v2826, 1.442695
        %v2909 = vpow.pop %v2908
        %v2910 = vmul.f32 %v2827, 1.442695
        %v2911 = vpow.pop %v2910
        %v2912 = vmul.f32 %v2828, 1.442695
        %v2913 = vpow.pop %v2912
        %v2914 = vmul.f32 %v2829, 1.442695
        %v2915 = vpow.pop %v2914
        %v2916 = vmul.f32 %v2830, 1.442695
        %v2917 = vpow.pop %v2916
        %v2918 = vmul.f32 %v2831, 1.442695
        %v2919 = vpow.pop %v2918
        %v2920 = vmul.f32 %v2832, 1.442695
        %v2921 = vpow.pop %v2920
        %v2922 = vmul.f32 %v2833, 1.442695
        %v2923 = vpow.pop %v2922
        %v2924 = vmul.f32 %v2834, 1.442695
        %v2925 = vpow.pop %v2924
        %v2926 = vmul.f32 %v2835, 1.442695
        %v2927 = vpow.pop %v2926
        %v2928 = vmul.f32 %v2836, 1.442695
        %v2929 = vpow.pop %v2928
        %v2930 = vmul.f32 %v2837, 1.442695
        %v2931 = vpow.pop %v2930
        %v2932 = vmul.f32 %v2838, 1.442695
        %v2933 = vpow.pop %v2932
        %v2934 = vmul.f32 %v2839, 1.442695
        %v2935 = vpow.pop %v2934
        %v2936 = vmul.f32 %v2840, 1.442695
        %v2937 = vpow.pop %v2936
        %v2938 = vmul.f32 %v2841, 1.442695
        %v2939 = vpow.pop %v2938
        %v2940 = vmul.f32 %v2842, 1.442695
        %v2941 = vpow.pop %v2940
        %v2942 = vmul.f32 %v2843, 1.442695
        %v2943 = vpow.pop %v2942
        %v2944 = vmul.f32 %v2844, 1.442695
        %v2945 = vpow.pop %v2944
        %v2946 = vmul.f32 %v2845, 1.442695
        %v2947 = vpow.pop %v2946
        %v2948 = vmul.f32 %v2846, 1.442695
        %v2949 = vpow.pop %v2948
        %v2950 = vmul.f32 %v2847, 1.442695
        %v2951 = vpow.pop %v2950
        %v2952 = vmul.f32 %v2848, 1.442695
        %v2953 = vpow.pop %v2952
        %v2954 = vmul.f32 %v2849, 1.442695
        %v2955 = vpow.pop %v2954
        %v2956 = vmul.f32 %v2850, 1.442695
        %v2957 = vpow.pop %v2956
        %v2958 = vmul.f32 %v2851, 1.442695
        %v2959 = vpow.pop %v2958
        %v2960 = vmul.f32 %v2852, 1.442695
        %v2961 = vpow.pop %v2960
        %v2962 = vmul.f32 %v2853, 1.442695
        %v2963 = vpow.pop %v2962
        %v2964 = vmul.f32 %v2854, 1.442695
        %v2965 = vpow.pop %v2964
        %v2966 = vmul.f32 %v2855, 1.442695
        %v2967 = vpow.pop %v2966
        %v2968 = vmul.f32 %v2856, 1.442695
        %v2969 = vpow.pop %v2968
        %v2970 = vmul.f32 %v2857, 1.442695
        %v2971 = vpow.pop %v2970
        %v2972 = vmul.f32 %v2858, 1.442695
        %v2973 = vpow.pop %v2972
        %v2974 = vmul.f32 %v2859, 1.442695
        %v2975 = vpow.pop %v2974
        %v2976 = vmul.f32 %v2860, 1.442695
        %v2977 = vpow.pop %v2976
        %v2978 = vmul.f32 %v2861, 1.442695
        %v2979 = vpow.pop %v2978
        %v2980 = vmul.f32 %v2862, 1.442695
        %v2981 = vpow.pop %v2980
        %v2982 = vmul.f32 %v2863, 1.442695
        %v2983 = vpow.pop %v2982
        %v2984 = vmul.f32 %v2864, 1.442695
        %v2985 = vpow.pop %v2984
        %v2986 = vmul.f32 %v2865, 1.442695
        %v2987 = vpow.pop %v2986
        %v2988 = vmul.f32 %v2866, 1.442695
        %v2989 = vpow.pop %v2988
        %v2990 = vmul.f32 %v2867, 1.442695
        %v2991 = vpow.pop %v2990
        %v2992 = vmul.f32 %v2868, 1.442695
        %v2993 = vpow.pop %v2992
        %v2994 = vmul.f32 %v2869, 1.442695
        %v2995 = vpow.pop %v2994
        %v2996 = vmul.f32 %v2870, 1.442695
        %v2997 = vpow.pop %v2996
        %v2998 = vmul.f32 %v2871, 1.442695
        %v2999 = vpow.pop %v2998
        %v3000 = vsub.f32 %v2873, 1.0
        %v3001 = vsub.f32 %v2875, 1.0
        %v3002 = vsub.f32 %v2877, 1.0
        %v3003 = vsub.f32 %v2879, 1.0
        %v3004 = vsub.f32 %v2881, 1.0
        %v3005 = vsub.f32 %v2883, 1.0
        %v3006 = vsub.f32 %v2885, 1.0
        %v3007 = vsub.f32 %v2887, 1.0
        %v3008 = vsub.f32 %v2889, 1.0
        %v3009 = vsub.f32 %v2891, 1.0
        %v3010 = vsub.f32 %v2893, 1.0
        %v3011 = vsub.f32 %v2895, 1.0
        %v3012 = vsub.f32 %v2897, 1.0
        %v3013 = vsub.f32 %v2899, 1.0
        %v3014 = vsub.f32 %v2901, 1.0
        %v3015 = vsub.f32 %v2903, 1.0
        %v3016 = vsub.f32 %v2905, 1.0
        %v3017 = vsub.f32 %v2907, 1.0
        %v3018 = vsub.f32 %v2909, 1.0
        %v3019 = vsub.f32 %v2911, 1.0
        %v3020 = vsub.f32 %v2913, 1.0
        %v3021 = vsub.f32 %v2915, 1.0
        %v3022 = vsub.f32 %v2917, 1.0
        %v3023 = vsub.f32 %v2919, 1.0
        %v3024 = vsub.f32 %v2921, 1.0
        %v3025 = vsub.f32 %v2923, 1.0
        %v3026 = vsub.f32 %v2925, 1.0
        %v3027 = vsub.f32 %v2927, 1.0
        %v3028 = vsub.f32 %v2929, 1.0
        %v3029 = vsub.f32 %v2931, 1.0
        %v3030 = vsub.f32 %v2933, 1.0
        %v3031 = vsub.f32 %v2935, 1.0
        %v3032 = vsub.f32 %v2937, 1.0
        %v3033 = vsub.f32 %v2939, 1.0
        %v3034 = vsub.f32 %v2941, 1.0
        %v3035 = vsub.f32 %v2943, 1.0
        %v3036 = vsub.f32 %v2945, 1.0
        %v3037 = vsub.f32 %v2947, 1.0
        %v3038 = vsub.f32 %v2949, 1.0
        %v3039 = vsub.f32 %v2951, 1.0
        %v3040 = vsub.f32 %v2953, 1.0
        %v3041 = vsub.f32 %v2955, 1.0
        %v3042 = vsub.f32 %v2957, 1.0
        %v3043 = vsub.f32 %v2959, 1.0
        %v3044 = vsub.f32 %v2961, 1.0
        %v3045 = vsub.f32 %v2963, 1.0
        %v3046 = vsub.f32 %v2965, 1.0
        %v3047 = vsub.f32 %v2967, 1.0
        %v3048 = vsub.f32 %v2969, 1.0
        %v3049 = vsub.f32 %v2971, 1.0
        %v3050 = vsub.f32 %v2973, 1.0
        %v3051 = vsub.f32 %v2975, 1.0
        %v3052 = vsub.f32 %v2977, 1.0
        %v3053 = vsub.f32 %v2979, 1.0
        %v3054 = vsub.f32 %v2981, 1.0
        %v3055 = vsub.f32 %v2983, 1.0
        %v3056 = vsub.f32 %v2985, 1.0
        %v3057 = vsub.f32 %v2987, 1.0
        %v3058 = vsub.f32 %v2989, 1.0
        %v3059 = vsub.f32 %v2991, 1.0
        %v3060 = vsub.f32 %v2993, 1.0
        %v3061 = vsub.f32 %v2995, 1.0
        %v3062 = vsub.f32 %v2997, 1.0
        %v3063 = vsub.f32 %v2999, 1.0
        %v3064 = vmul.f32 %v3000, 1.6732632
        %v3065 = vmul.f32 %v3001, 1.6732632
        %v3066 = vmul.f32 %v3002, 1.6732632
        %v3067 = vmul.f32 %v3003, 1.6732632
        %v3068 = vmul.f32 %v3004, 1.6732632
        %v3069 = vmul.f32 %v3005, 1.6732632
        %v3070 = vmul.f32 %v3006, 1.6732632
        %v3071 = vmul.f32 %v3007, 1.6732632
        %v3072 = vmul.f32 %v3008, 1.6732632
        %v3073 = vmul.f32 %v3009, 1.6732632
        %v3074 = vmul.f32 %v3010, 1.6732632
        %v3075 = vmul.f32 %v3011, 1.6732632
        %v3076 = vmul.f32 %v3012, 1.6732632
        %v3077 = vmul.f32 %v3013, 1.6732632
        %v3078 = vmul.f32 %v3014, 1.6732632
        %v3079 = vmul.f32 %v3015, 1.6732632
        %v3080 = vmul.f32 %v3016, 1.6732632
        %v3081 = vmul.f32 %v3017, 1.6732632
        %v3082 = vmul.f32 %v3018, 1.6732632
        %v3083 = vmul.f32 %v3019, 1.6732632
        %v3084 = vmul.f32 %v3020, 1.6732632
        %v3085 = vmul.f32 %v3021, 1.6732632
        %v3086 = vmul.f32 %v3022, 1.6732632
        %v3087 = vmul.f32 %v3023, 1.6732632
        %v3088 = vmul.f32 %v3024, 1.6732632
        %v3089 = vmul.f32 %v3025, 1.6732632
        %v3090 = vmul.f32 %v3026, 1.6732632
        %v3091 = vmul.f32 %v3027, 1.6732632
        %v3092 = vmul.f32 %v3028, 1.6732632
        %v3093 = vmul.f32 %v3029, 1.6732632
        %v3094 = vmul.f32 %v3030, 1.6732632
        %v3095 = vmul.f32 %v3031, 1.6732632
        %v3096 = vmul.f32 %v3032, 1.6732632
        %v3097 = vmul.f32 %v3033, 1.6732632
        %v3098 = vmul.f32 %v3034, 1.6732632
        %v3099 = vmul.f32 %v3035, 1.6732632
        %v3100 = vmul.f32 %v3036, 1.6732632
        %v3101 = vmul.f32 %v3037, 1.6732632
        %v3102 = vmul.f32 %v3038, 1.6732632
        %v3103 = vmul.f32 %v3039, 1.6732632
        %v3104 = vmul.f32 %v3040, 1.6732632
        %v3105 = vmul.f32 %v3041, 1.6732632
        %v3106 = vmul.f32 %v3042, 1.6732632
        %v3107 = vmul.f32 %v3043, 1.6732632
        %v3108 = vmul.f32 %v3044, 1.6732632
        %v3109 = vmul.f32 %v3045, 1.6732632
        %v3110 = vmul.f32 %v3046, 1.6732632
        %v3111 = vmul.f32 %v3047, 1.6732632
        %v3112 = vmul.f32 %v3048, 1.6732632
        %v3113 = vmul.f32 %v3049, 1.6732632
        %v3114 = vmul.f32 %v3050, 1.6732632
        %v3115 = vmul.f32 %v3051, 1.6732632
        %v3116 = vmul.f32 %v3052, 1.6732632
        %v3117 = vmul.f32 %v3053, 1.6732632
        %v3118 = vmul.f32 %v3054, 1.6732632
        %v3119 = vmul.f32 %v3055, 1.6732632
        %v3120 = vmul.f32 %v3056, 1.6732632
        %v3121 = vmul.f32 %v3057, 1.6732632
        %v3122 = vmul.f32 %v3058, 1.6732632
        %v3123 = vmul.f32 %v3059, 1.6732632
        %v3124 = vmul.f32 %v3060, 1.6732632
        %v3125 = vmul.f32 %v3061, 1.6732632
        %v3126 = vmul.f32 %v3062, 1.6732632
        %v3127 = vmul.f32 %v3063, 1.6732632
        %v3128 = vsel %vm2744, %v2490, %v3064
        %v3129 = vsel %vm2745, %v2493, %v3065
        %v3130 = vsel %vm2746, %v2498, %v3066
        %v3131 = vsel %vm2747, %v2501, %v3067
        %v3132 = vsel %vm2748, %v2506, %v3068
        %v3133 = vsel %vm2749, %v2509, %v3069
        %v3134 = vsel %vm2750, %v2514, %v3070
        %v3135 = vsel %vm2751, %v2517, %v3071
        %v3136 = vsel %vm2752, %v2522, %v3072
        %v3137 = vsel %vm2753, %v2525, %v3073
        %v3138 = vsel %vm2754, %v2530, %v3074
        %v3139 = vsel %vm2755, %v2533, %v3075
        %v3140 = vsel %vm2756, %v2538, %v3076
        %v3141 = vsel %vm2757, %v2541, %v3077
        %v3142 = vsel %vm2758, %v2546, %v3078
        %v3143 = vsel %vm2759, %v2549, %v3079
        %v3144 = vsel %vm2760, %v2554, %v3080
        %v3145 = vsel %vm2761, %v2557, %v3081
        %v3146 = vsel %vm2762, %v2562, %v3082
        %v3147 = vsel %vm2763, %v2565, %v3083
        %v3148 = vsel %vm2764, %v2570, %v3084
        %v3149 = vsel %vm2765, %v2573, %v3085
        %v3150 = vsel %vm2766, %v2578, %v3086
        %v3151 = vsel %vm2767, %v2581, %v3087
        %v3152 = vsel %vm2768, %v2586, %v3088
        %v3153 = vsel %vm2769, %v2589, %v3089
        %v3154 = vsel %vm2770, %v2594, %v3090
        %v3155 = vsel %vm2771, %v2597, %v3091
        %v3156 = vsel %vm2772, %v2602, %v3092
        %v3157 = vsel %vm2773, %v2605, %v3093
        %v3158 = vsel %vm2774, %v2610, %v3094
        %v3159 = vsel %vm2775, %v2613, %v3095
        %v3160 = vsel %vm2776, %v2618, %v3096
        %v3161 = vsel %vm2777, %v2621, %v3097
        %v3162 = vsel %vm2778, %v2626, %v3098
        %v3163 = vsel %vm2779, %v2629, %v3099
        %v3164 = vsel %vm2780, %v2634, %v3100
        %v3165 = vsel %vm2781, %v2637, %v3101
        %v3166 = vsel %vm2782, %v2642, %v3102
        %v3167 = vsel %vm2783, %v2645, %v3103
        %v3168 = vsel %vm2784, %v2650, %v3104
        %v3169 = vsel %vm2785, %v2653, %v3105
        %v3170 = vsel %vm2786, %v2658, %v3106
        %v3171 = vsel %vm2787, %v2661, %v3107
        %v3172 = vsel %vm2788, %v2666, %v3108
        %v3173 = vsel %vm2789, %v2669, %v3109
        %v3174 = vsel %vm2790, %v2674, %v3110
        %v3175 = vsel %vm2791, %v2677, %v3111
        %v3176 = vsel %vm2792, %v2682, %v3112
        %v3177 = vsel %vm2793, %v2685, %v3113
        %v3178 = vsel %vm2794, %v2690, %v3114
        %v3179 = vsel %vm2795, %v2693, %v3115
        %v3180 = vsel %vm2796, %v2698, %v3116
        %v3181 = vsel %vm2797, %v2701, %v3117
        %v3182 = vsel %vm2798, %v2706, %v3118
        %v3183 = vsel %vm2799, %v2709, %v3119
        %v3184 = vsel %vm2800, %v2714, %v3120
        %v3185 = vsel %vm2801, %v2717, %v3121
        %v3186 = vsel %vm2802, %v2722, %v3122
        %v3187 = vsel %vm2803, %v2725, %v3123
        %v3188 = vsel %vm2804, %v2730, %v3124
        %v3189 = vsel %vm2805, %v2733, %v3125
        %v3190 = vsel %vm2806, %v2738, %v3126
        %v3191 = vsel %vm2807, %v2741, %v3127
        %v3192 = vmul.f32 %v3128, 1.050701
        %v3193 = vmul.f32 %v3129, 1.050701
        %v3194 = vmul.f32 %v3130, 1.050701
        %v3195 = vmul.f32 %v3131, 1.050701
        %v3196 = vmul.f32 %v3132, 1.050701
        %v3197 = vmul.f32 %v3133, 1.050701
        %v3198 = vmul.f32 %v3134, 1.050701
        %v3199 = vmul.f32 %v3135, 1.050701
        %v3200 = vmul.f32 %v3136, 1.050701
        %v3201 = vmul.f32 %v3137, 1.050701
        %v3202 = vmul.f32 %v3138, 1.050701
        %v3203 = vmul.f32 %v3139, 1.050701
        %v3204 = vmul.f32 %v3140, 1.050701
        %v3205 = vmul.f32 %v3141, 1.050701
        %v3206 = vmul.f32 %v3142, 1.050701
        %v3207 = vmul.f32 %v3143, 1.050701
        %v3208 = vmul.f32 %v3144, 1.050701
        %v3209 = vmul.f32 %v3145, 1.050701
        %v3210 = vmul.f32 %v3146, 1.050701
        %v3211 = vmul.f32 %v3147, 1.050701
        %v3212 = vmul.f32 %v3148, 1.050701
        %v3213 = vmul.f32 %v3149, 1.050701
        %v3214 = vmul.f32 %v3150, 1.050701
        %v3215 = vmul.f32 %v3151, 1.050701
        %v3216 = vmul.f32 %v3152, 1.050701
        %v3217 = vmul.f32 %v3153, 1.050701
        %v3218 = vmul.f32 %v3154, 1.050701
        %v3219 = vmul.f32 %v3155, 1.050701
        %v3220 = vmul.f32 %v3156, 1.050701
        %v3221 = vmul.f32 %v3157, 1.050701
        %v3222 = vmul.f32 %v3158, 1.050701
        %v3223 = vmul.f32 %v3159, 1.050701
        %v3224 = vmul.f32 %v3160, 1.050701
        %v3225 = vmul.f32 %v3161, 1.050701
        %v3226 = vmul.f32 %v3162, 1.050701
        %v3227 = vmul.f32 %v3163, 1.050701
        %v3228 = vmul.f32 %v3164, 1.050701
        %v3229 = vmul.f32 %v3165, 1.050701
        %v3230 = vmul.f32 %v3166, 1.050701
        %v3231 = vmul.f32 %v3167, 1.050701
        %v3232 = vmul.f32 %v3168, 1.050701
        %v3233 = vmul.f32 %v3169, 1.050701
        %v3234 = vmul.f32 %v3170, 1.050701
        %v3235 = vmul.f32 %v3171, 1.050701
        %v3236 = vmul.f32 %v3172, 1.050701
        %v3237 = vmul.f32 %v3173, 1.050701
        %v3238 = vmul.f32 %v3174, 1.050701
        %v3239 = vmul.f32 %v3175, 1.050701
        %v3240 = vmul.f32 %v3176, 1.050701
        %v3241 = vmul.f32 %v3177, 1.050701
        %v3242 = vmul.f32 %v3178, 1.050701
        %v3243 = vmul.f32 %v3179, 1.050701
        %v3244 = vmul.f32 %v3180, 1.050701
        %v3245 = vmul.f32 %v3181, 1.050701
        %v3246 = vmul.f32 %v3182, 1.050701
        %v3247 = vmul.f32 %v3183, 1.050701
        %v3248 = vmul.f32 %v3184, 1.050701
        %v3249 = vmul.f32 %v3185, 1.050701
        %v3250 = vmul.f32 %v3186, 1.050701
        %v3251 = vmul.f32 %v3187, 1.050701
        %v3252 = vmul.f32 %v3188, 1.050701
        %v3253 = vmul.f32 %v3189, 1.050701
        %v3254 = vmul.f32 %v3190, 1.050701
        %v3255 = vmul.f32 %v3191, 1.050701
        %v3256 = vpack.c.bf16 %v3193, %v3192
        %v3257 = vpack.c.bf16 %v3195, %v3194
        %v3258 = vpack.c.bf16 %v3197, %v3196
        %v3259 = vpack.c.bf16 %v3199, %v3198
        %v3260 = vpack.c.bf16 %v3201, %v3200
        %v3261 = vpack.c.bf16 %v3203, %v3202
        %v3262 = vpack.c.bf16 %v3205, %v3204
        %v3263 = vpack.c.bf16 %v3207, %v3206
        %v3264 = vpack.c.bf16 %v3209, %v3208
        %v3265 = vpack.c.bf16 %v3211, %v3210
        %v3266 = vpack.c.bf16 %v3213, %v3212
        %v3267 = vpack.c.bf16 %v3215, %v3214
        %v3268 = vpack.c.bf16 %v3217, %v3216
        %v3269 = vpack.c.bf16 %v3219, %v3218
        %v3270 = vpack.c.bf16 %v3221, %v3220
        %v3271 = vpack.c.bf16 %v3223, %v3222
        %v3272 = vpack.c.bf16 %v3225, %v3224
        %v3273 = vpack.c.bf16 %v3227, %v3226
        %v3274 = vpack.c.bf16 %v3229, %v3228
        %v3275 = vpack.c.bf16 %v3231, %v3230
        %v3276 = vpack.c.bf16 %v3233, %v3232
        %v3277 = vpack.c.bf16 %v3235, %v3234
        %v3278 = vpack.c.bf16 %v3237, %v3236
        %v3279 = vpack.c.bf16 %v3239, %v3238
        %v3280 = vpack.c.bf16 %v3241, %v3240
        %v3281 = vpack.c.bf16 %v3243, %v3242
        %v3282 = vpack.c.bf16 %v3245, %v3244
        %v3283 = vpack.c.bf16 %v3247, %v3246
        %v3284 = vpack.c.bf16 %v3249, %v3248
        %v3285 = vpack.c.bf16 %v3251, %v3250
        %v3286 = vpack.c.bf16 %v3253, %v3252
        %v3287 = vpack.c.bf16 %v3255, %v3254
        %v3288 = vld [vmem:[%s5] sm:$0xf]
        %v3289 = vld [vmem:[%s5 + $0x4] sm:$0xf]
        %v3290 = vld [vmem:[%s5 + $0x8] sm:$0xf]
        %v3291 = vld [vmem:[%s5 + $0xc] sm:$0xf]
        %v3292 = vld [vmem:[%s5 + $0x10] sm:$0xf]
        %v3293 = vld [vmem:[%s5 + $0x14] sm:$0xf]
        %v3294 = vld [vmem:[%s5 + $0x18] sm:$0xf]
        %v3295 = vld [vmem:[%s5 + $0x1c] sm:$0xf]
        %v3296 = vld [vmem:[%s5 + $0x20] sm:$0xf]
        %v3297 = vld [vmem:[%s5 + $0x24] sm:$0xf]
        %v3298 = vld [vmem:[%s5 + $0x28] sm:$0xf]
        %v3299 = vld [vmem:[%s5 + $0x2c] sm:$0xf]
        %v3300 = vld [vmem:[%s5 + $0x30] sm:$0xf]
        %v3301 = vld [vmem:[%s5 + $0x34] sm:$0xf]
        %v3302 = vld [vmem:[%s5 + $0x38] sm:$0xf]
        %v3303 = vld [vmem:[%s5 + $0x3c] sm:$0xf]
        %v3304 = vld [vmem:[%s6] sm:$0x1]
        %v3306 = vlaneseq
        %v3307 = vshrl.u32 %v3306, 7
        %v3308 = vsub.s32 0, %v3307
        %v3309 = vrot.slane %v3304, %v3308
        %v3327 = vunpack.c.l.b16 %v3288
        %v3328 = vunpack.c.l.b16 %v3289
        %v3329 = vunpack.c.l.b16 %v3290
        %v3330 = vunpack.c.l.b16 %v3291
        %v3331 = vunpack.c.l.b16 %v3292
        %v3332 = vunpack.c.l.b16 %v3293
        %v3333 = vunpack.c.l.b16 %v3294
        %v3334 = vunpack.c.l.b16 %v3295
        %v3335 = vunpack.c.l.b16 %v3296
        %v3336 = vunpack.c.l.b16 %v3297
        %v3337 = vunpack.c.l.b16 %v3298
        %v3338 = vunpack.c.l.b16 %v3299
        %v3339 = vunpack.c.l.b16 %v3300
        %v3340 = vunpack.c.l.b16 %v3301
        %v3341 = vunpack.c.l.b16 %v3302
        %v3342 = vunpack.c.l.b16 %v3303
        %v3343 = vpack.c.b16 %v3328, %v3327
        %v3344 = vpack.c.b16 %v3330, %v3329
        %v3345 = vpack.c.b16 %v3332, %v3331
        %v3346 = vpack.c.b16 %v3334, %v3333
        %v3347 = vpack.c.b16 %v3336, %v3335
        %v3348 = vpack.c.b16 %v3338, %v3337
        %v3349 = vpack.c.b16 %v3340, %v3339
        %v3350 = vpack.c.b16 %v3342, %v3341
        %3359 = vmatprep.subr.bf16.mxu0 0
        %3360 = vmatpush1.bf16.msra.mxu0 %v3343
        %3361 = vmatprep.subr.bf16.mxu0 0
        %3362 = vmatpush1.bf16.msra.mxu0 %v3344
        %3363 = vmatprep.subr.bf16.mxu0 0
        %3364 = vmatpush1.bf16.msra.mxu0 %v3345
        %3365 = vmatprep.subr.bf16.mxu0 0
        %3366 = vmatpush1.bf16.msra.mxu0 %v3346
        %3367 = vmatprep.subr.bf16.mxu0 0
        %3368 = vmatpush1.bf16.msra.mxu0 %v3347
        %3369 = vmatprep.subr.bf16.mxu0 0
        %3370 = vmatpush1.bf16.msra.mxu0 %v3348
        %3371 = vmatprep.subr.bf16.mxu0 0
        %3372 = vmatpush1.bf16.msra.mxu0 %v3349
        %3373 = vmatprep.subr.bf16.mxu0 0
        %3374 = vmatpush1.bf16.msra.mxu0 %v3350
        %3375 = vmatprep.subr.bf16.mxu0 0
        %3376 = vmatpush1.bf16.msra.mxu0 0
        %3377 = vmatprep.subr.bf16.mxu0 0
        %3378 = vmatpush1.bf16.msra.mxu0 0
        %3379 = vmatprep.subr.bf16.mxu0 0
        %3380 = vmatpush1.bf16.msra.mxu0 0
        %3381 = vmatprep.subr.bf16.mxu0 0
        %3382 = vmatpush1.bf16.msra.mxu0 0
        %3383 = vmatprep.subr.bf16.mxu0 0
        %3384 = vmatpush1.bf16.msra.mxu0 0
        %3385 = vmatprep.subr.bf16.mxu0 0
        %3386 = vmatpush1.bf16.msra.mxu0 0
        %3387 = vmatprep.subr.bf16.mxu0 0
        %3388 = vmatpush1.bf16.msra.mxu0 0
        %3389 = vmatprep.subr.bf16.mxu0 0
        %3390 = vmatpush1.bf16.msra.mxu0 0
        %3391 = vmatprep.mubr.bf16.mxu0 0
        %3392 = vmatmul.mubr.bf16.gmra.mrb[0].mxu0 %v3256
        %v3393 = vpop.f32.mrb[0].mxu0
        %v3394 = vadd.f32 %v3309, %v3393
        %v3395 = vpop.f32.mrb[0].mxu0
        %v3396 = vpop.f32.mrb[0].mxu0
        %v3397 = vadd.f32 %v3309, %v3396
        %v3398 = vpop.f32.mrb[0].mxu0
        %3399 = vmatprep.mubr.bf16.mxu0 0
        %3400 = vmatmul.mubr.bf16.gmra.mrb[0].mxu0 %v3257
        %v3401 = vpop.f32.mrb[0].mxu0
        %v3402 = vadd.f32 %v3309, %v3401
        %v3403 = vpop.f32.mrb[0].mxu0
        %v3404 = vpop.f32.mrb[0].mxu0
        %v3405 = vadd.f32 %v3309, %v3404
        %v3406 = vpop.f32.mrb[0].mxu0
        %3407 = vmatprep.mubr.bf16.mxu0 0
        %3408 = vmatmul.mubr.bf16.gmra.mrb[0].mxu0 %v3258
        %v3409 = vpop.f32.mrb[0].mxu0
        %v3410 = vadd.f32 %v3309, %v3409
        %v3411 = vpop.f32.mrb[0].mxu0
        %v3412 = vpop.f32.mrb[0].mxu0
        %v3413 = vadd.f32 %v3309, %v3412
        %v3414 = vpop.f32.mrb[0].mxu0
        %3415 = vmatprep.mubr.bf16.mxu0 0
        %3416 = vmatmul.mubr.bf16.gmra.mrb[0].mxu0 %v3259
        %v3417 = vpop.f32.mrb[0].mxu0
        %v3418 = vadd.f32 %v3309, %v3417
        %v3419 = vpop.f32.mrb[0].mxu0
        %v3420 = vpop.f32.mrb[0].mxu0
        %v3421 = vadd.f32 %v3309, %v3420
        %v3422 = vpop.f32.mrb[0].mxu0
        %3423 = vmatprep.mubr.bf16.mxu0 0
        %3424 = vmatmul.mubr.bf16.gmra.mrb[0].mxu0 %v3260
        %v3425 = vpop.f32.mrb[0].mxu0
        %v3426 = vadd.f32 %v3309, %v3425
        %v3427 = vpop.f32.mrb[0].mxu0
        %v3428 = vpop.f32.mrb[0].mxu0
        %v3429 = vadd.f32 %v3309, %v3428
        %v3430 = vpop.f32.mrb[0].mxu0
        %3431 = vmatprep.mubr.bf16.mxu0 0
        %3432 = vmatmul.mubr.bf16.gmra.mrb[0].mxu0 %v3261
        %v3433 = vpop.f32.mrb[0].mxu0
        %v3434 = vadd.f32 %v3309, %v3433
        %v3435 = vpop.f32.mrb[0].mxu0
        %v3436 = vpop.f32.mrb[0].mxu0
        %v3437 = vadd.f32 %v3309, %v3436
        %v3438 = vpop.f32.mrb[0].mxu0
        %3439 = vmatprep.mubr.bf16.mxu0 0
        %3440 = vmatmul.mubr.bf16.gmra.mrb[0].mxu0 %v3262
        %v3441 = vpop.f32.mrb[0].mxu0
        %v3442 = vadd.f32 %v3309, %v3441
        %v3443 = vpop.f32.mrb[0].mxu0
        %v3444 = vpop.f32.mrb[0].mxu0
        %v3445 = vadd.f32 %v3309, %v3444
        %v3446 = vpop.f32.mrb[0].mxu0
        %3447 = vmatprep.mubr.bf16.mxu0 0
        %3448 = vmatmul.mubr.bf16.gmra.mrb[0].mxu0 %v3263
        %v3449 = vpop.f32.mrb[0].mxu0
        %v3450 = vadd.f32 %v3309, %v3449
        %v3451 = vpop.f32.mrb[0].mxu0
        %v3452 = vpop.f32.mrb[0].mxu0
        %v3453 = vadd.f32 %v3309, %v3452
        %v3454 = vpop.f32.mrb[0].mxu0
        %3455 = vmatprep.mubr.bf16.mxu0 0
        %3456 = vmatmul.mubr.bf16.gmra.mrb[0].mxu0 %v3264
        %v3457 = vpop.f32.mrb[0].mxu0
        %v3458 = vadd.f32 %v3309, %v3457
        %v3459 = vpop.f32.mrb[0].mxu0
        %v3460 = vpop.f32.mrb[0].mxu0
        %v3461 = vadd.f32 %v3309, %v3460
        %v3462 = vpop.f32.mrb[0].mxu0
        %3463 = vmatprep.mubr.bf16.mxu0 0
        %3464 = vmatmul.mubr.bf16.gmra.mrb[0].mxu0 %v3265
        %v3465 = vpop.f32.mrb[0].mxu0
        %v3466 = vadd.f32 %v3309, %v3465
        %v3467 = vpop.f32.mrb[0].mxu0
        %v3468 = vpop.f32.mrb[0].mxu0
        %v3469 = vadd.f32 %v3309, %v3468
        %v3470 = vpop.f32.mrb[0].mxu0
        %3471 = vmatprep.mubr.bf16.mxu0 0
        %3472 = vmatmul.mubr.bf16.gmra.mrb[0].mxu0 %v3266
        %v3473 = vpop.f32.mrb[0].mxu0
        %v3474 = vadd.f32 %v3309, %v3473
        %v3475 = vpop.f32.mrb[0].mxu0
        %v3476 = vpop.f32.mrb[0].mxu0
        %v3477 = vadd.f32 %v3309, %v3476
        %v3478 = vpop.f32.mrb[0].mxu0
        %3479 = vmatprep.mubr.bf16.mxu0 0
        %3480 = vmatmul.mubr.bf16.gmra.mrb[0].mxu0 %v3267
        %v3481 = vpop.f32.mrb[0].mxu0
        %v3482 = vadd.f32 %v3309, %v3481
        %v3483 = vpop.f32.mrb[0].mxu0
        %v3484 = vpop.f32.mrb[0].mxu0
        %v3485 = vadd.f32 %v3309, %v3484
        %v3486 = vpop.f32.mrb[0].mxu0
        %3487 = vmatprep.mubr.bf16.mxu0 0
        %3488 = vmatmul.mubr.bf16.gmra.mrb[0].mxu0 %v3268
        %v3489 = vpop.f32.mrb[0].mxu0
        %v3490 = vadd.f32 %v3309, %v3489
        %v3491 = vpop.f32.mrb[0].mxu0
        %v3492 = vpop.f32.mrb[0].mxu0
        %v3493 = vadd.f32 %v3309, %v3492
        %v3494 = vpop.f32.mrb[0].mxu0
        %3495 = vmatprep.mubr.bf16.mxu0 0
        %3496 = vmatmul.mubr.bf16.gmra.mrb[0].mxu0 %v3269
        %v3497 = vpop.f32.mrb[0].mxu0
        %v3498 = vadd.f32 %v3309, %v3497
        %v3499 = vpop.f32.mrb[0].mxu0
        %v3500 = vpop.f32.mrb[0].mxu0
        %v3501 = vadd.f32 %v3309, %v3500
        %v3502 = vpop.f32.mrb[0].mxu0
        %3503 = vmatprep.mubr.bf16.mxu0 0
        %3504 = vmatmul.mubr.bf16.gmra.mrb[0].mxu0 %v3270
        %v3505 = vpop.f32.mrb[0].mxu0
        %v3506 = vadd.f32 %v3309, %v3505
        %v3507 = vpop.f32.mrb[0].mxu0
        %v3508 = vpop.f32.mrb[0].mxu0
        %v3509 = vadd.f32 %v3309, %v3508
        %v3510 = vpop.f32.mrb[0].mxu0
        %3511 = vmatprep.mubr.bf16.mxu0 0
        %3512 = vmatmul.mubr.bf16.gmra.mrb[0].mxu0 %v3271
        %v3513 = vpop.f32.mrb[0].mxu0
        %v3514 = vadd.f32 %v3309, %v3513
        %v3515 = vpop.f32.mrb[0].mxu0
        %v3516 = vpop.f32.mrb[0].mxu0
        %v3517 = vadd.f32 %v3309, %v3516
        %v3518 = vpop.f32.mrb[0].mxu0
        %3519 = vmatprep.mubr.bf16.mxu0 0
        %3520 = vmatmul.mubr.bf16.gmra.mrb[0].mxu0 %v3272
        %v3521 = vpop.f32.mrb[0].mxu0
        %v3522 = vadd.f32 %v3309, %v3521
        %v3523 = vpop.f32.mrb[0].mxu0
        %v3524 = vpop.f32.mrb[0].mxu0
        %v3525 = vadd.f32 %v3309, %v3524
        %v3526 = vpop.f32.mrb[0].mxu0
        %3527 = vmatprep.mubr.bf16.mxu0 0
        %3528 = vmatmul.mubr.bf16.gmra.mrb[0].mxu0 %v3273
        %v3529 = vpop.f32.mrb[0].mxu0
        %v3530 = vadd.f32 %v3309, %v3529
        %v3531 = vpop.f32.mrb[0].mxu0
        %v3532 = vpop.f32.mrb[0].mxu0
        %v3533 = vadd.f32 %v3309, %v3532
        %v3534 = vpop.f32.mrb[0].mxu0
        %3535 = vmatprep.mubr.bf16.mxu0 0
        %3536 = vmatmul.mubr.bf16.gmra.mrb[0].mxu0 %v3274
        %v3537 = vpop.f32.mrb[0].mxu0
        %v3538 = vadd.f32 %v3309, %v3537
        %v3539 = vpop.f32.mrb[0].mxu0
        %v3540 = vpop.f32.mrb[0].mxu0
        %v3541 = vadd.f32 %v3309, %v3540
        %v3542 = vpop.f32.mrb[0].mxu0
        %3543 = vmatprep.mubr.bf16.mxu0 0
        %3544 = vmatmul.mubr.bf16.gmra.mrb[0].mxu0 %v3275
        %v3545 = vpop.f32.mrb[0].mxu0
        %v3546 = vadd.f32 %v3309, %v3545
        %v3547 = vpop.f32.mrb[0].mxu0
        %v3548 = vpop.f32.mrb[0].mxu0
        %v3549 = vadd.f32 %v3309, %v3548
        %v3550 = vpop.f32.mrb[0].mxu0
        %3551 = vmatprep.mubr.bf16.mxu0 0
        %3552 = vmatmul.mubr.bf16.gmra.mrb[0].mxu0 %v3276
        %v3553 = vpop.f32.mrb[0].mxu0
        %v3554 = vadd.f32 %v3309, %v3553
        %v3555 = vpop.f32.mrb[0].mxu0
        %v3556 = vpop.f32.mrb[0].mxu0
        %v3557 = vadd.f32 %v3309, %v3556
        %v3558 = vpop.f32.mrb[0].mxu0
        %3559 = vmatprep.mubr.bf16.mxu0 0
        %3560 = vmatmul.mubr.bf16.gmra.mrb[0].mxu0 %v3277
        %v3561 = vpop.f32.mrb[0].mxu0
        %v3562 = vadd.f32 %v3309, %v3561
        %v3563 = vpop.f32.mrb[0].mxu0
        %v3564 = vpop.f32.mrb[0].mxu0
        %v3565 = vadd.f32 %v3309, %v3564
        %v3566 = vpop.f32.mrb[0].mxu0
        %3567 = vmatprep.mubr.bf16.mxu0 0
        %3568 = vmatmul.mubr.bf16.gmra.mrb[0].mxu0 %v3278
        %v3569 = vpop.f32.mrb[0].mxu0
        %v3570 = vadd.f32 %v3309, %v3569
        %v3571 = vpop.f32.mrb[0].mxu0
        %v3572 = vpop.f32.mrb[0].mxu0
        %v3573 = vadd.f32 %v3309, %v3572
        %v3574 = vpop.f32.mrb[0].mxu0
        %3575 = vmatprep.mubr.bf16.mxu0 0
        %3576 = vmatmul.mubr.bf16.gmra.mrb[0].mxu0 %v3279
        %v3577 = vpop.f32.mrb[0].mxu0
        %v3578 = vadd.f32 %v3309, %v3577
        %v3579 = vpop.f32.mrb[0].mxu0
        %v3580 = vpop.f32.mrb[0].mxu0
        %v3581 = vadd.f32 %v3309, %v3580
        %v3582 = vpop.f32.mrb[0].mxu0
        %3583 = vmatprep.mubr.bf16.mxu0 0
        %3584 = vmatmul.mubr.bf16.gmra.mrb[0].mxu0 %v3280
        %v3585 = vpop.f32.mrb[0].mxu0
        %v3586 = vadd.f32 %v3309, %v3585
        %v3587 = vpop.f32.mrb[0].mxu0
        %v3588 = vpop.f32.mrb[0].mxu0
        %v3589 = vadd.f32 %v3309, %v3588
        %v3590 = vpop.f32.mrb[0].mxu0
        %3591 = vmatprep.mubr.bf16.mxu0 0
        %3592 = vmatmul.mubr.bf16.gmra.mrb[0].mxu0 %v3281
        %v3593 = vpop.f32.mrb[0].mxu0
        %v3594 = vadd.f32 %v3309, %v3593
        %v3595 = vpop.f32.mrb[0].mxu0
        %v3596 = vpop.f32.mrb[0].mxu0
        %v3597 = vadd.f32 %v3309, %v3596
        %v3598 = vpop.f32.mrb[0].mxu0
        %3599 = vmatprep.mubr.bf16.mxu0 0
        %3600 = vmatmul.mubr.bf16.gmra.mrb[0].mxu0 %v3282
        %v3601 = vpop.f32.mrb[0].mxu0
        %v3602 = vadd.f32 %v3309, %v3601
        %v3603 = vpop.f32.mrb[0].mxu0
        %v3604 = vpop.f32.mrb[0].mxu0
        %v3605 = vadd.f32 %v3309, %v3604
        %v3606 = vpop.f32.mrb[0].mxu0
        %3607 = vmatprep.mubr.bf16.mxu0 0
        %3608 = vmatmul.mubr.bf16.gmra.mrb[0].mxu0 %v3283
        %v3609 = vpop.f32.mrb[0].mxu0
        %v3610 = vadd.f32 %v3309, %v3609
        %v3611 = vpop.f32.mrb[0].mxu0
        %v3612 = vpop.f32.mrb[0].mxu0
        %v3613 = vadd.f32 %v3309, %v3612
        %v3614 = vpop.f32.mrb[0].mxu0
        %3615 = vmatprep.mubr.bf16.mxu0 0
        %3616 = vmatmul.mubr.bf16.gmra.mrb[0].mxu0 %v3284
        %v3617 = vpop.f32.mrb[0].mxu0
        %v3618 = vadd.f32 %v3309, %v3617
        %v3619 = vpop.f32.mrb[0].mxu0
        %v3620 = vpop.f32.mrb[0].mxu0
        %v3621 = vadd.f32 %v3309, %v3620
        %v3622 = vpop.f32.mrb[0].mxu0
        %3623 = vmatprep.mubr.bf16.mxu0 0
        %3624 = vmatmul.mubr.bf16.gmra.mrb[0].mxu0 %v3285
        %v3625 = vpop.f32.mrb[0].mxu0
        %v3626 = vadd.f32 %v3309, %v3625
        %v3627 = vpop.f32.mrb[0].mxu0
        %v3628 = vpop.f32.mrb[0].mxu0
        %v3629 = vadd.f32 %v3309, %v3628
        %v3630 = vpop.f32.mrb[0].mxu0
        %3631 = vmatprep.mubr.bf16.mxu0 0
        %3632 = vmatmul.mubr.bf16.gmra.mrb[0].mxu0 %v3286
        %v3633 = vpop.f32.mrb[0].mxu0
        %v3634 = vadd.f32 %v3309, %v3633
        %v3635 = vpop.f32.mrb[0].mxu0
        %v3636 = vpop.f32.mrb[0].mxu0
        %v3637 = vadd.f32 %v3309, %v3636
        %v3638 = vpop.f32.mrb[0].mxu0
        %3639 = vmatprep.mubr.bf16.mxu0 0
        %3640 = vmatmul.mubr.bf16.gmra.mrb[0].mxu0 %v3287
        %v3641 = vpop.f32.mrb[0].mxu0
        %v3642 = vadd.f32 %v3309, %v3641
        %v3643 = vpop.f32.mrb[0].mxu0
        %v3644 = vpop.f32.mrb[0].mxu0
        %v3645 = vadd.f32 %v3309, %v3644
        %v3646 = vpop.f32.mrb[0].mxu0
        %3647 = vdwg.mxu0
        %v3648 = vmul.f32 %v811, %v1162
        %v3649 = vmul.f32 %v815, %v1166
        %v3650 = vmul.f32 %v821, %v1172
        %v3651 = vmul.f32 %v825, %v1176
        %v3652 = vmul.f32 %v831, %v1182
        %v3653 = vmul.f32 %v835, %v1186
        %v3654 = vmul.f32 %v841, %v1192
        %v3655 = vmul.f32 %v845, %v1196
        %v3656 = vmul.f32 %v851, %v1202
        %v3657 = vmul.f32 %v855, %v1206
        %v3658 = vmul.f32 %v861, %v1212
        %v3659 = vmul.f32 %v865, %v1216
        %v3660 = vmul.f32 %v871, %v1222
        %v3661 = vmul.f32 %v875, %v1226
        %v3662 = vmul.f32 %v881, %v1232
        %v3663 = vmul.f32 %v885, %v1236
        %v3664 = vmul.f32 %v891, %v1242
        %v3665 = vmul.f32 %v895, %v1246
        %v3666 = vmul.f32 %v901, %v1252
        %v3667 = vmul.f32 %v905, %v1256
        %v3668 = vmul.f32 %v911, %v1262
        %v3669 = vmul.f32 %v915, %v1266
        %v3670 = vmul.f32 %v921, %v1272
        %v3671 = vmul.f32 %v925, %v1276
        %v3672 = vmul.f32 %v931, %v1282
        %v3673 = vmul.f32 %v935, %v1286
        %v3674 = vmul.f32 %v941, %v1292
        %v3675 = vmul.f32 %v945, %v1296
        %v3676 = vmul.f32 %v951, %v1302
        %v3677 = vmul.f32 %v955, %v1306
        %v3678 = vmul.f32 %v961, %v1312
        %v3679 = vmul.f32 %v965, %v1316
        %v3680 = vmul.f32 %v971, %v1322
        %v3681 = vmul.f32 %v975, %v1326
        %v3682 = vmul.f32 %v981, %v1332
        %v3683 = vmul.f32 %v985, %v1336
        %v3684 = vmul.f32 %v991, %v1342
        %v3685 = vmul.f32 %v995, %v1346
        %v3686 = vmul.f32 %v1001, %v1352
        %v3687 = vmul.f32 %v1005, %v1356
        %v3688 = vmul.f32 %v1011, %v1362
        %v3689 = vmul.f32 %v1015, %v1366
        %v3690 = vmul.f32 %v1021, %v1372
        %v3691 = vmul.f32 %v1025, %v1376
        %v3692 = vmul.f32 %v1031, %v1382
        %v3693 = vmul.f32 %v1035, %v1386
        %v3694 = vmul.f32 %v1041, %v1392
        %v3695 = vmul.f32 %v1045, %v1396
        %v3696 = vmul.f32 %v1051, %v1402
        %v3697 = vmul.f32 %v1055, %v1406
        %v3698 = vmul.f32 %v1061, %v1412
        %v3699 = vmul.f32 %v1065, %v1416
        %v3700 = vmul.f32 %v1071, %v1422
        %v3701 = vmul.f32 %v1075, %v1426
        %v3702 = vmul.f32 %v1081, %v1432
        %v3703 = vmul.f32 %v1085, %v1436
        %v3704 = vmul.f32 %v1091, %v1442
        %v3705 = vmul.f32 %v1095, %v1446
        %v3706 = vmul.f32 %v1101, %v1452
        %v3707 = vmul.f32 %v1105, %v1456
        %v3708 = vmul.f32 %v1111, %v1462
        %v3709 = vmul.f32 %v1115, %v1466
        %v3710 = vmul.f32 %v1121, %v1472
        %v3711 = vmul.f32 %v1125, %v1476
        %v3712 = vpack.c.bf16 %v3397, %v3394
        %v3713 = vpack.c.bf16 %v3649, %v3648
        %v3714 = vpack.c.bf16 %v3405, %v3402
        %v3715 = vpack.c.bf16 %v3651, %v3650
        %v3716 = vpack.c.bf16 %v3413, %v3410
        %v3717 = vpack.c.bf16 %v3653, %v3652
        %v3718 = vpack.c.bf16 %v3421, %v3418
        %v3719 = vpack.c.bf16 %v3655, %v3654
        %v3720 = vpack.c.bf16 %v3429, %v3426
        %v3721 = vpack.c.bf16 %v3657, %v3656
        %v3722 = vpack.c.bf16 %v3437, %v3434
        %v3723 = vpack.c.bf16 %v3659, %v3658
        %v3724 = vpack.c.bf16 %v3445, %v3442
        %v3725 = vpack.c.bf16 %v3661, %v3660
        %v3726 = vpack.c.bf16 %v3453, %v3450
        %v3727 = vpack.c.bf16 %v3663, %v3662
        %v3728 = vpack.c.bf16 %v3461, %v3458
        %v3729 = vpack.c.bf16 %v3665, %v3664
        %v3730 = vpack.c.bf16 %v3469, %v3466
        %v3731 = vpack.c.bf16 %v3667, %v3666
        %v3732 = vpack.c.bf16 %v3477, %v3474
        %v3733 = vpack.c.bf16 %v3669, %v3668
        %v3734 = vpack.c.bf16 %v3485, %v3482
        %v3735 = vpack.c.bf16 %v3671, %v3670
        %v3736 = vpack.c.bf16 %v3493, %v3490
        %v3737 = vpack.c.bf16 %v3673, %v3672
        %v3738 = vpack.c.bf16 %v3501, %v3498
        %v3739 = vpack.c.bf16 %v3675, %v3674
        %v3740 = vpack.c.bf16 %v3509, %v3506
        %v3741 = vpack.c.bf16 %v3677, %v3676
        %v3742 = vpack.c.bf16 %v3517, %v3514
        %v3743 = vpack.c.bf16 %v3679, %v3678
        %v3744 = vpack.c.bf16 %v3525, %v3522
        %v3745 = vpack.c.bf16 %v3681, %v3680
        %v3746 = vpack.c.bf16 %v3533, %v3530
        %v3747 = vpack.c.bf16 %v3683, %v3682
        %v3748 = vpack.c.bf16 %v3541, %v3538
        %v3749 = vpack.c.bf16 %v3685, %v3684
        %v3750 = vpack.c.bf16 %v3549, %v3546
        %v3751 = vpack.c.bf16 %v3687, %v3686
        %v3752 = vpack.c.bf16 %v3557, %v3554
        %v3753 = vpack.c.bf16 %v3689, %v3688
        %v3754 = vpack.c.bf16 %v3565, %v3562
        %v3755 = vpack.c.bf16 %v3691, %v3690
        %v3756 = vpack.c.bf16 %v3573, %v3570
        %v3757 = vpack.c.bf16 %v3693, %v3692
        %v3758 = vpack.c.bf16 %v3581, %v3578
        %v3759 = vpack.c.bf16 %v3695, %v3694
        %v3760 = vpack.c.bf16 %v3589, %v3586
        %v3761 = vpack.c.bf16 %v3697, %v3696
        %v3762 = vpack.c.bf16 %v3597, %v3594
        %v3763 = vpack.c.bf16 %v3699, %v3698
        %v3764 = vpack.c.bf16 %v3605, %v3602
        %v3765 = vpack.c.bf16 %v3701, %v3700
        %v3766 = vpack.c.bf16 %v3613, %v3610
        %v3767 = vpack.c.bf16 %v3703, %v3702
        %v3768 = vpack.c.bf16 %v3621, %v3618
        %v3769 = vpack.c.bf16 %v3705, %v3704
        %v3770 = vpack.c.bf16 %v3629, %v3626
        %v3771 = vpack.c.bf16 %v3707, %v3706
        %v3772 = vpack.c.bf16 %v3637, %v3634
        %v3773 = vpack.c.bf16 %v3709, %v3708
        %v3774 = vpack.c.bf16 %v3645, %v3642
        %v3775 = vpack.c.bf16 %v3711, %v3710
        %v3776 = vld [vmem:[%s7] sm:$0xff]
        %v3777 = vld [vmem:[%s7 + $0x8] sm:$0xff]
        %v3778 = vld [vmem:[%s7 + $0x10] sm:$0xff]
        %v3779 = vld [vmem:[%s7 + $0x18] sm:$0xff]
        %v3780 = vld [vmem:[%s7 + $0x20] sm:$0xff]
        %v3781 = vld [vmem:[%s7 + $0x28] sm:$0xff]
        %v3782 = vld [vmem:[%s7 + $0x30] sm:$0xff]
        %v3783 = vld [vmem:[%s7 + $0x38] sm:$0xff]
        %v3784 = vld [vmem:[%s7 + $0x40] sm:$0xff]
        %v3785 = vld [vmem:[%s7 + $0x48] sm:$0xff]
        %v3786 = vld [vmem:[%s7 + $0x50] sm:$0xff]
        %v3787 = vld [vmem:[%s7 + $0x58] sm:$0xff]
        %v3788 = vld [vmem:[%s7 + $0x60] sm:$0xff]
        %v3789 = vld [vmem:[%s7 + $0x68] sm:$0xff]
        %v3790 = vld [vmem:[%s7 + $0x70] sm:$0xff]
        %v3791 = vld [vmem:[%s7 + $0x78] sm:$0xff]
        %v3792 = vld [vmem:[%s7 + $0x80] sm:$0xff]
        %v3793 = vld [vmem:[%s7 + $0x88] sm:$0xff]
        %v3794 = vld [vmem:[%s7 + $0x90] sm:$0xff]
        %v3795 = vld [vmem:[%s7 + $0x98] sm:$0xff]
        %v3796 = vld [vmem:[%s7 + $0xa0] sm:$0xff]
        %v3797 = vld [vmem:[%s7 + $0xa8] sm:$0xff]
        %v3798 = vld [vmem:[%s7 + $0xb0] sm:$0xff]
        %v3799 = vld [vmem:[%s7 + $0xb8] sm:$0xff]
        %v3800 = vld [vmem:[%s7 + $0xc0] sm:$0xff]
        %v3801 = vld [vmem:[%s7 + $0xc8] sm:$0xff]
        %v3802 = vld [vmem:[%s7 + $0xd0] sm:$0xff]
        %v3803 = vld [vmem:[%s7 + $0xd8] sm:$0xff]
        %v3804 = vld [vmem:[%s7 + $0xe0] sm:$0xff]
        %v3805 = vld [vmem:[%s7 + $0xe8] sm:$0xff]
        %v3806 = vld [vmem:[%s7 + $0xf0] sm:$0xff]
        %v3807 = vld [vmem:[%s7 + $0xf8] sm:$0xff]
        %v3840 = vunpack.c.l.b16 %v3776
        %v3841 = vunpack.c.h.b16 %v3776
        %v3842 = vunpack.c.l.b16 %v3777
        %v3843 = vunpack.c.h.b16 %v3777
        %v3844 = vunpack.c.l.b16 %v3778
        %v3845 = vunpack.c.h.b16 %v3778
        %v3846 = vunpack.c.l.b16 %v3779
        %v3847 = vunpack.c.h.b16 %v3779
        %v3848 = vunpack.c.l.b16 %v3780
        %v3849 = vunpack.c.h.b16 %v3780
        %v3850 = vunpack.c.l.b16 %v3781
        %v3851 = vunpack.c.h.b16 %v3781
        %v3852 = vunpack.c.l.b16 %v3782
        %v3853 = vunpack.c.h.b16 %v3782
        %v3854 = vunpack.c.l.b16 %v3783
        %v3855 = vunpack.c.h.b16 %v3783
        %v3856 = vunpack.c.l.b16 %v3784
        %v3857 = vunpack.c.h.b16 %v3784
        %v3858 = vunpack.c.l.b16 %v3785
        %v3859 = vunpack.c.h.b16 %v3785
        %v3860 = vunpack.c.l.b16 %v3786
        %v3861 = vunpack.c.h.b16 %v3786
        %v3862 = vunpack.c.l.b16 %v3787
        %v3863 = vunpack.c.h.b16 %v3787
        %v3864 = vunpack.c.l.b16 %v3788
        %v3865 = vunpack.c.h.b16 %v3788
        %v3866 = vunpack.c.l.b16 %v3789
        %v3867 = vunpack.c.h.b16 %v3789
        %v3868 = vunpack.c.l.b16 %v3790
        %v3869 = vunpack.c.h.b16 %v3790
        %v3870 = vunpack.c.l.b16 %v3791
        %v3871 = vunpack.c.h.b16 %v3791
        %v3872 = vunpack.c.l.b16 %v3792
        %v3873 = vunpack.c.h.b16 %v3792
        %v3874 = vunpack.c.l.b16 %v3793
        %v3875 = vunpack.c.h.b16 %v3793
        %v3876 = vunpack.c.l.b16 %v3794
        %v3877 = vunpack.c.h.b16 %v3794
        %v3878 = vunpack.c.l.b16 %v3795
        %v3879 = vunpack.c.h.b16 %v3795
        %v3880 = vunpack.c.l.b16 %v3796
        %v3881 = vunpack.c.h.b16 %v3796
        %v3882 = vunpack.c.l.b16 %v3797
        %v3883 = vunpack.c.h.b16 %v3797
        %v3884 = vunpack.c.l.b16 %v3798
        %v3885 = vunpack.c.h.b16 %v3798
        %v3886 = vunpack.c.l.b16 %v3799
        %v3887 = vunpack.c.h.b16 %v3799
        %v3888 = vunpack.c.l.b16 %v3800
        %v3889 = vunpack.c.h.b16 %v3800
        %v3890 = vunpack.c.l.b16 %v3801
        %v3891 = vunpack.c.h.b16 %v3801
        %v3892 = vunpack.c.l.b16 %v3802
        %v3893 = vunpack.c.h.b16 %v3802
        %v3894 = vunpack.c.l.b16 %v3803
        %v3895 = vunpack.c.h.b16 %v3803
        %v3896 = vunpack.c.l.b16 %v3804
        %v3897 = vunpack.c.h.b16 %v3804
        %v3898 = vunpack.c.l.b16 %v3805
        %v3899 = vunpack.c.h.b16 %v3805
        %v3900 = vunpack.c.l.b16 %v3806
        %v3901 = vunpack.c.h.b16 %v3806
        %v3902 = vunpack.c.l.b16 %v3807
        %v3903 = vunpack.c.h.b16 %v3807
        %v3904 = vpack.c.b16 %v3842, %v3840
        %v3905 = vpack.c.b16 %v3843, %v3841
        %v3906 = vpack.c.b16 %v3846, %v3844
        %v3907 = vpack.c.b16 %v3847, %v3845
        %v3908 = vpack.c.b16 %v3850, %v3848
        %v3909 = vpack.c.b16 %v3851, %v3849
        %v3910 = vpack.c.b16 %v3854, %v3852
        %v3911 = vpack.c.b16 %v3855, %v3853
        %v3912 = vpack.c.b16 %v3858, %v3856
        %v3913 = vpack.c.b16 %v3859, %v3857
        %v3914 = vpack.c.b16 %v3862, %v3860
        %v3915 = vpack.c.b16 %v3863, %v3861
        %v3916 = vpack.c.b16 %v3866, %v3864
        %v3917 = vpack.c.b16 %v3867, %v3865
        %v3918 = vpack.c.b16 %v3870, %v3868
        %v3919 = vpack.c.b16 %v3871, %v3869
        %v3920 = vpack.c.b16 %v3874, %v3872
        %v3921 = vpack.c.b16 %v3875, %v3873
        %v3922 = vpack.c.b16 %v3878, %v3876
        %v3923 = vpack.c.b16 %v3879, %v3877
        %v3924 = vpack.c.b16 %v3882, %v3880
        %v3925 = vpack.c.b16 %v3883, %v3881
        %v3926 = vpack.c.b16 %v3886, %v3884
        %v3927 = vpack.c.b16 %v3887, %v3885
        %v3928 = vpack.c.b16 %v3890, %v3888
        %v3929 = vpack.c.b16 %v3891, %v3889
        %v3930 = vpack.c.b16 %v3894, %v3892
        %v3931 = vpack.c.b16 %v3895, %v3893
        %v3932 = vpack.c.b16 %v3898, %v3896
        %v3933 = vpack.c.b16 %v3899, %v3897
        %v3934 = vpack.c.b16 %v3902, %v3900
        %v3935 = vpack.c.b16 %v3903, %v3901
        %3968 = vmatprep.subr.bf16.mxu0 %v3905
        %3969 = vmatpush1.bf16.msra.mxu0 %v3904
        %3970 = vmatprep.subr.bf16.mxu0 %v3907
        %3971 = vmatpush1.bf16.msra.mxu0 %v3906
        %3972 = vmatprep.subr.bf16.mxu0 %v3909
        %3973 = vmatpush1.bf16.msra.mxu0 %v3908
        %3974 = vmatprep.subr.bf16.mxu0 %v3911
        %3975 = vmatpush1.bf16.msra.mxu0 %v3910
        %3976 = vmatprep.subr.bf16.mxu0 %v3913
        %3977 = vmatpush1.bf16.msra.mxu0 %v3912
        %3978 = vmatprep.subr.bf16.mxu0 %v3915
        %3979 = vmatpush1.bf16.msra.mxu0 %v3914
        %3980 = vmatprep.subr.bf16.mxu0 %v3917
        %3981 = vmatpush1.bf16.msra.mxu0 %v3916
        %3982 = vmatprep.subr.bf16.mxu0 %v3919
        %3983 = vmatpush1.bf16.msra.mxu0 %v3918
        %3984 = vmatprep.subr.bf16.mxu0 %v3921
        %3985 = vmatpush1.bf16.msra.mxu0 %v3920
        %3986 = vmatprep.subr.bf16.mxu0 %v3923
        %3987 = vmatpush1.bf16.msra.mxu0 %v3922
        %3988 = vmatprep.subr.bf16.mxu0 %v3925
        %3989 = vmatpush1.bf16.msra.mxu0 %v3924
        %3990 = vmatprep.subr.bf16.mxu0 %v3927
        %3991 = vmatpush1.bf16.msra.mxu0 %v3926
        %3992 = vmatprep.subr.bf16.mxu0 %v3929
        %3993 = vmatpush1.bf16.msra.mxu0 %v3928
        %3994 = vmatprep.subr.bf16.mxu0 %v3931
        %3995 = vmatpush1.bf16.msra.mxu0 %v3930
        %3996 = vmatprep.subr.bf16.mxu0 %v3933
        %3997 = vmatpush1.bf16.msra.mxu0 %v3932
        %3998 = vmatprep.subr.bf16.mxu0 %v3935
        %3999 = vmatpush1.bf16.msra.mxu0 %v3934
        %4000 = vmatprep.mubr.bf16.mxu0 %v3713
        %4001 = vmatmul.mubr.bf16.gmra.mrb[0].mxu0 %v3712
        %v4002 = vpop.f32.mrb[0].mxu0
        %v4003 = vadd.f32 %v1164, %v4002
        %v4004 = vpop.f32.mrb[0].mxu0
        %v4005 = vadd.f32 %v1515, %v4004
        %v4006 = vpop.f32.mrb[0].mxu0
        %v4007 = vadd.f32 %v1168, %v4006
        %v4008 = vpop.f32.mrb[0].mxu0
        %v4009 = vadd.f32 %v1518, %v4008
        %4010 = vmatprep.mubr.bf16.mxu0 %v3715
        %4011 = vmatmul.mubr.bf16.gmra.mrb[0].mxu0 %v3714
        %v4012 = vpop.f32.mrb[0].mxu0
        %v4013 = vadd.f32 %v1174, %v4012
        %v4014 = vpop.f32.mrb[0].mxu0
        %v4015 = vadd.f32 %v1523, %v4014
        %v4016 = vpop.f32.mrb[0].mxu0
        %v4017 = vadd.f32 %v1178, %v4016
        %v4018 = vpop.f32.mrb[0].mxu0
        %v4019 = vadd.f32 %v1526, %v4018
        %4020 = vmatprep.mubr.bf16.mxu0 %v3717
        %4021 = vmatmul.mubr.bf16.gmra.mrb[0].mxu0 %v3716
        %v4022 = vpop.f32.mrb[0].mxu0
        %v4023 = vadd.f32 %v1184, %v4022
        %v4024 = vpop.f32.mrb[0].mxu0
        %v4025 = vadd.f32 %v1531, %v4024
        %v4026 = vpop.f32.mrb[0].mxu0
        %v4027 = vadd.f32 %v1188, %v4026
        %v4028 = vpop.f32.mrb[0].mxu0
        %v4029 = vadd.f32 %v1534, %v4028
        %4030 = vmatprep.mubr.bf16.mxu0 %v3719
        %4031 = vmatmul.mubr.bf16.gmra.mrb[0].mxu0 %v3718
        %v4032 = vpop.f32.mrb[0].mxu0
        %v4033 = vadd.f32 %v1194, %v4032
        %v4034 = vpop.f32.mrb[0].mxu0
        %v4035 = vadd.f32 %v1539, %v4034
        %v4036 = vpop.f32.mrb[0].mxu0
        %v4037 = vadd.f32 %v1198, %v4036
        %v4038 = vpop.f32.mrb[0].mxu0
        %v4039 = vadd.f32 %v1542, %v4038
        %4040 = vmatprep.mubr.bf16.mxu0 %v3721
        %4041 = vmatmul.mubr.bf16.gmra.mrb[0].mxu0 %v3720
        %v4042 = vpop.f32.mrb[0].mxu0
        %v4043 = vadd.f32 %v1204, %v4042
        %v4044 = vpop.f32.mrb[0].mxu0
        %v4045 = vadd.f32 %v1547, %v4044
        %v4046 = vpop.f32.mrb[0].mxu0
        %v4047 = vadd.f32 %v1208, %v4046
        %v4048 = vpop.f32.mrb[0].mxu0
        %v4049 = vadd.f32 %v1550, %v4048
        %4050 = vmatprep.mubr.bf16.mxu0 %v3723
        %4051 = vmatmul.mubr.bf16.gmra.mrb[0].mxu0 %v3722
        %v4052 = vpop.f32.mrb[0].mxu0
        %v4053 = vadd.f32 %v1214, %v4052
        %v4054 = vpop.f32.mrb[0].mxu0
        %v4055 = vadd.f32 %v1555, %v4054
        %v4056 = vpop.f32.mrb[0].mxu0
        %v4057 = vadd.f32 %v1218, %v4056
        %v4058 = vpop.f32.mrb[0].mxu0
        %v4059 = vadd.f32 %v1558, %v4058
        %4060 = vmatprep.mubr.bf16.mxu0 %v3725
        %4061 = vmatmul.mubr.bf16.gmra.mrb[0].mxu0 %v3724
        %v4062 = vpop.f32.mrb[0].mxu0
        %v4063 = vadd.f32 %v1224, %v4062
        %v4064 = vpop.f32.mrb[0].mxu0
        %v4065 = vadd.f32 %v1563, %v4064
        %v4066 = vpop.f32.mrb[0].mxu0
        %v4067 = vadd.f32 %v1228, %v4066
        %v4068 = vpop.f32.mrb[0].mxu0
        %v4069 = vadd.f32 %v1566, %v4068
        %4070 = vmatprep.mubr.bf16.mxu0 %v3727
        %4071 = vmatmul.mubr.bf16.gmra.mrb[0].mxu0 %v3726
        %v4072 = vpop.f32.mrb[0].mxu0
        %v4073 = vadd.f32 %v1234, %v4072
        %v4074 = vpop.f32.mrb[0].mxu0
        %v4075 = vadd.f32 %v1571, %v4074
        %v4076 = vpop.f32.mrb[0].mxu0
        %v4077 = vadd.f32 %v1238, %v4076
        %v4078 = vpop.f32.mrb[0].mxu0
        %v4079 = vadd.f32 %v1574, %v4078
        %4080 = vmatprep.mubr.bf16.mxu0 %v3729
        %4081 = vmatmul.mubr.bf16.gmra.mrb[0].mxu0 %v3728
        %v4082 = vpop.f32.mrb[0].mxu0
        %v4083 = vadd.f32 %v1244, %v4082
        %v4084 = vpop.f32.mrb[0].mxu0
        %v4085 = vadd.f32 %v1579, %v4084
        %v4086 = vpop.f32.mrb[0].mxu0
        %v4087 = vadd.f32 %v1248, %v4086
        %v4088 = vpop.f32.mrb[0].mxu0
        %v4089 = vadd.f32 %v1582, %v4088
        %4090 = vmatprep.mubr.bf16.mxu0 %v3731
        %4091 = vmatmul.mubr.bf16.gmra.mrb[0].mxu0 %v3730
        %v4092 = vpop.f32.mrb[0].mxu0
        %v4093 = vadd.f32 %v1254, %v4092
        %v4094 = vpop.f32.mrb[0].mxu0
        %v4095 = vadd.f32 %v1587, %v4094
        %v4096 = vpop.f32.mrb[0].mxu0
        %v4097 = vadd.f32 %v1258, %v4096
        %v4098 = vpop.f32.mrb[0].mxu0
        %v4099 = vadd.f32 %v1590, %v4098
        %4100 = vmatprep.mubr.bf16.mxu0 %v3733
        %4101 = vmatmul.mubr.bf16.gmra.mrb[0].mxu0 %v3732
        %v4102 = vpop.f32.mrb[0].mxu0
        %v4103 = vadd.f32 %v1264, %v4102
        %v4104 = vpop.f32.mrb[0].mxu0
        %v4105 = vadd.f32 %v1595, %v4104
        %v4106 = vpop.f32.mrb[0].mxu0
        %v4107 = vadd.f32 %v1268, %v4106
        %v4108 = vpop.f32.mrb[0].mxu0
        %v4109 = vadd.f32 %v1598, %v4108
        %4110 = vmatprep.mubr.bf16.mxu0 %v3735
        %4111 = vmatmul.mubr.bf16.gmra.mrb[0].mxu0 %v3734
        %v4112 = vpop.f32.mrb[0].mxu0
        %v4113 = vadd.f32 %v1274, %v4112
        %v4114 = vpop.f32.mrb[0].mxu0
        %v4115 = vadd.f32 %v1603, %v4114
        %v4116 = vpop.f32.mrb[0].mxu0
        %v4117 = vadd.f32 %v1278, %v4116
        %v4118 = vpop.f32.mrb[0].mxu0
        %v4119 = vadd.f32 %v1606, %v4118
        %4120 = vmatprep.mubr.bf16.mxu0 %v3737
        %4121 = vmatmul.mubr.bf16.gmra.mrb[0].mxu0 %v3736
        %v4122 = vpop.f32.mrb[0].mxu0
        %v4123 = vadd.f32 %v1284, %v4122
        %v4124 = vpop.f32.mrb[0].mxu0
        %v4125 = vadd.f32 %v1611, %v4124
        %v4126 = vpop.f32.mrb[0].mxu0
        %v4127 = vadd.f32 %v1288, %v4126
        %v4128 = vpop.f32.mrb[0].mxu0
        %v4129 = vadd.f32 %v1614, %v4128
        %4130 = vmatprep.mubr.bf16.mxu0 %v3739
        %4131 = vmatmul.mubr.bf16.gmra.mrb[0].mxu0 %v3738
        %v4132 = vpop.f32.mrb[0].mxu0
        %v4133 = vadd.f32 %v1294, %v4132
        %v4134 = vpop.f32.mrb[0].mxu0
        %v4135 = vadd.f32 %v1619, %v4134
        %v4136 = vpop.f32.mrb[0].mxu0
        %v4137 = vadd.f32 %v1298, %v4136
        %v4138 = vpop.f32.mrb[0].mxu0
        %v4139 = vadd.f32 %v1622, %v4138
        %4140 = vmatprep.mubr.bf16.mxu0 %v3741
        %4141 = vmatmul.mubr.bf16.gmra.mrb[0].mxu0 %v3740
        %v4142 = vpop.f32.mrb[0].mxu0
        %v4143 = vadd.f32 %v1304, %v4142
        %v4144 = vpop.f32.mrb[0].mxu0
        %v4145 = vadd.f32 %v1627, %v4144
        %v4146 = vpop.f32.mrb[0].mxu0
        %v4147 = vadd.f32 %v1308, %v4146
        %v4148 = vpop.f32.mrb[0].mxu0
        %v4149 = vadd.f32 %v1630, %v4148
        %4150 = vmatprep.mubr.bf16.mxu0 %v3743
        %4151 = vmatmul.mubr.bf16.gmra.mrb[0].mxu0 %v3742
        %v4152 = vpop.f32.mrb[0].mxu0
        %v4153 = vadd.f32 %v1314, %v4152
        %v4154 = vpop.f32.mrb[0].mxu0
        %v4155 = vadd.f32 %v1635, %v4154
        %v4156 = vpop.f32.mrb[0].mxu0
        %v4157 = vadd.f32 %v1318, %v4156
        %v4158 = vpop.f32.mrb[0].mxu0
        %v4159 = vadd.f32 %v1638, %v4158
        %4160 = vmatprep.mubr.bf16.mxu0 %v3745
        %4161 = vmatmul.mubr.bf16.gmra.mrb[0].mxu0 %v3744
        %v4162 = vpop.f32.mrb[0].mxu0
        %v4163 = vadd.f32 %v1324, %v4162
        %v4164 = vpop.f32.mrb[0].mxu0
        %v4165 = vadd.f32 %v1643, %v4164
        %v4166 = vpop.f32.mrb[0].mxu0
        %v4167 = vadd.f32 %v1328, %v4166
        %v4168 = vpop.f32.mrb[0].mxu0
        %v4169 = vadd.f32 %v1646, %v4168
        %4170 = vmatprep.mubr.bf16.mxu0 %v3747
        %4171 = vmatmul.mubr.bf16.gmra.mrb[0].mxu0 %v3746
        %v4172 = vpop.f32.mrb[0].mxu0
        %v4173 = vadd.f32 %v1334, %v4172
        %v4174 = vpop.f32.mrb[0].mxu0
        %v4175 = vadd.f32 %v1651, %v4174
        %v4176 = vpop.f32.mrb[0].mxu0
        %v4177 = vadd.f32 %v1338, %v4176
        %v4178 = vpop.f32.mrb[0].mxu0
        %v4179 = vadd.f32 %v1654, %v4178
        %4180 = vmatprep.mubr.bf16.mxu0 %v3749
        %4181 = vmatmul.mubr.bf16.gmra.mrb[0].mxu0 %v3748
        %v4182 = vpop.f32.mrb[0].mxu0
        %v4183 = vadd.f32 %v1344, %v4182
        %v4184 = vpop.f32.mrb[0].mxu0
        %v4185 = vadd.f32 %v1659, %v4184
        %v4186 = vpop.f32.mrb[0].mxu0
        %v4187 = vadd.f32 %v1348, %v4186
        %v4188 = vpop.f32.mrb[0].mxu0
        %v4189 = vadd.f32 %v1662, %v4188
        %4190 = vmatprep.mubr.bf16.mxu0 %v3751
        %4191 = vmatmul.mubr.bf16.gmra.mrb[0].mxu0 %v3750
        %v4192 = vpop.f32.mrb[0].mxu0
        %v4193 = vadd.f32 %v1354, %v4192
        %v4194 = vpop.f32.mrb[0].mxu0
        %v4195 = vadd.f32 %v1667, %v4194
        %v4196 = vpop.f32.mrb[0].mxu0
        %v4197 = vadd.f32 %v1358, %v4196
        %v4198 = vpop.f32.mrb[0].mxu0
        %v4199 = vadd.f32 %v1670, %v4198
        %4200 = vmatprep.mubr.bf16.mxu0 %v3753
        %4201 = vmatmul.mubr.bf16.gmra.mrb[0].mxu0 %v3752
        %v4202 = vpop.f32.mrb[0].mxu0
        %v4203 = vadd.f32 %v1364, %v4202
        %v4204 = vpop.f32.mrb[0].mxu0
        %v4205 = vadd.f32 %v1675, %v4204
        %v4206 = vpop.f32.mrb[0].mxu0
        %v4207 = vadd.f32 %v1368, %v4206
        %v4208 = vpop.f32.mrb[0].mxu0
        %v4209 = vadd.f32 %v1678, %v4208
        %4210 = vmatprep.mubr.bf16.mxu0 %v3755
        %4211 = vmatmul.mubr.bf16.gmra.mrb[0].mxu0 %v3754
        %v4212 = vpop.f32.mrb[0].mxu0
        %v4213 = vadd.f32 %v1374, %v4212
        %v4214 = vpop.f32.mrb[0].mxu0
        %v4215 = vadd.f32 %v1683, %v4214
        %v4216 = vpop.f32.mrb[0].mxu0
        %v4217 = vadd.f32 %v1378, %v4216
        %v4218 = vpop.f32.mrb[0].mxu0
        %v4219 = vadd.f32 %v1686, %v4218
        %4220 = vmatprep.mubr.bf16.mxu0 %v3757
        %4221 = vmatmul.mubr.bf16.gmra.mrb[0].mxu0 %v3756
        %v4222 = vpop.f32.mrb[0].mxu0
        %v4223 = vadd.f32 %v1384, %v4222
        %v4224 = vpop.f32.mrb[0].mxu0
        %v4225 = vadd.f32 %v1691, %v4224
        %v4226 = vpop.f32.mrb[0].mxu0
        %v4227 = vadd.f32 %v1388, %v4226
        %v4228 = vpop.f32.mrb[0].mxu0
        %v4229 = vadd.f32 %v1694, %v4228
        %4230 = vmatprep.mubr.bf16.mxu0 %v3759
        %4231 = vmatmul.mubr.bf16.gmra.mrb[0].mxu0 %v3758
        %v4232 = vpop.f32.mrb[0].mxu0
        %v4233 = vadd.f32 %v1394, %v4232
        %v4234 = vpop.f32.mrb[0].mxu0
        %v4235 = vadd.f32 %v1699, %v4234
        %v4236 = vpop.f32.mrb[0].mxu0
        %v4237 = vadd.f32 %v1398, %v4236
        %v4238 = vpop.f32.mrb[0].mxu0
        %v4239 = vadd.f32 %v1702, %v4238
        %4240 = vmatprep.mubr.bf16.mxu0 %v3761
        %4241 = vmatmul.mubr.bf16.gmra.mrb[0].mxu0 %v3760
        %v4242 = vpop.f32.mrb[0].mxu0
        %v4243 = vadd.f32 %v1404, %v4242
        %v4244 = vpop.f32.mrb[0].mxu0
        %v4245 = vadd.f32 %v1707, %v4244
        %v4246 = vpop.f32.mrb[0].mxu0
        %v4247 = vadd.f32 %v1408, %v4246
        %v4248 = vpop.f32.mrb[0].mxu0
        %v4249 = vadd.f32 %v1710, %v4248
        %4250 = vmatprep.mubr.bf16.mxu0 %v3763
        %4251 = vmatmul.mubr.bf16.gmra.mrb[0].mxu0 %v3762
        %v4252 = vpop.f32.mrb[0].mxu0
        %v4253 = vadd.f32 %v1414, %v4252
        %v4254 = vpop.f32.mrb[0].mxu0
        %v4255 = vadd.f32 %v1715, %v4254
        %v4256 = vpop.f32.mrb[0].mxu0
        %v4257 = vadd.f32 %v1418, %v4256
        %v4258 = vpop.f32.mrb[0].mxu0
        %v4259 = vadd.f32 %v1718, %v4258
        %4260 = vmatprep.mubr.bf16.mxu0 %v3765
        %4261 = vmatmul.mubr.bf16.gmra.mrb[0].mxu0 %v3764
        %v4262 = vpop.f32.mrb[0].mxu0
        %v4263 = vadd.f32 %v1424, %v4262
        %v4264 = vpop.f32.mrb[0].mxu0
        %v4265 = vadd.f32 %v1723, %v4264
        %v4266 = vpop.f32.mrb[0].mxu0
        %v4267 = vadd.f32 %v1428, %v4266
        %v4268 = vpop.f32.mrb[0].mxu0
        %v4269 = vadd.f32 %v1726, %v4268
        %4270 = vmatprep.mubr.bf16.mxu0 %v3767
        %4271 = vmatmul.mubr.bf16.gmra.mrb[0].mxu0 %v3766
        %v4272 = vpop.f32.mrb[0].mxu0
        %v4273 = vadd.f32 %v1434, %v4272
        %v4274 = vpop.f32.mrb[0].mxu0
        %v4275 = vadd.f32 %v1731, %v4274
        %v4276 = vpop.f32.mrb[0].mxu0
        %v4277 = vadd.f32 %v1438, %v4276
        %v4278 = vpop.f32.mrb[0].mxu0
        %v4279 = vadd.f32 %v1734, %v4278
        %4280 = vmatprep.mubr.bf16.mxu0 %v3769
        %4281 = vmatmul.mubr.bf16.gmra.mrb[0].mxu0 %v3768
        %v4282 = vpop.f32.mrb[0].mxu0
        %v4283 = vadd.f32 %v1444, %v4282
        %v4284 = vpop.f32.mrb[0].mxu0
        %v4285 = vadd.f32 %v1739, %v4284
        %v4286 = vpop.f32.mrb[0].mxu0
        %v4287 = vadd.f32 %v1448, %v4286
        %v4288 = vpop.f32.mrb[0].mxu0
        %v4289 = vadd.f32 %v1742, %v4288
        %4290 = vmatprep.mubr.bf16.mxu0 %v3771
        %4291 = vmatmul.mubr.bf16.gmra.mrb[0].mxu0 %v3770
        %v4292 = vpop.f32.mrb[0].mxu0
        %v4293 = vadd.f32 %v1454, %v4292
        %v4294 = vpop.f32.mrb[0].mxu0
        %v4295 = vadd.f32 %v1747, %v4294
        %v4296 = vpop.f32.mrb[0].mxu0
        %v4297 = vadd.f32 %v1458, %v4296
        %v4298 = vpop.f32.mrb[0].mxu0
        %v4299 = vadd.f32 %v1750, %v4298
        %4300 = vmatprep.mubr.bf16.mxu0 %v3773
        %4301 = vmatmul.mubr.bf16.gmra.mrb[0].mxu0 %v3772
        %v4302 = vpop.f32.mrb[0].mxu0
        %v4303 = vadd.f32 %v1464, %v4302
        %v4304 = vpop.f32.mrb[0].mxu0
        %v4305 = vadd.f32 %v1755, %v4304
        %v4306 = vpop.f32.mrb[0].mxu0
        %v4307 = vadd.f32 %v1468, %v4306
        %v4308 = vpop.f32.mrb[0].mxu0
        %v4309 = vadd.f32 %v1758, %v4308
        %4310 = vmatprep.mubr.bf16.mxu0 %v3775
        %4311 = vmatmul.mubr.bf16.gmra.mrb[0].mxu0 %v3774
        %v4312 = vpop.f32.mrb[0].mxu0
        %v4313 = vadd.f32 %v1474, %v4312
        %v4314 = vpop.f32.mrb[0].mxu0
        %v4315 = vadd.f32 %v1763, %v4314
        %v4316 = vpop.f32.mrb[0].mxu0
        %v4317 = vadd.f32 %v1478, %v4316
        %v4318 = vpop.f32.mrb[0].mxu0
        %v4319 = vadd.f32 %v1766, %v4318
        %4320 = vdwg.mxu0
        %v4321 = vld [vmem:[%s8] sm:$0x3]
        %v4323 = vlaneseq
        %v4324 = vshrl.u32 %v4323, 7
        %v4325 = vsub.s32 0, %v4324
        %v4326 = vrot.slane %v4321, %v4325
        %v4327 = vlaneseq
        %v4328 = vshrl.u32 %v4327, 7
        %v4329 = vsub.s32 1, %v4328
        %v4330 = vrot.slane %v4321, %v4329
        %v4333 = vadd.f32 %v4003, %v4326
        %v4334 = vadd.f32 %v4005, %v4330
        %v4335 = vadd.f32 %v4007, %v4326
        %v4336 = vadd.f32 %v4009, %v4330
        %v4337 = vadd.f32 %v4013, %v4326
        %v4338 = vadd.f32 %v4015, %v4330
        %v4339 = vadd.f32 %v4017, %v4326
        %v4340 = vadd.f32 %v4019, %v4330
        %v4341 = vadd.f32 %v4023, %v4326
        %v4342 = vadd.f32 %v4025, %v4330
        %v4343 = vadd.f32 %v4027, %v4326
        %v4344 = vadd.f32 %v4029, %v4330
        %v4345 = vadd.f32 %v4033, %v4326
        %v4346 = vadd.f32 %v4035, %v4330
        %v4347 = vadd.f32 %v4037, %v4326
        %v4348 = vadd.f32 %v4039, %v4330
        %v4349 = vadd.f32 %v4043, %v4326
        %v4350 = vadd.f32 %v4045, %v4330
        %v4351 = vadd.f32 %v4047, %v4326
        %v4352 = vadd.f32 %v4049, %v4330
        %v4353 = vadd.f32 %v4053, %v4326
        %v4354 = vadd.f32 %v4055, %v4330
        %v4355 = vadd.f32 %v4057, %v4326
        %v4356 = vadd.f32 %v4059, %v4330
        %v4357 = vadd.f32 %v4063, %v4326
        %v4358 = vadd.f32 %v4065, %v4330
        %v4359 = vadd.f32 %v4067, %v4326
        %v4360 = vadd.f32 %v4069, %v4330
        %v4361 = vadd.f32 %v4073, %v4326
        %v4362 = vadd.f32 %v4075, %v4330
        %v4363 = vadd.f32 %v4077, %v4326
        %v4364 = vadd.f32 %v4079, %v4330
        %v4365 = vadd.f32 %v4083, %v4326
        %v4366 = vadd.f32 %v4085, %v4330
        %v4367 = vadd.f32 %v4087, %v4326
        %v4368 = vadd.f32 %v4089, %v4330
        %v4369 = vadd.f32 %v4093, %v4326
        %v4370 = vadd.f32 %v4095, %v4330
        %v4371 = vadd.f32 %v4097, %v4326
        %v4372 = vadd.f32 %v4099, %v4330
        %v4373 = vadd.f32 %v4103, %v4326
        %v4374 = vadd.f32 %v4105, %v4330
        %v4375 = vadd.f32 %v4107, %v4326
        %v4376 = vadd.f32 %v4109, %v4330
        %v4377 = vadd.f32 %v4113, %v4326
        %v4378 = vadd.f32 %v4115, %v4330
        %v4379 = vadd.f32 %v4117, %v4326
        %v4380 = vadd.f32 %v4119, %v4330
        %v4381 = vadd.f32 %v4123, %v4326
        %v4382 = vadd.f32 %v4125, %v4330
        %v4383 = vadd.f32 %v4127, %v4326
        %v4384 = vadd.f32 %v4129, %v4330
        %v4385 = vadd.f32 %v4133, %v4326
        %v4386 = vadd.f32 %v4135, %v4330
        %v4387 = vadd.f32 %v4137, %v4326
        %v4388 = vadd.f32 %v4139, %v4330
        %v4389 = vadd.f32 %v4143, %v4326
        %v4390 = vadd.f32 %v4145, %v4330
        %v4391 = vadd.f32 %v4147, %v4326
        %v4392 = vadd.f32 %v4149, %v4330
        %v4393 = vadd.f32 %v4153, %v4326
        %v4394 = vadd.f32 %v4155, %v4330
        %v4395 = vadd.f32 %v4157, %v4326
        %v4396 = vadd.f32 %v4159, %v4330
        %v4397 = vadd.f32 %v4163, %v4326
        %v4398 = vadd.f32 %v4165, %v4330
        %v4399 = vadd.f32 %v4167, %v4326
        %v4400 = vadd.f32 %v4169, %v4330
        %v4401 = vadd.f32 %v4173, %v4326
        %v4402 = vadd.f32 %v4175, %v4330
        %v4403 = vadd.f32 %v4177, %v4326
        %v4404 = vadd.f32 %v4179, %v4330
        %v4405 = vadd.f32 %v4183, %v4326
        %v4406 = vadd.f32 %v4185, %v4330
        %v4407 = vadd.f32 %v4187, %v4326
        %v4408 = vadd.f32 %v4189, %v4330
        %v4409 = vadd.f32 %v4193, %v4326
        %v4410 = vadd.f32 %v4195, %v4330
        %v4411 = vadd.f32 %v4197, %v4326
        %v4412 = vadd.f32 %v4199, %v4330
        %v4413 = vadd.f32 %v4203, %v4326
        %v4414 = vadd.f32 %v4205, %v4330
        %v4415 = vadd.f32 %v4207, %v4326
        %v4416 = vadd.f32 %v4209, %v4330
        %v4417 = vadd.f32 %v4213, %v4326
        %v4418 = vadd.f32 %v4215, %v4330
        %v4419 = vadd.f32 %v4217, %v4326
        %v4420 = vadd.f32 %v4219, %v4330
        %v4421 = vadd.f32 %v4223, %v4326
        %v4422 = vadd.f32 %v4225, %v4330
        %v4423 = vadd.f32 %v4227, %v4326
        %v4424 = vadd.f32 %v4229, %v4330
        %v4425 = vadd.f32 %v4233, %v4326
        %v4426 = vadd.f32 %v4235, %v4330
        %v4427 = vadd.f32 %v4237, %v4326
        %v4428 = vadd.f32 %v4239, %v4330
        %v4429 = vadd.f32 %v4243, %v4326
        %v4430 = vadd.f32 %v4245, %v4330
        %v4431 = vadd.f32 %v4247, %v4326
        %v4432 = vadd.f32 %v4249, %v4330
        %v4433 = vadd.f32 %v4253, %v4326
        %v4434 = vadd.f32 %v4255, %v4330
        %v4435 = vadd.f32 %v4257, %v4326
        %v4436 = vadd.f32 %v4259, %v4330
        %v4437 = vadd.f32 %v4263, %v4326
        %v4438 = vadd.f32 %v4265, %v4330
        %v4439 = vadd.f32 %v4267, %v4326
        %v4440 = vadd.f32 %v4269, %v4330
        %v4441 = vadd.f32 %v4273, %v4326
        %v4442 = vadd.f32 %v4275, %v4330
        %v4443 = vadd.f32 %v4277, %v4326
        %v4444 = vadd.f32 %v4279, %v4330
        %v4445 = vadd.f32 %v4283, %v4326
        %v4446 = vadd.f32 %v4285, %v4330
        %v4447 = vadd.f32 %v4287, %v4326
        %v4448 = vadd.f32 %v4289, %v4330
        %v4449 = vadd.f32 %v4293, %v4326
        %v4450 = vadd.f32 %v4295, %v4330
        %v4451 = vadd.f32 %v4297, %v4326
        %v4452 = vadd.f32 %v4299, %v4330
        %v4453 = vadd.f32 %v4303, %v4326
        %v4454 = vadd.f32 %v4305, %v4330
        %v4455 = vadd.f32 %v4307, %v4326
        %v4456 = vadd.f32 %v4309, %v4330
        %v4457 = vadd.f32 %v4313, %v4326
        %v4458 = vadd.f32 %v4315, %v4330
        %v4459 = vadd.f32 %v4317, %v4326
        %v4460 = vadd.f32 %v4319, %v4330
        %v4461 = vmax.f32 %v4333, 0.0
        %v4462 = vmax.f32 %v4334, 0.0
        %v4463 = vmax.f32 %v4335, 0.0
        %v4464 = vmax.f32 %v4336, 0.0
        %v4465 = vmax.f32 %v4337, 0.0
        %v4466 = vmax.f32 %v4338, 0.0
        %v4467 = vmax.f32 %v4339, 0.0
        %v4468 = vmax.f32 %v4340, 0.0
        %v4469 = vmax.f32 %v4341, 0.0
        %v4470 = vmax.f32 %v4342, 0.0
        %v4471 = vmax.f32 %v4343, 0.0
        %v4472 = vmax.f32 %v4344, 0.0
        %v4473 = vmax.f32 %v4345, 0.0
        %v4474 = vmax.f32 %v4346, 0.0
        %v4475 = vmax.f32 %v4347, 0.0
        %v4476 = vmax.f32 %v4348, 0.0
        %v4477 = vmax.f32 %v4349, 0.0
        %v4478 = vmax.f32 %v4350, 0.0
        %v4479 = vmax.f32 %v4351, 0.0
        %v4480 = vmax.f32 %v4352, 0.0
        %v4481 = vmax.f32 %v4353, 0.0
        %v4482 = vmax.f32 %v4354, 0.0
        %v4483 = vmax.f32 %v4355, 0.0
        %v4484 = vmax.f32 %v4356, 0.0
        %v4485 = vmax.f32 %v4357, 0.0
        %v4486 = vmax.f32 %v4358, 0.0
        %v4487 = vmax.f32 %v4359, 0.0
        %v4488 = vmax.f32 %v4360, 0.0
        %v4489 = vmax.f32 %v4361, 0.0
        %v4490 = vmax.f32 %v4362, 0.0
        %v4491 = vmax.f32 %v4363, 0.0
        %v4492 = vmax.f32 %v4364, 0.0
        %v4493 = vmax.f32 %v4365, 0.0
        %v4494 = vmax.f32 %v4366, 0.0
        %v4495 = vmax.f32 %v4367, 0.0
        %v4496 = vmax.f32 %v4368, 0.0
        %v4497 = vmax.f32 %v4369, 0.0
        %v4498 = vmax.f32 %v4370, 0.0
        %v4499 = vmax.f32 %v4371, 0.0
        %v4500 = vmax.f32 %v4372, 0.0
        %v4501 = vmax.f32 %v4373, 0.0
        %v4502 = vmax.f32 %v4374, 0.0
        %v4503 = vmax.f32 %v4375, 0.0
        %v4504 = vmax.f32 %v4376, 0.0
        %v4505 = vmax.f32 %v4377, 0.0
        %v4506 = vmax.f32 %v4378, 0.0
        %v4507 = vmax.f32 %v4379, 0.0
        %v4508 = vmax.f32 %v4380, 0.0
        %v4509 = vmax.f32 %v4381, 0.0
        %v4510 = vmax.f32 %v4382, 0.0
        %v4511 = vmax.f32 %v4383, 0.0
        %v4512 = vmax.f32 %v4384, 0.0
        %v4513 = vmax.f32 %v4385, 0.0
        %v4514 = vmax.f32 %v4386, 0.0
        %v4515 = vmax.f32 %v4387, 0.0
        %v4516 = vmax.f32 %v4388, 0.0
        %v4517 = vmax.f32 %v4389, 0.0
        %v4518 = vmax.f32 %v4390, 0.0
        %v4519 = vmax.f32 %v4391, 0.0
        %v4520 = vmax.f32 %v4392, 0.0
        %v4521 = vmax.f32 %v4393, 0.0
        %v4522 = vmax.f32 %v4394, 0.0
        %v4523 = vmax.f32 %v4395, 0.0
        %v4524 = vmax.f32 %v4396, 0.0
        %v4525 = vmax.f32 %v4397, 0.0
        %v4526 = vmax.f32 %v4398, 0.0
        %v4527 = vmax.f32 %v4399, 0.0
        %v4528 = vmax.f32 %v4400, 0.0
        %v4529 = vmax.f32 %v4401, 0.0
        %v4530 = vmax.f32 %v4402, 0.0
        %v4531 = vmax.f32 %v4403, 0.0
        %v4532 = vmax.f32 %v4404, 0.0
        %v4533 = vmax.f32 %v4405, 0.0
        %v4534 = vmax.f32 %v4406, 0.0
        %v4535 = vmax.f32 %v4407, 0.0
        %v4536 = vmax.f32 %v4408, 0.0
        %v4537 = vmax.f32 %v4409, 0.0
        %v4538 = vmax.f32 %v4410, 0.0
        %v4539 = vmax.f32 %v4411, 0.0
        %v4540 = vmax.f32 %v4412, 0.0
        %v4541 = vmax.f32 %v4413, 0.0
        %v4542 = vmax.f32 %v4414, 0.0
        %v4543 = vmax.f32 %v4415, 0.0
        %v4544 = vmax.f32 %v4416, 0.0
        %v4545 = vmax.f32 %v4417, 0.0
        %v4546 = vmax.f32 %v4418, 0.0
        %v4547 = vmax.f32 %v4419, 0.0
        %v4548 = vmax.f32 %v4420, 0.0
        %v4549 = vmax.f32 %v4421, 0.0
        %v4550 = vmax.f32 %v4422, 0.0
        %v4551 = vmax.f32 %v4423, 0.0
        %v4552 = vmax.f32 %v4424, 0.0
        %v4553 = vmax.f32 %v4425, 0.0
        %v4554 = vmax.f32 %v4426, 0.0
        %v4555 = vmax.f32 %v4427, 0.0
        %v4556 = vmax.f32 %v4428, 0.0
        %v4557 = vmax.f32 %v4429, 0.0
        %v4558 = vmax.f32 %v4430, 0.0
        %v4559 = vmax.f32 %v4431, 0.0
        %v4560 = vmax.f32 %v4432, 0.0
        %v4561 = vmax.f32 %v4433, 0.0
        %v4562 = vmax.f32 %v4434, 0.0
        %v4563 = vmax.f32 %v4435, 0.0
        %v4564 = vmax.f32 %v4436, 0.0
        %v4565 = vmax.f32 %v4437, 0.0
        %v4566 = vmax.f32 %v4438, 0.0
        %v4567 = vmax.f32 %v4439, 0.0
        %v4568 = vmax.f32 %v4440, 0.0
        %v4569 = vmax.f32 %v4441, 0.0
        %v4570 = vmax.f32 %v4442, 0.0
        %v4571 = vmax.f32 %v4443, 0.0
        %v4572 = vmax.f32 %v4444, 0.0
        %v4573 = vmax.f32 %v4445, 0.0
        %v4574 = vmax.f32 %v4446, 0.0
        %v4575 = vmax.f32 %v4447, 0.0
        %v4576 = vmax.f32 %v4448, 0.0
        %v4577 = vmax.f32 %v4449, 0.0
        %v4578 = vmax.f32 %v4450, 0.0
        %v4579 = vmax.f32 %v4451, 0.0
        %v4580 = vmax.f32 %v4452, 0.0
        %v4581 = vmax.f32 %v4453, 0.0
        %v4582 = vmax.f32 %v4454, 0.0
        %v4583 = vmax.f32 %v4455, 0.0
        %v4584 = vmax.f32 %v4456, 0.0
        %v4585 = vmax.f32 %v4457, 0.0
        %v4586 = vmax.f32 %v4458, 0.0
        %v4587 = vmax.f32 %v4459, 0.0
        %v4588 = vmax.f32 %v4460, 0.0
        %v4589 = vld [vmem:[%s9] sm:$0xff]
        %v4590 = vpack.c.bf16 %v4463, %v4461
        %v4591 = vpack.c.bf16 %v4464, %v4462
        %v4592 = vpack.c.bf16 %v4467, %v4465
        %v4593 = vpack.c.bf16 %v4468, %v4466
        %v4594 = vpack.c.bf16 %v4471, %v4469
        %v4595 = vpack.c.bf16 %v4472, %v4470
        %v4596 = vpack.c.bf16 %v4475, %v4473
        %v4597 = vpack.c.bf16 %v4476, %v4474
        %v4598 = vpack.c.bf16 %v4479, %v4477
        %v4599 = vpack.c.bf16 %v4480, %v4478
        %v4600 = vpack.c.bf16 %v4483, %v4481
        %v4601 = vpack.c.bf16 %v4484, %v4482
        %v4602 = vpack.c.bf16 %v4487, %v4485
        %v4603 = vpack.c.bf16 %v4488, %v4486
        %v4604 = vpack.c.bf16 %v4491, %v4489
        %v4605 = vpack.c.bf16 %v4492, %v4490
        %v4606 = vpack.c.bf16 %v4495, %v4493
        %v4607 = vpack.c.bf16 %v4496, %v4494
        %v4608 = vpack.c.bf16 %v4499, %v4497
        %v4609 = vpack.c.bf16 %v4500, %v4498
        %v4610 = vpack.c.bf16 %v4503, %v4501
        %v4611 = vpack.c.bf16 %v4504, %v4502
        %v4612 = vpack.c.bf16 %v4507, %v4505
        %v4613 = vpack.c.bf16 %v4508, %v4506
        %v4614 = vpack.c.bf16 %v4511, %v4509
        %v4615 = vpack.c.bf16 %v4512, %v4510
        %v4616 = vpack.c.bf16 %v4515, %v4513
        %v4617 = vpack.c.bf16 %v4516, %v4514
        %v4618 = vpack.c.bf16 %v4519, %v4517
        %v4619 = vpack.c.bf16 %v4520, %v4518
        %v4620 = vpack.c.bf16 %v4523, %v4521
        %v4621 = vpack.c.bf16 %v4524, %v4522
        %v4622 = vpack.c.bf16 %v4527, %v4525
        %v4623 = vpack.c.bf16 %v4528, %v4526
        %v4624 = vpack.c.bf16 %v4531, %v4529
        %v4625 = vpack.c.bf16 %v4532, %v4530
        %v4626 = vpack.c.bf16 %v4535, %v4533
        %v4627 = vpack.c.bf16 %v4536, %v4534
        %v4628 = vpack.c.bf16 %v4539, %v4537
        %v4629 = vpack.c.bf16 %v4540, %v4538
        %v4630 = vpack.c.bf16 %v4543, %v4541
        %v4631 = vpack.c.bf16 %v4544, %v4542
        %v4632 = vpack.c.bf16 %v4547, %v4545
        %v4633 = vpack.c.bf16 %v4548, %v4546
        %v4634 = vpack.c.bf16 %v4551, %v4549
        %v4635 = vpack.c.bf16 %v4552, %v4550
        %v4636 = vpack.c.bf16 %v4555, %v4553
        %v4637 = vpack.c.bf16 %v4556, %v4554
        %v4638 = vpack.c.bf16 %v4559, %v4557
        %v4639 = vpack.c.bf16 %v4560, %v4558
        %v4640 = vpack.c.bf16 %v4563, %v4561
        %v4641 = vpack.c.bf16 %v4564, %v4562
        %v4642 = vpack.c.bf16 %v4567, %v4565
        %v4643 = vpack.c.bf16 %v4568, %v4566
        %v4644 = vpack.c.bf16 %v4571, %v4569
        %v4645 = vpack.c.bf16 %v4572, %v4570
        %v4646 = vpack.c.bf16 %v4575, %v4573
        %v4647 = vpack.c.bf16 %v4576, %v4574
        %v4648 = vpack.c.bf16 %v4579, %v4577
        %v4649 = vpack.c.bf16 %v4580, %v4578
        %v4650 = vpack.c.bf16 %v4583, %v4581
        %v4651 = vpack.c.bf16 %v4584, %v4582
        %v4652 = vpack.c.bf16 %v4587, %v4585
        %v4653 = vpack.c.bf16 %v4588, %v4586
        %v4654 = vld [vmem:[%s10] sm:$0xff]
        %4656 = vset.pattern.permute.xlu0 0
        %4657 = vperm.xlu0 %4656, %v4654
        %v4658 = vpop.permute.xlu0 %4657
        %v4661 = vunpack.c.l.b16 %v4589
        %v4662 = vunpack.c.h.b16 %v4589
        %v4663 = vpack.c.b16 %v4661, %v4661
        %v4664 = vpack.c.b16 %v4662, %v4662
        %4667 = vmatprep.subr.bf16.mxu0 %v4591
        %4668 = vmatpush1.bf16.xpose.msra.mxu0 %v4590
        %4669 = vmatprep.subr.bf16.mxu0 %v4593
        %4670 = vmatpush1.bf16.xpose.msra.mxu0 %v4592
        %4671 = vmatprep.subr.bf16.mxu0 %v4595
        %4672 = vmatpush1.bf16.xpose.msra.mxu0 %v4594
        %4673 = vmatprep.subr.bf16.mxu0 %v4597
        %4674 = vmatpush1.bf16.xpose.msra.mxu0 %v4596
        %4675 = vmatprep.subr.bf16.mxu0 %v4599
        %4676 = vmatpush1.bf16.xpose.msra.mxu0 %v4598
        %4677 = vmatprep.subr.bf16.mxu0 %v4601
        %4678 = vmatpush1.bf16.xpose.msra.mxu0 %v4600
        %4679 = vmatprep.subr.bf16.mxu0 %v4603
        %4680 = vmatpush1.bf16.xpose.msra.mxu0 %v4602
        %4681 = vmatprep.subr.bf16.mxu0 %v4605
        %4682 = vmatpush1.bf16.xpose.msra.mxu0 %v4604
        %4683 = vmatprep.subr.bf16.mxu0 %v4607
        %4684 = vmatpush1.bf16.xpose.msra.mxu0 %v4606
        %4685 = vmatprep.subr.bf16.mxu0 %v4609
        %4686 = vmatpush1.bf16.xpose.msra.mxu0 %v4608
        %4687 = vmatprep.subr.bf16.mxu0 %v4611
        %4688 = vmatpush1.bf16.xpose.msra.mxu0 %v4610
        %4689 = vmatprep.subr.bf16.mxu0 %v4613
        %4690 = vmatpush1.bf16.xpose.msra.mxu0 %v4612
        %4691 = vmatprep.subr.bf16.mxu0 %v4615
        %4692 = vmatpush1.bf16.xpose.msra.mxu0 %v4614
        %4693 = vmatprep.subr.bf16.mxu0 %v4617
        %4694 = vmatpush1.bf16.xpose.msra.mxu0 %v4616
        %4695 = vmatprep.subr.bf16.mxu0 %v4619
        %4696 = vmatpush1.bf16.xpose.msra.mxu0 %v4618
        %4697 = vmatprep.subr.bf16.mxu0 %v4621
        %4698 = vmatpush1.bf16.xpose.msra.mxu0 %v4620
        %4699 = vmatprep.mubr.bf16.mxu0 %v4664
        %4700 = vmatmul.mubr.bf16.gmra.mrb[0].mxu0 %v4663
        %v4701 = vpop.f32.mrb[0].mxu0
        %v4702 = vadd.f32 %v4658, %v4701
        %v4703 = vpop.f32.mrb[0].mxu0
        %v4704 = vadd.f32 %v4658, %v4703
        %v4705 = vpop.f32.mrb[0].mxu0
        %v4706 = vpop.f32.mrb[0].mxu0
        %4707 = vdwg.mxu0
        %4708 = vmatprep.subr.bf16.mxu0 %v4623
        %4709 = vmatpush1.bf16.xpose.msra.mxu0 %v4622
        %4710 = vmatprep.subr.bf16.mxu0 %v4625
        %4711 = vmatpush1.bf16.xpose.msra.mxu0 %v4624
        %4712 = vmatprep.subr.bf16.mxu0 %v4627
        %4713 = vmatpush1.bf16.xpose.msra.mxu0 %v4626
        %4714 = vmatprep.subr.bf16.mxu0 %v4629
        %4715 = vmatpush1.bf16.xpose.msra.mxu0 %v4628
        %4716 = vmatprep.subr.bf16.mxu0 %v4631
        %4717 = vmatpush1.bf16.xpose.msra.mxu0 %v4630
        %4718 = vmatprep.subr.bf16.mxu0 %v4633
        %4719 = vmatpush1.bf16.xpose.msra.mxu0 %v4632
        %4720 = vmatprep.subr.bf16.mxu0 %v4635
        %4721 = vmatpush1.bf16.xpose.msra.mxu0 %v4634
        %4722 = vmatprep.subr.bf16.mxu0 %v4637
        %4723 = vmatpush1.bf16.xpose.msra.mxu0 %v4636
        %4724 = vmatprep.subr.bf16.mxu0 %v4639
        %4725 = vmatpush1.bf16.xpose.msra.mxu0 %v4638
        %4726 = vmatprep.subr.bf16.mxu0 %v4641
        %4727 = vmatpush1.bf16.xpose.msra.mxu0 %v4640
        %4728 = vmatprep.subr.bf16.mxu0 %v4643
        %4729 = vmatpush1.bf16.xpose.msra.mxu0 %v4642
        %4730 = vmatprep.subr.bf16.mxu0 %v4645
        %4731 = vmatpush1.bf16.xpose.msra.mxu0 %v4644
        %4732 = vmatprep.subr.bf16.mxu0 %v4647
        %4733 = vmatpush1.bf16.xpose.msra.mxu0 %v4646
        %4734 = vmatprep.subr.bf16.mxu0 %v4649
        %4735 = vmatpush1.bf16.xpose.msra.mxu0 %v4648
        %4736 = vmatprep.subr.bf16.mxu0 %v4651
        %4737 = vmatpush1.bf16.xpose.msra.mxu0 %v4650
        %4738 = vmatprep.subr.bf16.mxu0 %v4653
        %4739 = vmatpush1.bf16.xpose.msra.mxu0 %v4652
        %4740 = vmatprep.mubr.bf16.mxu0 %v4664
        %4741 = vmatmul.mubr.bf16.gmra.mrb[0].mxu0 %v4663
        %v4742 = vpop.f32.mrb[0].mxu0
        %v4743 = vadd.f32 %v4658, %v4742
        %v4744 = vpop.f32.mrb[0].mxu0
        %v4745 = vadd.f32 %v4658, %v4744
        %v4746 = vpop.f32.mrb[0].mxu0
        %v4747 = vpop.f32.mrb[0].mxu0
        %4748 = vdwg.mxu0
        %4749 = vst [vmem:[%s380] sm:$0xff] %v4702
        %4750 = vst [vmem:[%s380 + $0x8] sm:$0xff] %v4704
        %4751 = vst [vmem:[%s380 + $0x10] sm:$0xff] %v4743
        %4752 = vst [vmem:[%s380 + $0x18] sm:$0xff] %v4745
        %s4753 = sand.u32 %s269, 1
        %s4754 = scalar_lea.sflag [#allocation3], %s4753
        %s4755 = sand.u32 %s269, 1
        %s4756 = smul.addr %s4755, 32
        %s4757 = scalar_lea.vmem [#allocation2], %s4756
        // Predicated region
        $region65: #{tpu_custom_call.1} parent=63 // pred_check
          %p4758 = pneg %p279
        $region66: #{tpu_custom_call.1} parent=63 // pred_check_branch
          %4760 = sbr.rel (%p4758) target = $region68
        $region67: #{tpu_custom_call.1} parent=63 // pred_region
          %s4761 = smul.u32 4, %s25
          %s4763 = ssub.s32 512, 512
          %4764 = vsyncadd %s4754, %s4763
          %s4765 = smul.addr %s4761, 128
          %s4766 = scalar_lea.hbm %s11, %s4765
          %s4768 = sshll.u32 %s4757, 4
          %s4769 = int_to_ptr.vmem [resolvable:$true] %s4768
          %4771 = dma.vmem_to_hbm [thread:$0]  %s4769, 512, %s4766, %s4754
        $region68: #{tpu_custom_call.1} parent=63 // pred_fallthru
          _
      $region64: #{tpu_custom_call.1} parent=5 // pred_fallthru
        _
      %p4772 = scmp.le.s32.totalorder 2, %s20
      // Predicated region
      $region69: #{tpu_custom_call.1} parent=5 // pred_check
        %p4773 = pneg %p4772
      $region70: #{tpu_custom_call.1} parent=5 // pred_check_branch
        %4775 = sbr.rel (%p4773) target = $region72
      $region71: #{tpu_custom_call.1} parent=5 // pred_region
        %s4776 = ssub.s32 %s20, 2
        // Predicated region
        $region73: #{tpu_custom_call.1} parent=71 // pred_check
          %p4777 = pneg %p285
        $region74: #{tpu_custom_call.1} parent=71 // pred_check_branch
          %4779 = sbr.rel (%p4777) target = $region76
        $region75: #{tpu_custom_call.1} parent=71 // pred_region
          %s4780 = sand.u32 %s270, 1
          %s4781 = scalar_lea.sflag [#allocation3], %s4780
          %s4782 = sand.u32 %s270, 1
          %s4783 = smul.addr %s4782, 32
          %s4784 = scalar_lea.vmem [#allocation2], %s4783
          %4785 = dma.done %s4781, 512
        $region76: #{tpu_custom_call.1} parent=71 // pred_fallthru
          _
      $region72: #{tpu_custom_call.1} parent=5 // pred_fallthru
        _
    $region6: #{tpu_custom_call.1} parent=1 // loop_footer
      %s24 = sadd.s32 1, %s20
    $region7: #{tpu_custom_call.1} parent=1 // loop_footer_branch
      %19 = sbr.rel target = $region3
    $region8: #{tpu_custom_call.1} parent=1 // loop_exit
      _
    %4786 = vsyncpa [#allocation3], 1
    %s4787 = scalar_lea.sflag [#allocation3], 1
    %4788 = vsyncpa %s4787, 1

</llo_original>
